<compile_context>
chip_gen: v5e
topology: v5e:2x2
jax: 0.10.0
libtpu: 0.0.40
codegen_flags: <defaults>
</compile_context>

<pallas_src>
import functools

import jax
import jax.numpy as jnp
import numpy as np
from jax.experimental import pallas as pl
from jax.experimental.pallas import tpu as pltpu

C = 1280                 # CBAM / head channel count (fixed by the module)
RED = 16                 # CBAM reduction ratio
CR = C // RED            # 80
CR_PAD = 128             # bottleneck padded to a full lane width
HID = 512                # classifier hidden width
NUM_CLASSES = 26
OUT_PAD = 128            # logits padded to a full lane width (sliced outside)
KS = 7                   # spatial-attention conv kernel size
PAD = 3
BN_EPS = 1e-5


def _pad8(n):
    return -(-n // 8) * 8


# --------------------------------------------------------------------------------------
# Kernel
# --------------------------------------------------------------------------------------
def _cbam_head_kernel(x_ref,
                      caw1_ref, cab1_ref, caw2_ref, cab2_ref,
                      spmat_ref, spb_ref,
                      fc1w_ref, fc1b_ref,
                      fc2w_ref, fc2b_ref,
                      out_ref, *, inv_s):
    x_bf = x_ref[...]                                 # [Bt, Sp, C] bf16 (halved HBM traffic)
    Bt, Sp, Cc = x_bf.shape
    inv_c = 1.0 / Cc

    def sigmoid(z):                                   # exp + approx-rcp both live in the EUP slot
        return pl.reciprocal(1.0 + jnp.exp(-z), approx=True)

    # f32 copy for the elementwise sweeps (v5e VPU has no bf16).
    # TODO(synk): on v6e/v7x these sweeps could stay packed bf16 (chip-gated) for 2x VPU/vld.
    xf = x_bf.astype(jnp.float32)                     # [Bt, Sp, C]

    # ---- CBAM channel attention: GAP -> 1x1 convs (GEMMs, hidden padded to 128) -> sigmoid ----
    gap = jnp.sum(xf, axis=1) * inv_s                 # true-S mean; zero-padded rows contribute 0
    h = jnp.dot(gap.astype(jnp.bfloat16), caw1_ref[...],
                preferred_element_type=jnp.float32) + cab1_ref[...]              # [Bt, 128]
    h = jnp.maximum(h, 0.0)
    ca = sigmoid(jnp.dot(h.astype(jnp.bfloat16), caw2_ref[...],
                         preferred_element_type=jnp.float32) + cab2_ref[...])    # [Bt, C]

    # ---- CBAM spatial attention: channel max / mean, 7x7 conv as one bf16 Toeplitz GEMM ----
    xca = xf * ca[:, None, :]                         # [Bt, Sp, C]
    mx = jnp.max(xca, axis=2)                         # [Bt, Sp]  lane reduce
    av = jnp.sum(xca, axis=2) * inv_c                 # [Bt, Sp]  (same xca pass)
    sp_in = jnp.concatenate([mx, av], axis=1).astype(jnp.bfloat16)               # [Bt, 2*Sp]
    conv = jnp.dot(sp_in, spmat_ref[...],
                   preferred_element_type=jnp.float32) + spb_ref[...]            # [Bt, Sp]
    sa = sigmoid(conv)

    # ---- sa-weighted global average pooling: VPU weighted reduce over resident xca ----
    # feat[b, c] = (1/S_true) * sum_s xca[b, s, c] * sa[b, s]   (xca already carries ca)
    feat = jnp.sum(xca * sa[:, :, None], axis=1) * inv_s                          # [Bt, C]

    # ---- classifier: Linear (BN folded) -> ReLU -> Linear (dropout = identity, eval) ----
    h1 = jnp.dot(feat.astype(jnp.bfloat16), fc1w_ref[...],
                 preferred_element_type=jnp.float32) + fc1b_ref[...]              # [Bt, 512]
    h1 = jnp.maximum(h1, 0.0)
    out_ref[...] = jnp.dot(h1.astype(jnp.bfloat16), fc2w_ref[...],
                           preferred_element_type=jnp.float32) + fc2b_ref[...]    # [Bt, 128]


# --------------------------------------------------------------------------------------
# Parameter preparation (padding, BN folding, conv unrolling, bf16 weights)
# --------------------------------------------------------------------------------------
def _spatial_conv_matrix(sa_w, H, W, Sp):
    """Unroll Conv2d(2,1,7,padding=3) into a [2*Sp, Sp] matrix (channel order: max, mean).

    Rows are input spatial positions (padded positions stay zero), columns are output
    positions (padded positions stay zero)."""
    w = np.asarray(sa_w, np.float32)                  # [2, 7, 7]
    m = np.zeros((2 * Sp, Sp), np.float32)
    for c in range(2):
        for dy in range(KS):
            for dx in range(KS):
                wv = w[c, dy, dx]
                for ho in range(H):
                    hi = ho + dy - PAD
                    if hi < 0 or hi >= H:
                        continue
                    for wo in range(W):
                        wi = wo + dx - PAD
                        if wi < 0 or wi >= W:
                            continue
                        m[c * Sp + hi * W + wi, ho * W + wo] = wv
    return jnp.asarray(m)


def prepare_params(raw, H, W):
    """Raw (PyTorch-equivalent) parameters -> kernel parameters."""
    S = H * W
    Sp = _pad8(S)

    # fold eval-mode BatchNorm1d into fc1
    s = raw["bn_g"] * jax.lax.rsqrt(raw["bn_v"] + BN_EPS)            # [HID]
    fc1_w = raw["fc1_w"] * s[None, :]
    fc1_b = (raw["fc1_b"] - raw["bn_m"]) * s + raw["bn_b"]

    def pad_cols(a, n):
        return jnp.pad(a, ((0, 0), (0, n - a.shape[1])))

    ca_w1 = pad_cols(raw["ca_w1"], CR_PAD)                           # [C, 128]
    ca_b1 = pad_cols(raw["ca_b1"][None, :], CR_PAD)                  # [1, 128]
    ca_w2 = jnp.pad(raw["ca_w2"], ((0, CR_PAD - CR), (0, 0)))        # [128, C]
    ca_b2 = raw["ca_b2"][None, :]                                    # [1, C]
    fc2_w = pad_cols(raw["fc2_w"], OUT_PAD)                          # [HID, 128]
    fc2_b = pad_cols(raw["fc2_b"][None, :], OUT_PAD)                 # [1, 128]

    bf = lambda a: a.astype(jnp.bfloat16)
    f32 = lambda a: a.astype(jnp.float32)
    return dict(
        ca_w1=bf(ca_w1), ca_b1=f32(ca_b1),
        ca_w2=bf(ca_w2), ca_b2=f32(ca_b2),
        sp_mat=bf(_spatial_conv_matrix(raw["sa_w"], H, W, Sp)),      # [2*Sp, Sp] bf16
        sp_bias=raw["sa_b"][0] * jnp.ones((1, Sp), jnp.float32),
        fc1_w=bf(fc1_w), fc1_b=f32(fc1_b[None, :]),
        fc2_w=bf(fc2_w), fc2_b=f32(fc2_b),
    )


# --------------------------------------------------------------------------------------
# Wrapper
# --------------------------------------------------------------------------------------
def _pick_batch_tile(B):
    """<=32 rows (fits v7x's 64 MiB VMEM with bf16 x while feeding the MXU), multiples of 8,
    and >=2 grid steps whenever the batch allows it (keeps both v7x TensorCores busy)."""
    if B <= 8:
        return B
    half = -(-B // 2)
    return min(32, _pad8(half))


def efficientnet_cbam_head(x_nhwc, kp):
    """x_nhwc: [B, H, W, 1280] feature map (what efficientnet.extract_features yields, NHWC)."""
    B, H, W, Cc = x_nhwc.shape
    assert Cc == C
    S = H * W
    Sp = _pad8(S)

    # Channels stay on lanes; feature map streamed as bf16 (kernel upcasts where needed).
    # TODO(synk): in a full pipeline the backbone would emit bf16 features directly.
    x = x_nhwc.reshape(B, S, C)
    if Sp != S:
        x = jnp.pad(x, ((0, 0), (0, Sp - S), (0, 0)))
    x = x.astype(jnp.bfloat16)

    Bt = _pick_batch_tile(B)
    B_pad = -(-B // Bt) * Bt
    if B_pad != B:
        x = jnp.pad(x, ((0, B_pad - B), (0, 0), (0, 0)))
    grid = (B_pad // Bt,)

    def const2(i):                                    # weights stay resident across grid steps
        return (0, 0)
    # TODO(synk): pipeline_mode=pl.Buffered(1) on the constant weight specs would reclaim
    # ~2 MiB of double-buffer VMEM on v7x; kept at the default buffering for lowering safety.

    in_specs = [
        pl.BlockSpec((Bt, Sp, C), lambda i: (i, 0, 0)),
        pl.BlockSpec(kp["ca_w1"].shape, const2),
        pl.BlockSpec(kp["ca_b1"].shape, const2),
        pl.BlockSpec(kp["ca_w2"].shape, const2),
        pl.BlockSpec(kp["ca_b2"].shape, const2),
        pl.BlockSpec(kp["sp_mat"].shape, const2),
        pl.BlockSpec(kp["sp_bias"].shape, const2),
        pl.BlockSpec(kp["fc1_w"].shape, const2),
        pl.BlockSpec(kp["fc1_b"].shape, const2),
        pl.BlockSpec(kp["fc2_w"].shape, const2),
        pl.BlockSpec(kp["fc2_b"].shape, const2),
    ]

    kernel = functools.partial(_cbam_head_kernel, inv_s=1.0 / S)

    out = pl.pallas_call(
        kernel,
        out_shape=jax.ShapeDtypeStruct((B_pad, OUT_PAD), jnp.float32),
        grid_spec=pltpu.PrefetchScalarGridSpec(
            num_scalar_prefetch=0,
            grid=grid,
            in_specs=in_specs,
            out_specs=pl.BlockSpec((Bt, OUT_PAD), lambda i: (i, 0)),
        ),
        compiler_params=pltpu.CompilerParams(
            dimension_semantics=("parallel",),        # 2 TensorCores on v7x when grid >= 2
            vmem_limit_bytes=48 * 1024 * 1024,        # sized for v7x's 64 MiB; fine on v5e/v6e
        ),
    )(x,
      kp["ca_w1"], kp["ca_b1"], kp["ca_w2"], kp["ca_b2"],
      kp["sp_mat"], kp["sp_bias"],
      kp["fc1_w"], kp["fc1_b"], kp["fc2_w"], kp["fc2_b"])

    return out[:B, :NUM_CLASSES]


# --------------------------------------------------------------------------------------
# Raw parameters (PyTorch-module-equivalent) + pure-JAX reference
# --------------------------------------------------------------------------------------
def init_params(key):
    ks = jax.random.split(key, 14)

    def n(k, shape, s=0.02):
        return s * jax.random.normal(k, shape, jnp.float32)

    return dict(
        # CBAM channel attention: Conv2d(1280,80,1), Conv2d(80,1280,1) stored as [in,out]
        ca_w1=n(ks[0], (C, CR)), ca_b1=n(ks[1], (CR,)),
        ca_w2=n(ks[2], (CR, C)), ca_b2=n(ks[3], (C,)),
        # CBAM spatial attention: Conv2d(2,1,7,padding=3), channel order [max, mean]
        sa_w=n(ks[4], (2, KS, KS), 0.05), sa_b=n(ks[5], (1,), 0.05),
        # classifier: Linear(1280,512) -> BN1d(512) -> ReLU -> Dropout -> Linear(512,26)
        fc1_w=n(ks[6], (C, HID)), fc1_b=n(ks[7], (HID,)),
        bn_g=1.0 + 0.1 * jax.random.normal(ks[8], (HID,), jnp.float32),
        bn_b=n(ks[9], (HID,)),
        bn_m=n(ks[10], (HID,), 0.1),
        bn_v=0.5 + jnp.abs(0.5 * jax.random.normal(ks[11], (HID,), jnp.float32)),
        fc2_w=n(ks[12], (HID, NUM_CLASSES)), fc2_b=n(ks[13], (NUM_CLASSES,)),
    )


def reference(x_nhwc, p):
    """Pure-JAX f32 reference of the original module math (for a sanity check)."""
    x = x_nhwc.astype(jnp.float32)
    gap = jnp.mean(x, axis=(1, 2))
    h = jax.nn.relu(gap @ p["ca_w1"] + p["ca_b1"])
    ca = jax.nn.sigmoid(h @ p["ca_w2"] + p["ca_b2"])
    x = x * ca[:, None, None, :]
    mx = jnp.max(x, axis=3, keepdims=True)
    av = jnp.mean(x, axis=3, keepdims=True)
    sp = jnp.concatenate([mx, av], axis=3)                           # [B,H,W,2] order [max, mean]
    w = jnp.transpose(p["sa_w"], (1, 2, 0))[..., None]               # HWIO
    conv = jax.lax.conv_general_dilated(
        sp, w, window_strides=(1, 1), padding=((PAD, PAD), (PAD, PAD)),
        dimension_numbers=("NHWC", "HWIO", "NHWC"))[..., 0]
    sa = jax.nn.sigmoid(conv + p["sa_b"][0])
    x = x * sa[..., None]
    feat = jnp.mean(x, axis=(1, 2))
    h1 = feat @ p["fc1_w"] + p["fc1_b"]
    h1 = (h1 - p["bn_m"]) * jax.lax.rsqrt(p["bn_v"] + BN_EPS) * p["bn_g"] + p["bn_b"]
    h1 = jax.nn.relu(h1)
    return h1 @ p["fc2_w"] + p["fc2_b"]


if __name__ == "__main__":
    key = jax.random.PRNGKey(0)
    kx, kp = jax.random.split(key)

    B, H, W = 2, 8, 8
    # Feature map as produced by efficientnet.extract_features, already in NHWC so no
    # HBM-side transpose is needed before the kernel.
    x = jax.random.normal(kx, (B, H, W, C), dtype=jnp.float32)
    raw = init_params(kp)
    kparams = prepare_params(raw, H, W)

    out = efficientnet_cbam_head(x, kparams)
    out = jax.block_until_ready(out)

    assert out.shape == (B, NUM_CLASSES)
    ref = reference(x, raw)
    if not np.allclose(np.asarray(out), np.asarray(ref), atol=2e-2, rtol=2e-2):
        raise AssertionError("Pallas kernel output mismatches pure-JAX reference")

    print("KERNEL_OK")
</pallas_src>

<mosaic_0001>
module attributes {stable_mosaic.version = 11 : i64} {
  func.func @_cbam_head_kernel(%arg0: i32, %arg1: memref<2x64x1280xbf16, #tpu.memory_space<vmem>>, %arg2: memref<1280x128xbf16, #tpu.memory_space<vmem>>, %arg3: memref<1x128xf32, #tpu.memory_space<vmem>>, %arg4: memref<128x1280xbf16, #tpu.memory_space<vmem>>, %arg5: memref<1x1280xf32, #tpu.memory_space<vmem>>, %arg6: memref<128x64xbf16, #tpu.memory_space<vmem>>, %arg7: memref<1x64xf32, #tpu.memory_space<vmem>>, %arg8: memref<1280x512xbf16, #tpu.memory_space<vmem>>, %arg9: memref<1x512xf32, #tpu.memory_space<vmem>>, %arg10: memref<512x128xbf16, #tpu.memory_space<vmem>>, %arg11: memref<1x128xf32, #tpu.memory_space<vmem>>, %arg12: memref<2x128xf32, #tpu.memory_space<vmem>>) attributes {dimension_semantics = [#tpu.dimension_semantics<parallel>], iteration_bounds = array<i64: 1>, scalar_prefetch = 0 : i64, scratch_operands = 0 : i64, tpu.core_type = #tpu.core_type<tc>, window_params = [{transform_indices = @transform_0, window_bounds = array<i64: 2, 64, 1280>}, {pipeline_mode = #tpu.pipeline_mode<synchronous>, transform_indices = @transform_1, window_bounds = array<i64: 1280, 128>}, {pipeline_mode = #tpu.pipeline_mode<synchronous>, transform_indices = @transform_2, window_bounds = array<i64: 1, 128>}, {pipeline_mode = #tpu.pipeline_mode<synchronous>, transform_indices = @transform_3, window_bounds = array<i64: 128, 1280>}, {pipeline_mode = #tpu.pipeline_mode<synchronous>, transform_indices = @transform_4, window_bounds = array<i64: 1, 1280>}, {pipeline_mode = #tpu.pipeline_mode<synchronous>, transform_indices = @transform_5, window_bounds = array<i64: 128, 64>}, {pipeline_mode = #tpu.pipeline_mode<synchronous>, transform_indices = @transform_6, window_bounds = array<i64: 1, 64>}, {pipeline_mode = #tpu.pipeline_mode<synchronous>, transform_indices = @transform_7, window_bounds = array<i64: 1280, 512>}, {pipeline_mode = #tpu.pipeline_mode<synchronous>, transform_indices = @transform_8, window_bounds = array<i64: 1, 512>}, {pipeline_mode = #tpu.pipeline_mode<synchronous>, transform_indices = @transform_9, window_bounds = array<i64: 512, 128>}, {pipeline_mode = #tpu.pipeline_mode<synchronous>, transform_indices = @transform_10, window_bounds = array<i64: 1, 128>}, {transform_indices = @transform_11, window_bounds = array<i64: 2, 128>}]} {
    %c0 = arith.constant 0 : index
    %c0_0 = arith.constant 0 : index
    %c0_1 = arith.constant 0 : index
    %0 = vector.load %arg1[%c0, %c0_0, %c0_1] : memref<2x64x1280xbf16, #tpu.memory_space<vmem>>, vector<2x64x1280xbf16>
    %1 = arith.extf %0 : vector<2x64x1280xbf16> to vector<2x64x1280xf32>
    %cst = arith.constant dense<0.000000e+00> : vector<2x1280xf32>
    %2 = vector.multi_reduction <add>, %1, %cst [1] : vector<2x64x1280xf32> to vector<2x1280xf32>
    %cst_2 = arith.constant 1.562500e-02 : f32
    %3 = vector.broadcast %cst_2 : f32 to vector<2x1280xf32>
    %4 = arith.mulf %2, %3 : vector<2x1280xf32>
    %5 = arith.truncf %4 : vector<2x1280xf32> to vector<2x1280xbf16>
    %c0_3 = arith.constant 0 : index
    %c0_4 = arith.constant 0 : index
    %6 = vector.load %arg2[%c0_3, %c0_4] : memref<1280x128xbf16, #tpu.memory_space<vmem>>, vector<1280x128xbf16>
    %cst_5 = arith.constant dense<0.000000e+00> : vector<2x128xf32>
    %7 = tpu.matmul %5, %6, %cst_5 {dimension_numbers = #tpu.dot_dimension_numbers<[1], [0], [0], [1], [0, 0, 1, 1], [], []>} : vector<2x1280xbf16>, vector<1280x128xbf16>, vector<2x128xf32> -> vector<2x128xf32>
    %c0_6 = arith.constant 0 : index
    %c0_7 = arith.constant 0 : index
    %8 = vector.load %arg3[%c0_6, %c0_7] : memref<1x128xf32, #tpu.memory_space<vmem>>, vector<1x128xf32>
    %9 = vector.broadcast %8 : vector<1x128xf32> to vector<2x128xf32>
    %10 = arith.addf %7, %9 : vector<2x128xf32>
    %cst_8 = arith.constant 0.000000e+00 : f32
    %11 = vector.broadcast %cst_8 : f32 to vector<2x128xf32>
    %12 = arith.maximumf %10, %11 : vector<2x128xf32>
    %13 = arith.truncf %12 : vector<2x128xf32> to vector<2x128xbf16>
    %c0_9 = arith.constant 0 : index
    %c0_10 = arith.constant 0 : index
    %14 = vector.load %arg4[%c0_9, %c0_10] : memref<128x1280xbf16, #tpu.memory_space<vmem>>, vector<128x1280xbf16>
    %cst_11 = arith.constant dense<0.000000e+00> : vector<2x1280xf32>
    %15 = tpu.matmul %13, %14, %cst_11 {dimension_numbers = #tpu.dot_dimension_numbers<[1], [0], [0], [1], [0, 0, 1, 1], [], []>} : vector<2x128xbf16>, vector<128x1280xbf16>, vector<2x1280xf32> -> vector<2x1280xf32>
    %c0_12 = arith.constant 0 : index
    %c0_13 = arith.constant 0 : index
    %16 = vector.load %arg5[%c0_12, %c0_13] : memref<1x1280xf32, #tpu.memory_space<vmem>>, vector<1x1280xf32>
    %17 = vector.broadcast %16 : vector<1x1280xf32> to vector<2x1280xf32>
    %18 = arith.addf %15, %17 : vector<2x1280xf32>
    %cst_14 = arith.constant 0.000000e+00 : f32
    %19 = vector.broadcast %cst_14 : f32 to vector<2x1280xf32>
    %20 = arith.subf %19, %18 : vector<2x1280xf32>
    %21 = math.exp %20 : vector<2x1280xf32>
    %cst_15 = arith.constant 1.000000e+00 : f32
    %22 = vector.broadcast %cst_15 : f32 to vector<2x1280xf32>
    %23 = arith.addf %22, %21 : vector<2x1280xf32>
    %24 = tpu.reciprocal %23 {approx = true} : vector<2x1280xf32> -> vector<2x1280xf32>
    %25 = vector.shape_cast %24 : vector<2x1280xf32> to vector<2x1x1280xf32>
    %26 = vector.broadcast %25 : vector<2x1x1280xf32> to vector<2x64x1280xf32>
    %27 = arith.mulf %1, %26 : vector<2x64x1280xf32>
    %cst_16 = arith.constant dense<0xFF800000> : vector<2x64xf32>
    %28 = vector.multi_reduction <maximumf>, %27, %cst_16 [2] : vector<2x64x1280xf32> to vector<2x64xf32>
    %cst_17 = arith.constant dense<0.000000e+00> : vector<2x64xf32>
    %29 = vector.multi_reduction <add>, %27, %cst_17 [2] : vector<2x64x1280xf32> to vector<2x64xf32>
    %cst_18 = arith.constant 7.812500e-04 : f32
    %30 = vector.broadcast %cst_18 : f32 to vector<2x64xf32>
    %31 = arith.mulf %29, %30 : vector<2x64xf32>
    %32 = tpu.concatenate %28, %31 in 1 : vector<2x64xf32>, vector<2x64xf32> -> vector<2x128xf32>
    %33 = arith.truncf %32 : vector<2x128xf32> to vector<2x128xbf16>
    %c0_19 = arith.constant 0 : index
    %c0_20 = arith.constant 0 : index
    %34 = vector.load %arg6[%c0_19, %c0_20] : memref<128x64xbf16, #tpu.memory_space<vmem>>, vector<128x64xbf16>
    %cst_21 = arith.constant dense<0.000000e+00> : vector<2x64xf32>
    %35 = tpu.matmul %33, %34, %cst_21 {dimension_numbers = #tpu.dot_dimension_numbers<[1], [0], [0], [1], [0, 0, 1, 1], [], []>} : vector<2x128xbf16>, vector<128x64xbf16>, vector<2x64xf32> -> vector<2x64xf32>
    %c0_22 = arith.constant 0 : index
    %c0_23 = arith.constant 0 : index
    %36 = vector.load %arg7[%c0_22, %c0_23] : memref<1x64xf32, #tpu.memory_space<vmem>>, vector<1x64xf32>
    %37 = vector.broadcast %36 : vector<1x64xf32> to vector<2x64xf32>
    %38 = arith.addf %35, %37 : vector<2x64xf32>
    %cst_24 = arith.constant 0.000000e+00 : f32
    %39 = vector.broadcast %cst_24 : f32 to vector<2x64xf32>
    %40 = arith.subf %39, %38 : vector<2x64xf32>
    %41 = math.exp %40 : vector<2x64xf32>
    %cst_25 = arith.constant 1.000000e+00 : f32
    %42 = vector.broadcast %cst_25 : f32 to vector<2x64xf32>
    %43 = arith.addf %42, %41 : vector<2x64xf32>
    %44 = tpu.reciprocal %43 {approx = true} : vector<2x64xf32> -> vector<2x64xf32>
    %45 = vector.shape_cast %44 : vector<2x64xf32> to vector<2x64x1xf32>
    %46 = vector.broadcast %45 : vector<2x64x1xf32> to vector<2x64x1280xf32>
    %47 = arith.mulf %27, %46 : vector<2x64x1280xf32>
    %cst_26 = arith.constant dense<0.000000e+00> : vector<2x1280xf32>
    %48 = vector.multi_reduction <add>, %47, %cst_26 [1] : vector<2x64x1280xf32> to vector<2x1280xf32>
    %cst_27 = arith.constant 1.562500e-02 : f32
    %49 = vector.broadcast %cst_27 : f32 to vector<2x1280xf32>
    %50 = arith.mulf %48, %49 : vector<2x1280xf32>
    %51 = arith.truncf %50 : vector<2x1280xf32> to vector<2x1280xbf16>
    %c0_28 = arith.constant 0 : index
    %c0_29 = arith.constant 0 : index
    %52 = vector.load %arg8[%c0_28, %c0_29] : memref<1280x512xbf16, #tpu.memory_space<vmem>>, vector<1280x512xbf16>
    %cst_30 = arith.constant dense<0.000000e+00> : vector<2x512xf32>
    %53 = tpu.matmul %51, %52, %cst_30 {dimension_numbers = #tpu.dot_dimension_numbers<[1], [0], [0], [1], [0, 0, 1, 1], [], []>} : vector<2x1280xbf16>, vector<1280x512xbf16>, vector<2x512xf32> -> vector<2x512xf32>
    %c0_31 = arith.constant 0 : index
    %c0_32 = arith.constant 0 : index
    %54 = vector.load %arg9[%c0_31, %c0_32] : memref<1x512xf32, #tpu.memory_space<vmem>>, vector<1x512xf32>
    %55 = vector.broadcast %54 : vector<1x512xf32> to vector<2x512xf32>
    %56 = arith.addf %53, %55 : vector<2x512xf32>
    %cst_33 = arith.constant 0.000000e+00 : f32
    %57 = vector.broadcast %cst_33 : f32 to vector<2x512xf32>
    %58 = arith.maximumf %56, %57 : vector<2x512xf32>
    %59 = arith.truncf %58 : vector<2x512xf32> to vector<2x512xbf16>
    %c0_34 = arith.constant 0 : index
    %c0_35 = arith.constant 0 : index
    %60 = vector.load %arg10[%c0_34, %c0_35] : memref<512x128xbf16, #tpu.memory_space<vmem>>, vector<512x128xbf16>
    %cst_36 = arith.constant dense<0.000000e+00> : vector<2x128xf32>
    %61 = tpu.matmul %59, %60, %cst_36 {dimension_numbers = #tpu.dot_dimension_numbers<[1], [0], [0], [1], [0, 0, 1, 1], [], []>} : vector<2x512xbf16>, vector<512x128xbf16>, vector<2x128xf32> -> vector<2x128xf32>
    %c0_37 = arith.constant 0 : index
    %c0_38 = arith.constant 0 : index
    %62 = vector.load %arg11[%c0_37, %c0_38] : memref<1x128xf32, #tpu.memory_space<vmem>>, vector<1x128xf32>
    %63 = vector.broadcast %62 : vector<1x128xf32> to vector<2x128xf32>
    %64 = arith.addf %61, %63 : vector<2x128xf32>
    %c0_39 = arith.constant 0 : index
    %c0_40 = arith.constant 0 : index
    %65 = vector.load %arg12[%c0_39, %c0_40] : memref<2x128xf32, #tpu.memory_space<vmem>>, vector<2x128xf32>
    tpu.vector_store %arg12[%c0_39, %c0_40], %64 {strides = array<i32>} : memref<2x128xf32, #tpu.memory_space<vmem>>, vector<2x128xf32>,
    return
  }
  func.func @transform_0(%arg0: i32) -> (i32, i32, i32) {
    %c0_i32 = arith.constant 0 : i32
    %c0_i32_0 = arith.constant 0 : i32
    %c0_i32_1 = arith.constant 0 : i32
    return %arg0, %c0_i32, %c0_i32_0 : i32, i32, i32
  }
  func.func @transform_1(%arg0: i32) -> (i32, i32) {
    %c0_i32 = arith.constant 0 : i32
    %c0_i32_0 = arith.constant 0 : i32
    %c0_i32_1 = arith.constant 0 : i32
    return %c0_i32, %c0_i32_0 : i32, i32
  }
  func.func @transform_2(%arg0: i32) -> (i32, i32) {
    %c0_i32 = arith.constant 0 : i32
    %c0_i32_0 = arith.constant 0 : i32
    %c0_i32_1 = arith.constant 0 : i32
    return %c0_i32, %c0_i32_0 : i32, i32
  }
  func.func @transform_3(%arg0: i32) -> (i32, i32) {
    %c0_i32 = arith.constant 0 : i32
    %c0_i32_0 = arith.constant 0 : i32
    %c0_i32_1 = arith.constant 0 : i32
    return %c0_i32, %c0_i32_0 : i32, i32
  }
  func.func @transform_4(%arg0: i32) -> (i32, i32) {
    %c0_i32 = arith.constant 0 : i32
    %c0_i32_0 = arith.constant 0 : i32
    %c0_i32_1 = arith.constant 0 : i32
    return %c0_i32, %c0_i32_0 : i32, i32
  }
  func.func @transform_5(%arg0: i32) -> (i32, i32) {
    %c0_i32 = arith.constant 0 : i32
    %c0_i32_0 = arith.constant 0 : i32
    %c0_i32_1 = arith.constant 0 : i32
    return %c0_i32, %c0_i32_0 : i32, i32
  }
  func.func @transform_6(%arg0: i32) -> (i32, i32) {
    %c0_i32 = arith.constant 0 : i32
    %c0_i32_0 = arith.constant 0 : i32
    %c0_i32_1 = arith.constant 0 : i32
    return %c0_i32, %c0_i32_0 : i32, i32
  }
  func.func @transform_7(%arg0: i32) -> (i32, i32) {
    %c0_i32 = arith.constant 0 : i32
    %c0_i32_0 = arith.constant 0 : i32
    %c0_i32_1 = arith.constant 0 : i32
    return %c0_i32, %c0_i32_0 : i32, i32
  }
  func.func @transform_8(%arg0: i32) -> (i32, i32) {
    %c0_i32 = arith.constant 0 : i32
    %c0_i32_0 = arith.constant 0 : i32
    %c0_i32_1 = arith.constant 0 : i32
    return %c0_i32, %c0_i32_0 : i32, i32
  }
  func.func @transform_9(%arg0: i32) -> (i32, i32) {
    %c0_i32 = arith.constant 0 : i32
    %c0_i32_0 = arith.constant 0 : i32
    %c0_i32_1 = arith.constant 0 : i32
    return %c0_i32, %c0_i32_0 : i32, i32
  }
  func.func @transform_10(%arg0: i32) -> (i32, i32) {
    %c0_i32 = arith.constant 0 : i32
    %c0_i32_0 = arith.constant 0 : i32
    %c0_i32_1 = arith.constant 0 : i32
    return %c0_i32, %c0_i32_0 : i32, i32
  }
  func.func @transform_11(%arg0: i32) -> (i32, i32) {
    %c0_i32 = arith.constant 0 : i32
    %c0_i32_0 = arith.constant 0 : i32
    return %arg0, %c0_i32 : i32, i32
  }
}

</mosaic_0001>

<llo_original>
// kernel: tpu_custom_call.1
$region0: #{tpu_custom_call.1}
  #allocation0 [shape = 'u32[]', space=smem, size = 0x4, offset = 0x4, fixed_abs, tag = 'smem constant byte address 0x4 - core index']
  #allocation1 [shape = 'u32[72,128]{1,0:T(1,128)}', space=vmem, size = 0x9000, scoped, tag = 'internal scratch']
  %s0 = inlined_call_operand.hbm [shape: bf16[2,64,1280], index: 0, kind: input, shape index: {}]
  %s1 = inlined_call_operand.hbm [shape: bf16[1280,128], index: 1, kind: input, shape index: {}]
  %s2 = inlined_call_operand.hbm [shape: f32[1,128], index: 2, kind: input, shape index: {}]
  %s3 = inlined_call_operand.hbm [shape: bf16[128,1280], index: 3, kind: input, shape index: {}]
  %s4 = inlined_call_operand.hbm [shape: f32[1,1280], index: 4, kind: input, shape index: {}]
  %s5 = inlined_call_operand.vmem [shape: bf16[128,64], index: 5, kind: input, shape index: {}]
  %s6 = inlined_call_operand.hbm [shape: f32[1,64], index: 6, kind: input, shape index: {}]
  %s7 = inlined_call_operand.hbm [shape: bf16[1280,512], index: 7, kind: input, shape index: {}]
  %s8 = inlined_call_operand.hbm [shape: f32[1,512], index: 8, kind: input, shape index: {}]
  %s9 = inlined_call_operand.hbm [shape: bf16[512,128], index: 9, kind: input, shape index: {}]
  %s10 = inlined_call_operand.hbm [shape: f32[1,128], index: 10, kind: input, shape index: {}]
  %s11 = inlined_call_operand.hbm [shape: f32[2,128], index: 11, kind: output, shape index: {}]
  %s12 = sld [smem:[#allocation0]]
  $region94: #{tpu_custom_call.1} parent=0
    _
  %s14 = ssub.s32 1, %s12
  %s15 = scalar_select 0, %s14, %s12
  $region1: #{tpu_custom_call.1} parent=0
    #allocation2 [shape = 'u8[327680]{0}', space=vmem, size = 0x50000, scoped, tag = 'input window, operand 0, single buffered']
    #allocation3 [shape = 's32[1]{0}', space=sflag, size = 0x4, scoped, tag = 'scoped memory for tpu_custom_call.1']
    #allocation4 [shape = 's32[1]{0}', space=sflag, size = 0x4, scoped, tag = 'scoped memory for tpu_custom_call.1']
    #allocation5 [shape = 'u8[327680]{0}', space=vmem, size = 0x50000, scoped, tag = 'input window, operand 1, single buffered']
    #allocation6 [shape = 's32[1]{0}', space=sflag, size = 0x4, scoped, tag = 'scoped memory for tpu_custom_call.1']
    #allocation7 [shape = 'u8[512]{0}', space=vmem, size = 0x400, scoped, tag = 'input window, operand 2, single buffered']
    #allocation8 [shape = 'u8[327680]{0}', space=vmem, size = 0x50000, scoped, tag = 'input window, operand 3, single buffered']
    #allocation9 [shape = 's32[1]{0}', space=sflag, size = 0x4, scoped, tag = 'scoped memory for tpu_custom_call.1']
    #allocation10 [shape = 'u8[5120]{0}', space=vmem, size = 0x1400, scoped, tag = 'input window, operand 4, single buffered']
    #allocation11 [shape = 'u8[512]{0}', space=vmem, size = 0x400, scoped, tag = 'input window, operand 6, single buffered']
    #allocation12 [shape = 's32[1]{0}', space=sflag, size = 0x4, scoped, tag = 'scoped memory for tpu_custom_call.1']
    #allocation13 [shape = 'u8[1310720]{0}', space=vmem, size = 0x140000, scoped, tag = 'input window, operand 7, single buffered']
    #allocation14 [shape = 'u8[2048]{0}', space=vmem, size = 0x800, scoped, tag = 'input window, operand 8, single buffered']
    #allocation15 [shape = 's32[1]{0}', space=sflag, size = 0x4, scoped, tag = 'scoped memory for tpu_custom_call.1']
    #allocation16 [shape = 'u8[131072]{0}', space=vmem, size = 0x20000, scoped, tag = 'input window, operand 9, single buffered']
    #allocation17 [shape = 'u8[512]{0}', space=vmem, size = 0x400, scoped, tag = 'input window, operand 10, single buffered']
    #allocation18 [shape = 's32[1]{0}', space=sflag, size = 0x4, scoped, tag = 'scoped memory for tpu_custom_call.1']
    #allocation19 [shape = 'u8[1024]{0}', space=vmem, size = 0x400, scoped, tag = 'output window, operand 0, single buffered']
    %16 = vsyncpa [#allocation3], 0
    %17 = vsyncpa [#allocation6], 0
    %18 = vsyncpa [#allocation9], 0
    %19 = vsyncpa [#allocation12], 0
    %20 = vsyncpa [#allocation15], 0
    %21 = vsyncpa [#allocation18], 0
    %22 = vsyncpa [#allocation4], 0
    // Predicated region
    $region2: #{tpu_custom_call.1} parent=1 // pred_check
      _
    $region3: #{tpu_custom_call.1} parent=1 // pred_check_branch
      %24 = sbr.rel (0) target = $region5
    $region4: #{tpu_custom_call.1} parent=1 // pred_region
      %26 = vsyncadd [#allocation3], 0
      %s27 = sshll.u32 %s0, 4
      %s28 = int_to_ptr.hbm [resolvable:$true] %s27
      %s29 = sshll.u32 [#allocation2], 4
      %s30 = int_to_ptr.vmem [resolvable:$true] %s29
      %35 = dma.hbm_to_vmem [thread:$0]  %s28, 10240, %s30, [#allocation3], 640, 640, 40
    $region5: #{tpu_custom_call.1} parent=1 // pred_fallthru
      _
    // Predicated region
    $region6: #{tpu_custom_call.1} parent=1 // pred_check
      _
    $region7: #{tpu_custom_call.1} parent=1 // pred_check_branch
      %37 = sbr.rel (0) target = $region9
    $region8: #{tpu_custom_call.1} parent=1 // pred_region
      %39 = vsyncadd [#allocation6], 0
      %s40 = sshll.u32 %s1, 4
      %s41 = int_to_ptr.hbm [resolvable:$true] %s40
      %s42 = sshll.u32 [#allocation5], 4
      %s43 = int_to_ptr.vmem [resolvable:$true] %s42
      %48 = dma.hbm_to_vmem [thread:$0]  %s41, 10240, %s43, [#allocation6], 64, 64, 4
    $region9: #{tpu_custom_call.1} parent=1 // pred_fallthru
      _
    // Predicated region
    $region10: #{tpu_custom_call.1} parent=1 // pred_check
      _
    $region11: #{tpu_custom_call.1} parent=1 // pred_check_branch
      %50 = sbr.rel (0) target = $region13
    $region12: #{tpu_custom_call.1} parent=1 // pred_region
      %52 = vsyncadd [#allocation6], 0
      %s54 = sshll.u32 %s2, 4
      %s55 = int_to_ptr.hbm [resolvable:$true] %s54
      %s56 = sshll.u32 [#allocation7], 4
      %s57 = int_to_ptr.vmem [resolvable:$true] %s56
      %59 = dma.hbm_to_vmem [thread:$0]  %s55, 16, %s57, [#allocation6]
    $region13: #{tpu_custom_call.1} parent=1 // pred_fallthru
      _
    // Predicated region
    $region14: #{tpu_custom_call.1} parent=1 // pred_check
      _
    $region15: #{tpu_custom_call.1} parent=1 // pred_check_branch
      %61 = sbr.rel (0) target = $region17
    $region16: #{tpu_custom_call.1} parent=1 // pred_region
      %63 = vsyncadd [#allocation9], 0
      %s64 = sshll.u32 %s3, 4
      %s65 = int_to_ptr.hbm [resolvable:$true] %s64
      %s66 = sshll.u32 [#allocation8], 4
      %s67 = int_to_ptr.vmem [resolvable:$true] %s66
      %72 = dma.hbm_to_vmem [thread:$0]  %s65, 10240, %s67, [#allocation9], 640, 640, 40
    $region17: #{tpu_custom_call.1} parent=1 // pred_fallthru
      _
    // Predicated region
    $region18: #{tpu_custom_call.1} parent=1 // pred_check
      _
    $region19: #{tpu_custom_call.1} parent=1 // pred_check_branch
      %74 = sbr.rel (0) target = $region21
    $region20: #{tpu_custom_call.1} parent=1 // pred_region
      %76 = vsyncadd [#allocation9], 0
      %s78 = sshll.u32 %s4, 4
      %s79 = int_to_ptr.hbm [resolvable:$true] %s78
      %s80 = sshll.u32 [#allocation10], 4
      %s81 = int_to_ptr.vmem [resolvable:$true] %s80
      %83 = dma.hbm_to_vmem [thread:$0]  %s79, 160, %s81, [#allocation9]
    $region21: #{tpu_custom_call.1} parent=1 // pred_fallthru
      _
    // Predicated region
    $region22: #{tpu_custom_call.1} parent=1 // pred_check
      _
    $region23: #{tpu_custom_call.1} parent=1 // pred_check_branch
      %85 = sbr.rel (0) target = $region25
    $region24: #{tpu_custom_call.1} parent=1 // pred_region
      _
    $region25: #{tpu_custom_call.1} parent=1 // pred_fallthru
      _
    // Predicated region
    $region26: #{tpu_custom_call.1} parent=1 // pred_check
      _
    $region27: #{tpu_custom_call.1} parent=1 // pred_check_branch
      %87 = sbr.rel (0) target = $region29
    $region28: #{tpu_custom_call.1} parent=1 // pred_region
      %89 = vsyncadd [#allocation12], 0
      %s91 = sshll.u32 %s6, 4
      %s92 = int_to_ptr.hbm [resolvable:$true] %s91
      %s93 = sshll.u32 [#allocation11], 4
      %s94 = int_to_ptr.vmem [resolvable:$true] %s93
      %96 = dma.hbm_to_vmem [thread:$0]  %s92, 16, %s94, [#allocation12]
    $region29: #{tpu_custom_call.1} parent=1 // pred_fallthru
      _
    // Predicated region
    $region30: #{tpu_custom_call.1} parent=1 // pred_check
      _
    $region31: #{tpu_custom_call.1} parent=1 // pred_check_branch
      %98 = sbr.rel (0) target = $region33
    $region32: #{tpu_custom_call.1} parent=1 // pred_region
      %100 = vsyncadd [#allocation12], 0
      %s101 = sshll.u32 %s7, 4
      %s102 = int_to_ptr.hbm [resolvable:$true] %s101
      %s103 = sshll.u32 [#allocation13], 4
      %s104 = int_to_ptr.vmem [resolvable:$true] %s103
      %109 = dma.hbm_to_vmem [thread:$0]  %s102, 40960, %s104, [#allocation12], 256, 256, 16
    $region33: #{tpu_custom_call.1} parent=1 // pred_fallthru
      _
    // Predicated region
    $region34: #{tpu_custom_call.1} parent=1 // pred_check
      _
    $region35: #{tpu_custom_call.1} parent=1 // pred_check_branch
      %111 = sbr.rel (0) target = $region37
    $region36: #{tpu_custom_call.1} parent=1 // pred_region
      %113 = vsyncadd [#allocation15], 0
      %s115 = sshll.u32 %s8, 4
      %s116 = int_to_ptr.hbm [resolvable:$true] %s115
      %s117 = sshll.u32 [#allocation14], 4
      %s118 = int_to_ptr.vmem [resolvable:$true] %s117
      %120 = dma.hbm_to_vmem [thread:$0]  %s116, 64, %s118, [#allocation15]
    $region37: #{tpu_custom_call.1} parent=1 // pred_fallthru
      _
    // Predicated region
    $region38: #{tpu_custom_call.1} parent=1 // pred_check
      _
    $region39: #{tpu_custom_call.1} parent=1 // pred_check_branch
      %122 = sbr.rel (0) target = $region41
    $region40: #{tpu_custom_call.1} parent=1 // pred_region
      %124 = vsyncadd [#allocation15], 0
      %s125 = sshll.u32 %s9, 4
      %s126 = int_to_ptr.hbm [resolvable:$true] %s125
      %s127 = sshll.u32 [#allocation16], 4
      %s128 = int_to_ptr.vmem [resolvable:$true] %s127
      %133 = dma.hbm_to_vmem [thread:$0]  %s126, 4096, %s128, [#allocation15], 64, 64, 4
    $region41: #{tpu_custom_call.1} parent=1 // pred_fallthru
      _
    // Predicated region
    $region42: #{tpu_custom_call.1} parent=1 // pred_check
      _
    $region43: #{tpu_custom_call.1} parent=1 // pred_check_branch
      %135 = sbr.rel (0) target = $region45
    $region44: #{tpu_custom_call.1} parent=1 // pred_region
      %137 = vsyncadd [#allocation18], 0
      %s139 = sshll.u32 %s10, 4
      %s140 = int_to_ptr.hbm [resolvable:$true] %s139
      %s141 = sshll.u32 [#allocation17], 4
      %s142 = int_to_ptr.vmem [resolvable:$true] %s141
      %144 = dma.hbm_to_vmem [thread:$0]  %s140, 16, %s142, [#allocation18]
    $region45: #{tpu_custom_call.1} parent=1 // pred_fallthru
      _
    // Predicated region
    $region46: #{tpu_custom_call.1} parent=1 // pred_check
      _
    $region47: #{tpu_custom_call.1} parent=1 // pred_check_branch
      %146 = sbr.rel (0) target = $region49
    $region48: #{tpu_custom_call.1} parent=1 // pred_region
      %148 = dma.done [#allocation3], 10240
    $region49: #{tpu_custom_call.1} parent=1 // pred_fallthru
      _
    // Predicated region
    $region50: #{tpu_custom_call.1} parent=1 // pred_check
      _
    $region51: #{tpu_custom_call.1} parent=1 // pred_check_branch
      %150 = sbr.rel (0) target = $region53
    $region52: #{tpu_custom_call.1} parent=1 // pred_region
      %152 = dma.done [#allocation6], 10240
    $region53: #{tpu_custom_call.1} parent=1 // pred_fallthru
      _
    // Predicated region
    $region54: #{tpu_custom_call.1} parent=1 // pred_check
      _
    $region55: #{tpu_custom_call.1} parent=1 // pred_check_branch
      %154 = sbr.rel (0) target = $region57
    $region56: #{tpu_custom_call.1} parent=1 // pred_region
      %156 = dma.done [#allocation6], 16
    $region57: #{tpu_custom_call.1} parent=1 // pred_fallthru
      _
    // Predicated region
    $region58: #{tpu_custom_call.1} parent=1 // pred_check
      _
    $region59: #{tpu_custom_call.1} parent=1 // pred_check_branch
      %158 = sbr.rel (0) target = $region61
    $region60: #{tpu_custom_call.1} parent=1 // pred_region
      %160 = dma.done [#allocation9], 10240
    $region61: #{tpu_custom_call.1} parent=1 // pred_fallthru
      _
    // Predicated region
    $region62: #{tpu_custom_call.1} parent=1 // pred_check
      _
    $region63: #{tpu_custom_call.1} parent=1 // pred_check_branch
      %162 = sbr.rel (0) target = $region65
    $region64: #{tpu_custom_call.1} parent=1 // pred_region
      %164 = dma.done [#allocation9], 160
    $region65: #{tpu_custom_call.1} parent=1 // pred_fallthru
      _
    // Predicated region
    $region66: #{tpu_custom_call.1} parent=1 // pred_check
      _
    $region67: #{tpu_custom_call.1} parent=1 // pred_check_branch
      %166 = sbr.rel (0) target = $region69
    $region68: #{tpu_custom_call.1} parent=1 // pred_region
      %168 = dma.done [#allocation12], 16
    $region69: #{tpu_custom_call.1} parent=1 // pred_fallthru
      _
    // Predicated region
    $region70: #{tpu_custom_call.1} parent=1 // pred_check
      _
    $region71: #{tpu_custom_call.1} parent=1 // pred_check_branch
      %170 = sbr.rel (0) target = $region73
    $region72: #{tpu_custom_call.1} parent=1 // pred_region
      %172 = dma.done [#allocation12], 40960
    $region73: #{tpu_custom_call.1} parent=1 // pred_fallthru
      _
    // Predicated region
    $region74: #{tpu_custom_call.1} parent=1 // pred_check
      _
    $region75: #{tpu_custom_call.1} parent=1 // pred_check_branch
      %174 = sbr.rel (0) target = $region77
    $region76: #{tpu_custom_call.1} parent=1 // pred_region
      %176 = dma.done [#allocation15], 64
    $region77: #{tpu_custom_call.1} parent=1 // pred_fallthru
      _
    // Predicated region
    $region78: #{tpu_custom_call.1} parent=1 // pred_check
      _
    $region79: #{tpu_custom_call.1} parent=1 // pred_check_branch
      %178 = sbr.rel (0) target = $region81
    $region80: #{tpu_custom_call.1} parent=1 // pred_region
      %180 = dma.done [#allocation15], 4096
    $region81: #{tpu_custom_call.1} parent=1 // pred_fallthru
      _
    // Predicated region
    $region82: #{tpu_custom_call.1} parent=1 // pred_check
      _
    $region83: #{tpu_custom_call.1} parent=1 // pred_check_branch
      %182 = sbr.rel (0) target = $region85
    $region84: #{tpu_custom_call.1} parent=1 // pred_region
      %184 = dma.done [#allocation18], 16
    $region85: #{tpu_custom_call.1} parent=1 // pred_fallthru
      _
    %v185 = vld [vmem:[#allocation2] sm:$0xff]
    %v186 = vld [vmem:[#allocation2 + $0x8] sm:$0xff]
    %v187 = vld [vmem:[#allocation2 + $0x10] sm:$0xff]
    %v188 = vld [vmem:[#allocation2 + $0x18] sm:$0xff]
    %v189 = vld [vmem:[#allocation2 + $0x20] sm:$0xff]
    %v190 = vld [vmem:[#allocation2 + $0x28] sm:$0xff]
    %v191 = vld [vmem:[#allocation2 + $0x30] sm:$0xff]
    %v192 = vld [vmem:[#allocation2 + $0x38] sm:$0xff]
    %v193 = vld [vmem:[#allocation2 + $0x40] sm:$0xff]
    %v194 = vld [vmem:[#allocation2 + $0x48] sm:$0xff]
    %v195 = vld [vmem:[#allocation2 + $0x50] sm:$0xff]
    %v196 = vld [vmem:[#allocation2 + $0x58] sm:$0xff]
    %v197 = vld [vmem:[#allocation2 + $0x60] sm:$0xff]
    %v198 = vld [vmem:[#allocation2 + $0x68] sm:$0xff]
    %v199 = vld [vmem:[#allocation2 + $0x70] sm:$0xff]
    %v200 = vld [vmem:[#allocation2 + $0x78] sm:$0xff]
    %v201 = vld [vmem:[#allocation2 + $0x80] sm:$0xff]
    %v202 = vld [vmem:[#allocation2 + $0x88] sm:$0xff]
    %v203 = vld [vmem:[#allocation2 + $0x90] sm:$0xff]
    %v204 = vld [vmem:[#allocation2 + $0x98] sm:$0xff]
    %v205 = vld [vmem:[#allocation2 + $0xa0] sm:$0xff]
    %v206 = vld [vmem:[#allocation2 + $0xa8] sm:$0xff]
    %v207 = vld [vmem:[#allocation2 + $0xb0] sm:$0xff]
    %v208 = vld [vmem:[#allocation2 + $0xb8] sm:$0xff]
    %v209 = vld [vmem:[#allocation2 + $0xc0] sm:$0xff]
    %v210 = vld [vmem:[#allocation2 + $0xc8] sm:$0xff]
    %v211 = vld [vmem:[#allocation2 + $0xd0] sm:$0xff]
    %v212 = vld [vmem:[#allocation2 + $0xd8] sm:$0xff]
    %v213 = vld [vmem:[#allocation2 + $0xe0] sm:$0xff]
    %v214 = vld [vmem:[#allocation2 + $0xe8] sm:$0xff]
    %v215 = vld [vmem:[#allocation2 + $0xf0] sm:$0xff]
    %v216 = vld [vmem:[#allocation2 + $0xf8] sm:$0xff]
    %v217 = vld [vmem:[#allocation2 + $0x100] sm:$0xff]
    %v218 = vld [vmem:[#allocation2 + $0x108] sm:$0xff]
    %v219 = vld [vmem:[#allocation2 + $0x110] sm:$0xff]
    %v220 = vld [vmem:[#allocation2 + $0x118] sm:$0xff]
    %v221 = vld [vmem:[#allocation2 + $0x120] sm:$0xff]
    %v222 = vld [vmem:[#allocation2 + $0x128] sm:$0xff]
    %v223 = vld [vmem:[#allocation2 + $0x130] sm:$0xff]
    %v224 = vld [vmem:[#allocation2 + $0x138] sm:$0xff]
    %v225 = vld [vmem:[#allocation2 + $0x140] sm:$0xff]
    %v226 = vld [vmem:[#allocation2 + $0x148] sm:$0xff]
    %v227 = vld [vmem:[#allocation2 + $0x150] sm:$0xff]
    %v228 = vld [vmem:[#allocation2 + $0x158] sm:$0xff]
    %v229 = vld [vmem:[#allocation2 + $0x160] sm:$0xff]
    %v230 = vld [vmem:[#allocation2 + $0x168] sm:$0xff]
    %v231 = vld [vmem:[#allocation2 + $0x170] sm:$0xff]
    %v232 = vld [vmem:[#allocation2 + $0x178] sm:$0xff]
    %v233 = vld [vmem:[#allocation2 + $0x180] sm:$0xff]
    %v234 = vld [vmem:[#allocation2 + $0x188] sm:$0xff]
    %v235 = vld [vmem:[#allocation2 + $0x190] sm:$0xff]
    %v236 = vld [vmem:[#allocation2 + $0x198] sm:$0xff]
    %v237 = vld [vmem:[#allocation2 + $0x1a0] sm:$0xff]
    %v238 = vld [vmem:[#allocation2 + $0x1a8] sm:$0xff]
    %v239 = vld [vmem:[#allocation2 + $0x1b0] sm:$0xff]
    %v240 = vld [vmem:[#allocation2 + $0x1b8] sm:$0xff]
    %v241 = vld [vmem:[#allocation2 + $0x1c0] sm:$0xff]
    %v242 = vld [vmem:[#allocation2 + $0x1c8] sm:$0xff]
    %v243 = vld [vmem:[#allocation2 + $0x1d0] sm:$0xff]
    %v244 = vld [vmem:[#allocation2 + $0x1d8] sm:$0xff]
    %v245 = vld [vmem:[#allocation2 + $0x1e0] sm:$0xff]
    %v246 = vld [vmem:[#allocation2 + $0x1e8] sm:$0xff]
    %v247 = vld [vmem:[#allocation2 + $0x1f0] sm:$0xff]
    %v248 = vld [vmem:[#allocation2 + $0x1f8] sm:$0xff]
    %v249 = vld [vmem:[#allocation2 + $0x200] sm:$0xff]
    %v250 = vld [vmem:[#allocation2 + $0x208] sm:$0xff]
    %v251 = vld [vmem:[#allocation2 + $0x210] sm:$0xff]
    %v252 = vld [vmem:[#allocation2 + $0x218] sm:$0xff]
    %v253 = vld [vmem:[#allocation2 + $0x220] sm:$0xff]
    %v254 = vld [vmem:[#allocation2 + $0x228] sm:$0xff]
    %v255 = vld [vmem:[#allocation2 + $0x230] sm:$0xff]
    %v256 = vld [vmem:[#allocation2 + $0x238] sm:$0xff]
    %v257 = vld [vmem:[#allocation2 + $0x240] sm:$0xff]
    %v258 = vld [vmem:[#allocation2 + $0x248] sm:$0xff]
    %v259 = vld [vmem:[#allocation2 + $0x250] sm:$0xff]
    %v260 = vld [vmem:[#allocation2 + $0x258] sm:$0xff]
    %v261 = vld [vmem:[#allocation2 + $0x260] sm:$0xff]
    %v262 = vld [vmem:[#allocation2 + $0x268] sm:$0xff]
    %v263 = vld [vmem:[#allocation2 + $0x270] sm:$0xff]
    %v264 = vld [vmem:[#allocation2 + $0x278] sm:$0xff]
    %v265 = vunpack.c.l.bf16 %v185
    %v266 = vunpack.c.h.bf16 %v185
    %v267 = vunpack.c.l.bf16 %v186
    %v268 = vunpack.c.h.bf16 %v186
    %v269 = vunpack.c.l.bf16 %v187
    %v270 = vunpack.c.h.bf16 %v187
    %v271 = vunpack.c.l.bf16 %v188
    %v272 = vunpack.c.h.bf16 %v188
    %v273 = vunpack.c.l.bf16 %v189
    %v274 = vunpack.c.h.bf16 %v189
    %v275 = vunpack.c.l.bf16 %v190
    %v276 = vunpack.c.h.bf16 %v190
    %v277 = vunpack.c.l.bf16 %v191
    %v278 = vunpack.c.h.bf16 %v191
    %v279 = vunpack.c.l.bf16 %v192
    %v280 = vunpack.c.h.bf16 %v192
    %v281 = vunpack.c.l.bf16 %v193
    %v282 = vunpack.c.h.bf16 %v193
    %v283 = vunpack.c.l.bf16 %v194
    %v284 = vunpack.c.h.bf16 %v194
    %v285 = vunpack.c.l.bf16 %v195
    %v286 = vunpack.c.h.bf16 %v195
    %v287 = vunpack.c.l.bf16 %v196
    %v288 = vunpack.c.h.bf16 %v196
    %v289 = vunpack.c.l.bf16 %v197
    %v290 = vunpack.c.h.bf16 %v197
    %v291 = vunpack.c.l.bf16 %v198
    %v292 = vunpack.c.h.bf16 %v198
    %v293 = vunpack.c.l.bf16 %v199
    %v294 = vunpack.c.h.bf16 %v199
    %v295 = vunpack.c.l.bf16 %v200
    %v296 = vunpack.c.h.bf16 %v200
    %v297 = vunpack.c.l.bf16 %v201
    %v298 = vunpack.c.h.bf16 %v201
    %v299 = vunpack.c.l.bf16 %v202
    %v300 = vunpack.c.h.bf16 %v202
    %v301 = vunpack.c.l.bf16 %v203
    %v302 = vunpack.c.h.bf16 %v203
    %v303 = vunpack.c.l.bf16 %v204
    %v304 = vunpack.c.h.bf16 %v204
    %v305 = vunpack.c.l.bf16 %v205
    %v306 = vunpack.c.h.bf16 %v205
    %v307 = vunpack.c.l.bf16 %v206
    %v308 = vunpack.c.h.bf16 %v206
    %v309 = vunpack.c.l.bf16 %v207
    %v310 = vunpack.c.h.bf16 %v207
    %v311 = vunpack.c.l.bf16 %v208
    %v312 = vunpack.c.h.bf16 %v208
    %v313 = vunpack.c.l.bf16 %v209
    %v314 = vunpack.c.h.bf16 %v209
    %v315 = vunpack.c.l.bf16 %v210
    %v316 = vunpack.c.h.bf16 %v210
    %v317 = vunpack.c.l.bf16 %v211
    %v318 = vunpack.c.h.bf16 %v211
    %v319 = vunpack.c.l.bf16 %v212
    %v320 = vunpack.c.h.bf16 %v212
    %v321 = vunpack.c.l.bf16 %v213
    %v322 = vunpack.c.h.bf16 %v213
    %v323 = vunpack.c.l.bf16 %v214
    %v324 = vunpack.c.h.bf16 %v214
    %v325 = vunpack.c.l.bf16 %v215
    %v326 = vunpack.c.h.bf16 %v215
    %v327 = vunpack.c.l.bf16 %v216
    %v328 = vunpack.c.h.bf16 %v216
    %v329 = vunpack.c.l.bf16 %v217
    %v330 = vunpack.c.h.bf16 %v217
    %v331 = vunpack.c.l.bf16 %v218
    %v332 = vunpack.c.h.bf16 %v218
    %v333 = vunpack.c.l.bf16 %v219
    %v334 = vunpack.c.h.bf16 %v219
    %v335 = vunpack.c.l.bf16 %v220
    %v336 = vunpack.c.h.bf16 %v220
    %v337 = vunpack.c.l.bf16 %v221
    %v338 = vunpack.c.h.bf16 %v221
    %v339 = vunpack.c.l.bf16 %v222
    %v340 = vunpack.c.h.bf16 %v222
    %v341 = vunpack.c.l.bf16 %v223
    %v342 = vunpack.c.h.bf16 %v223
    %v343 = vunpack.c.l.bf16 %v224
    %v344 = vunpack.c.h.bf16 %v224
    %v345 = vunpack.c.l.bf16 %v225
    %v346 = vunpack.c.h.bf16 %v225
    %v347 = vunpack.c.l.bf16 %v226
    %v348 = vunpack.c.h.bf16 %v226
    %v349 = vunpack.c.l.bf16 %v227
    %v350 = vunpack.c.h.bf16 %v227
    %v351 = vunpack.c.l.bf16 %v228
    %v352 = vunpack.c.h.bf16 %v228
    %v353 = vunpack.c.l.bf16 %v229
    %v354 = vunpack.c.h.bf16 %v229
    %v355 = vunpack.c.l.bf16 %v230
    %v356 = vunpack.c.h.bf16 %v230
    %v357 = vunpack.c.l.bf16 %v231
    %v358 = vunpack.c.h.bf16 %v231
    %v359 = vunpack.c.l.bf16 %v232
    %v360 = vunpack.c.h.bf16 %v232
    %v361 = vunpack.c.l.bf16 %v233
    %v362 = vunpack.c.h.bf16 %v233
    %v363 = vunpack.c.l.bf16 %v234
    %v364 = vunpack.c.h.bf16 %v234
    %v365 = vunpack.c.l.bf16 %v235
    %v366 = vunpack.c.h.bf16 %v235
    %v367 = vunpack.c.l.bf16 %v236
    %v368 = vunpack.c.h.bf16 %v236
    %v369 = vunpack.c.l.bf16 %v237
    %v370 = vunpack.c.h.bf16 %v237
    %v371 = vunpack.c.l.bf16 %v238
    %v372 = vunpack.c.h.bf16 %v238
    %v373 = vunpack.c.l.bf16 %v239
    %v374 = vunpack.c.h.bf16 %v239
    %v375 = vunpack.c.l.bf16 %v240
    %v376 = vunpack.c.h.bf16 %v240
    %v377 = vunpack.c.l.bf16 %v241
    %v378 = vunpack.c.h.bf16 %v241
    %v379 = vunpack.c.l.bf16 %v242
    %v380 = vunpack.c.h.bf16 %v242
    %v381 = vunpack.c.l.bf16 %v243
    %v382 = vunpack.c.h.bf16 %v243
    %v383 = vunpack.c.l.bf16 %v244
    %v384 = vunpack.c.h.bf16 %v244
    %v385 = vunpack.c.l.bf16 %v245
    %v386 = vunpack.c.h.bf16 %v245
    %v387 = vunpack.c.l.bf16 %v246
    %v388 = vunpack.c.h.bf16 %v246
    %v389 = vunpack.c.l.bf16 %v247
    %v390 = vunpack.c.h.bf16 %v247
    %v391 = vunpack.c.l.bf16 %v248
    %v392 = vunpack.c.h.bf16 %v248
    %v393 = vunpack.c.l.bf16 %v249
    %v394 = vunpack.c.h.bf16 %v249
    %v395 = vunpack.c.l.bf16 %v250
    %v396 = vunpack.c.h.bf16 %v250
    %v397 = vunpack.c.l.bf16 %v251
    %v398 = vunpack.c.h.bf16 %v251
    %v399 = vunpack.c.l.bf16 %v252
    %v400 = vunpack.c.h.bf16 %v252
    %v401 = vunpack.c.l.bf16 %v253
    %v402 = vunpack.c.h.bf16 %v253
    %v403 = vunpack.c.l.bf16 %v254
    %v404 = vunpack.c.h.bf16 %v254
    %v405 = vunpack.c.l.bf16 %v255
    %v406 = vunpack.c.h.bf16 %v255
    %v407 = vunpack.c.l.bf16 %v256
    %v408 = vunpack.c.h.bf16 %v256
    %v409 = vunpack.c.l.bf16 %v257
    %v410 = vunpack.c.h.bf16 %v257
    %v411 = vunpack.c.l.bf16 %v258
    %v412 = vunpack.c.h.bf16 %v258
    %v413 = vunpack.c.l.bf16 %v259
    %v414 = vunpack.c.h.bf16 %v259
    %v415 = vunpack.c.l.bf16 %v260
    %v416 = vunpack.c.h.bf16 %v260
    %v417 = vunpack.c.l.bf16 %v261
    %v418 = vunpack.c.h.bf16 %v261
    %v419 = vunpack.c.l.bf16 %v262
    %v420 = vunpack.c.h.bf16 %v262
    %v421 = vunpack.c.l.bf16 %v263
    %v422 = vunpack.c.h.bf16 %v263
    %v423 = vunpack.c.l.bf16 %v264
    %v424 = vunpack.c.h.bf16 %v264
    %v425 = vadd.f32 %v265, %v275
    %v426 = vadd.f32 %v425, %v285
    %v427 = vadd.f32 %v426, %v295
    %v428 = vadd.f32 %v427, %v305
    %v429 = vadd.f32 %v428, %v315
    %v430 = vadd.f32 %v429, %v325
    %v431 = vadd.f32 %v430, %v335
    %v432 = vrot.slane %v431, 4
    %v433 = vadd.f32 %v431, %v432
    %v434 = vrot.slane %v433, 2
    %v435 = vadd.f32 %v433, %v434
    %v436 = vrot.slane %v435, 1
    %v437 = vadd.f32 %v435, %v436
    %v438 = vadd.f32 %v266, %v276
    %v439 = vadd.f32 %v438, %v286
    %v440 = vadd.f32 %v439, %v296
    %v441 = vadd.f32 %v440, %v306
    %v442 = vadd.f32 %v441, %v316
    %v443 = vadd.f32 %v442, %v326
    %v444 = vadd.f32 %v443, %v336
    %v445 = vrot.slane %v444, 4
    %v446 = vadd.f32 %v444, %v445
    %v447 = vrot.slane %v446, 2
    %v448 = vadd.f32 %v446, %v447
    %v449 = vrot.slane %v448, 1
    %v450 = vadd.f32 %v448, %v449
    %v451 = vadd.f32 %v267, %v277
    %v452 = vadd.f32 %v451, %v287
    %v453 = vadd.f32 %v452, %v297
    %v454 = vadd.f32 %v453, %v307
    %v455 = vadd.f32 %v454, %v317
    %v456 = vadd.f32 %v455, %v327
    %v457 = vadd.f32 %v456, %v337
    %v458 = vrot.slane %v457, 4
    %v459 = vadd.f32 %v457, %v458
    %v460 = vrot.slane %v459, 2
    %v461 = vadd.f32 %v459, %v460
    %v462 = vrot.slane %v461, 1
    %v463 = vadd.f32 %v461, %v462
    %v464 = vadd.f32 %v268, %v278
    %v465 = vadd.f32 %v464, %v288
    %v466 = vadd.f32 %v465, %v298
    %v467 = vadd.f32 %v466, %v308
    %v468 = vadd.f32 %v467, %v318
    %v469 = vadd.f32 %v468, %v328
    %v470 = vadd.f32 %v469, %v338
    %v471 = vrot.slane %v470, 4
    %v472 = vadd.f32 %v470, %v471
    %v473 = vrot.slane %v472, 2
    %v474 = vadd.f32 %v472, %v473
    %v475 = vrot.slane %v474, 1
    %v476 = vadd.f32 %v474, %v475
    %v477 = vadd.f32 %v269, %v279
    %v478 = vadd.f32 %v477, %v289
    %v479 = vadd.f32 %v478, %v299
    %v480 = vadd.f32 %v479, %v309
    %v481 = vadd.f32 %v480, %v319
    %v482 = vadd.f32 %v481, %v329
    %v483 = vadd.f32 %v482, %v339
    %v484 = vrot.slane %v483, 4
    %v485 = vadd.f32 %v483, %v484
    %v486 = vrot.slane %v485, 2
    %v487 = vadd.f32 %v485, %v486
    %v488 = vrot.slane %v487, 1
    %v489 = vadd.f32 %v487, %v488
    %v490 = vadd.f32 %v270, %v280
    %v491 = vadd.f32 %v490, %v290
    %v492 = vadd.f32 %v491, %v300
    %v493 = vadd.f32 %v492, %v310
    %v494 = vadd.f32 %v493, %v320
    %v495 = vadd.f32 %v494, %v330
    %v496 = vadd.f32 %v495, %v340
    %v497 = vrot.slane %v496, 4
    %v498 = vadd.f32 %v496, %v497
    %v499 = vrot.slane %v498, 2
    %v500 = vadd.f32 %v498, %v499
    %v501 = vrot.slane %v500, 1
    %v502 = vadd.f32 %v500, %v501
    %v503 = vadd.f32 %v271, %v281
    %v504 = vadd.f32 %v503, %v291
    %v505 = vadd.f32 %v504, %v301
    %v506 = vadd.f32 %v505, %v311
    %v507 = vadd.f32 %v506, %v321
    %v508 = vadd.f32 %v507, %v331
    %v509 = vadd.f32 %v508, %v341
    %v510 = vrot.slane %v509, 4
    %v511 = vadd.f32 %v509, %v510
    %v512 = vrot.slane %v511, 2
    %v513 = vadd.f32 %v511, %v512
    %v514 = vrot.slane %v513, 1
    %v515 = vadd.f32 %v513, %v514
    %v516 = vadd.f32 %v272, %v282
    %v517 = vadd.f32 %v516, %v292
    %v518 = vadd.f32 %v517, %v302
    %v519 = vadd.f32 %v518, %v312
    %v520 = vadd.f32 %v519, %v322
    %v521 = vadd.f32 %v520, %v332
    %v522 = vadd.f32 %v521, %v342
    %v523 = vrot.slane %v522, 4
    %v524 = vadd.f32 %v522, %v523
    %v525 = vrot.slane %v524, 2
    %v526 = vadd.f32 %v524, %v525
    %v527 = vrot.slane %v526, 1
    %v528 = vadd.f32 %v526, %v527
    %v529 = vadd.f32 %v273, %v283
    %v530 = vadd.f32 %v529, %v293
    %v531 = vadd.f32 %v530, %v303
    %v532 = vadd.f32 %v531, %v313
    %v533 = vadd.f32 %v532, %v323
    %v534 = vadd.f32 %v533, %v333
    %v535 = vadd.f32 %v534, %v343
    %v536 = vrot.slane %v535, 4
    %v537 = vadd.f32 %v535, %v536
    %v538 = vrot.slane %v537, 2
    %v539 = vadd.f32 %v537, %v538
    %v540 = vrot.slane %v539, 1
    %v541 = vadd.f32 %v539, %v540
    %v542 = vadd.f32 %v274, %v284
    %v543 = vadd.f32 %v542, %v294
    %v544 = vadd.f32 %v543, %v304
    %v545 = vadd.f32 %v544, %v314
    %v546 = vadd.f32 %v545, %v324
    %v547 = vadd.f32 %v546, %v334
    %v548 = vadd.f32 %v547, %v344
    %v549 = vrot.slane %v548, 4
    %v550 = vadd.f32 %v548, %v549
    %v551 = vrot.slane %v550, 2
    %v552 = vadd.f32 %v550, %v551
    %v553 = vrot.slane %v552, 1
    %v554 = vadd.f32 %v552, %v553
    %v555 = vadd.f32 %v345, %v355
    %v556 = vadd.f32 %v555, %v365
    %v557 = vadd.f32 %v556, %v375
    %v558 = vadd.f32 %v557, %v385
    %v559 = vadd.f32 %v558, %v395
    %v560 = vadd.f32 %v559, %v405
    %v561 = vadd.f32 %v560, %v415
    %v562 = vrot.slane %v561, 4
    %v563 = vadd.f32 %v561, %v562
    %v564 = vrot.slane %v563, 2
    %v565 = vadd.f32 %v563, %v564
    %v566 = vrot.slane %v565, 1
    %v567 = vadd.f32 %v565, %v566
    %v568 = vadd.f32 %v346, %v356
    %v569 = vadd.f32 %v568, %v366
    %v570 = vadd.f32 %v569, %v376
    %v571 = vadd.f32 %v570, %v386
    %v572 = vadd.f32 %v571, %v396
    %v573 = vadd.f32 %v572, %v406
    %v574 = vadd.f32 %v573, %v416
    %v575 = vrot.slane %v574, 4
    %v576 = vadd.f32 %v574, %v575
    %v577 = vrot.slane %v576, 2
    %v578 = vadd.f32 %v576, %v577
    %v579 = vrot.slane %v578, 1
    %v580 = vadd.f32 %v578, %v579
    %v581 = vadd.f32 %v347, %v357
    %v582 = vadd.f32 %v581, %v367
    %v583 = vadd.f32 %v582, %v377
    %v584 = vadd.f32 %v583, %v387
    %v585 = vadd.f32 %v584, %v397
    %v586 = vadd.f32 %v585, %v407
    %v587 = vadd.f32 %v586, %v417
    %v588 = vrot.slane %v587, 4
    %v589 = vadd.f32 %v587, %v588
    %v590 = vrot.slane %v589, 2
    %v591 = vadd.f32 %v589, %v590
    %v592 = vrot.slane %v591, 1
    %v593 = vadd.f32 %v591, %v592
    %v594 = vadd.f32 %v348, %v358
    %v595 = vadd.f32 %v594, %v368
    %v596 = vadd.f32 %v595, %v378
    %v597 = vadd.f32 %v596, %v388
    %v598 = vadd.f32 %v597, %v398
    %v599 = vadd.f32 %v598, %v408
    %v600 = vadd.f32 %v599, %v418
    %v601 = vrot.slane %v600, 4
    %v602 = vadd.f32 %v600, %v601
    %v603 = vrot.slane %v602, 2
    %v604 = vadd.f32 %v602, %v603
    %v605 = vrot.slane %v604, 1
    %v606 = vadd.f32 %v604, %v605
    %v607 = vadd.f32 %v349, %v359
    %v608 = vadd.f32 %v607, %v369
    %v609 = vadd.f32 %v608, %v379
    %v610 = vadd.f32 %v609, %v389
    %v611 = vadd.f32 %v610, %v399
    %v612 = vadd.f32 %v611, %v409
    %v613 = vadd.f32 %v612, %v419
    %v614 = vrot.slane %v613, 4
    %v615 = vadd.f32 %v613, %v614
    %v616 = vrot.slane %v615, 2
    %v617 = vadd.f32 %v615, %v616
    %v618 = vrot.slane %v617, 1
    %v619 = vadd.f32 %v617, %v618
    %v620 = vadd.f32 %v350, %v360
    %v621 = vadd.f32 %v620, %v370
    %v622 = vadd.f32 %v621, %v380
    %v623 = vadd.f32 %v622, %v390
    %v624 = vadd.f32 %v623, %v400
    %v625 = vadd.f32 %v624, %v410
    %v626 = vadd.f32 %v625, %v420
    %v627 = vrot.slane %v626, 4
    %v628 = vadd.f32 %v626, %v627
    %v629 = vrot.slane %v628, 2
    %v630 = vadd.f32 %v628, %v629
    %v631 = vrot.slane %v630, 1
    %v632 = vadd.f32 %v630, %v631
    %v633 = vadd.f32 %v351, %v361
    %v634 = vadd.f32 %v633, %v371
    %v635 = vadd.f32 %v634, %v381
    %v636 = vadd.f32 %v635, %v391
    %v637 = vadd.f32 %v636, %v401
    %v638 = vadd.f32 %v637, %v411
    %v639 = vadd.f32 %v638, %v421
    %v640 = vrot.slane %v639, 4
    %v641 = vadd.f32 %v639, %v640
    %v642 = vrot.slane %v641, 2
    %v643 = vadd.f32 %v641, %v642
    %v644 = vrot.slane %v643, 1
    %v645 = vadd.f32 %v643, %v644
    %v646 = vadd.f32 %v352, %v362
    %v647 = vadd.f32 %v646, %v372
    %v648 = vadd.f32 %v647, %v382
    %v649 = vadd.f32 %v648, %v392
    %v650 = vadd.f32 %v649, %v402
    %v651 = vadd.f32 %v650, %v412
    %v652 = vadd.f32 %v651, %v422
    %v653 = vrot.slane %v652, 4
    %v654 = vadd.f32 %v652, %v653
    %v655 = vrot.slane %v654, 2
    %v656 = vadd.f32 %v654, %v655
    %v657 = vrot.slane %v656, 1
    %v658 = vadd.f32 %v656, %v657
    %v659 = vadd.f32 %v353, %v363
    %v660 = vadd.f32 %v659, %v373
    %v661 = vadd.f32 %v660, %v383
    %v662 = vadd.f32 %v661, %v393
    %v663 = vadd.f32 %v662, %v403
    %v664 = vadd.f32 %v663, %v413
    %v665 = vadd.f32 %v664, %v423
    %v666 = vrot.slane %v665, 4
    %v667 = vadd.f32 %v665, %v666
    %v668 = vrot.slane %v667, 2
    %v669 = vadd.f32 %v667, %v668
    %v670 = vrot.slane %v669, 1
    %v671 = vadd.f32 %v669, %v670
    %v672 = vadd.f32 %v354, %v364
    %v673 = vadd.f32 %v672, %v374
    %v674 = vadd.f32 %v673, %v384
    %v675 = vadd.f32 %v674, %v394
    %v676 = vadd.f32 %v675, %v404
    %v677 = vadd.f32 %v676, %v414
    %v678 = vadd.f32 %v677, %v424
    %v679 = vrot.slane %v678, 4
    %v680 = vadd.f32 %v678, %v679
    %v681 = vrot.slane %v680, 2
    %v682 = vadd.f32 %v680, %v681
    %v683 = vrot.slane %v682, 1
    %v684 = vadd.f32 %v682, %v683
    %v685 = vmul.f32 %v437, 0.015625
    %v686 = vmul.f32 %v450, 0.015625
    %v687 = vmul.f32 %v463, 0.015625
    %v688 = vmul.f32 %v476, 0.015625
    %v689 = vmul.f32 %v489, 0.015625
    %v690 = vmul.f32 %v502, 0.015625
    %v691 = vmul.f32 %v515, 0.015625
    %v692 = vmul.f32 %v528, 0.015625
    %v693 = vmul.f32 %v541, 0.015625
    %v694 = vmul.f32 %v554, 0.015625
    %v695 = vmul.f32 %v567, 0.015625
    %v696 = vmul.f32 %v580, 0.015625
    %v697 = vmul.f32 %v593, 0.015625
    %v698 = vmul.f32 %v606, 0.015625
    %v699 = vmul.f32 %v619, 0.015625
    %v700 = vmul.f32 %v632, 0.015625
    %v701 = vmul.f32 %v645, 0.015625
    %v702 = vmul.f32 %v658, 0.015625
    %v703 = vmul.f32 %v671, 0.015625
    %v704 = vmul.f32 %v684, 0.015625
    %v705 = vpack.c.bf16 %v685, %v685
    %v706 = vpack.c.bf16 %v686, %v686
    %v707 = vpack.c.bf16 %v687, %v687
    %v708 = vpack.c.bf16 %v688, %v688
    %v709 = vpack.c.bf16 %v689, %v689
    %v710 = vpack.c.bf16 %v690, %v690
    %v711 = vpack.c.bf16 %v691, %v691
    %v712 = vpack.c.bf16 %v692, %v692
    %v713 = vpack.c.bf16 %v693, %v693
    %v714 = vpack.c.bf16 %v694, %v694
    %v715 = vpack.c.bf16 %v695, %v695
    %v716 = vpack.c.bf16 %v696, %v696
    %v717 = vpack.c.bf16 %v697, %v697
    %v718 = vpack.c.bf16 %v698, %v698
    %v719 = vpack.c.bf16 %v699, %v699
    %v720 = vpack.c.bf16 %v700, %v700
    %v721 = vpack.c.bf16 %v701, %v701
    %v722 = vpack.c.bf16 %v702, %v702
    %v723 = vpack.c.bf16 %v703, %v703
    %v724 = vpack.c.bf16 %v704, %v704
    %v725 = vld [vmem:[#allocation5] sm:$0xf]
    %v726 = vld [vmem:[#allocation5 + $0x4] sm:$0xf]
    %v727 = vld [vmem:[#allocation5 + $0x8] sm:$0xf]
    %v728 = vld [vmem:[#allocation5 + $0xc] sm:$0xf]
    %v729 = vld [vmem:[#allocation5 + $0x10] sm:$0xf]
    %v730 = vld [vmem:[#allocation5 + $0x14] sm:$0xf]
    %v731 = vld [vmem:[#allocation5 + $0x18] sm:$0xf]
    %v732 = vld [vmem:[#allocation5 + $0x1c] sm:$0xf]
    %v733 = vld [vmem:[#allocation5 + $0x20] sm:$0xf]
    %v734 = vld [vmem:[#allocation5 + $0x24] sm:$0xf]
    %v735 = vld [vmem:[#allocation5 + $0x28] sm:$0xf]
    %v736 = vld [vmem:[#allocation5 + $0x2c] sm:$0xf]
    %v737 = vld [vmem:[#allocation5 + $0x30] sm:$0xf]
    %v738 = vld [vmem:[#allocation5 + $0x34] sm:$0xf]
    %v739 = vld [vmem:[#allocation5 + $0x38] sm:$0xf]
    %v740 = vld [vmem:[#allocation5 + $0x3c] sm:$0xf]
    %v741 = vld [vmem:[#allocation5 + $0x40] sm:$0xf]
    %v742 = vld [vmem:[#allocation5 + $0x44] sm:$0xf]
    %v743 = vld [vmem:[#allocation5 + $0x48] sm:$0xf]
    %v744 = vld [vmem:[#allocation5 + $0x4c] sm:$0xf]
    %v745 = vld [vmem:[#allocation5 + $0x50] sm:$0xf]
    %v746 = vld [vmem:[#allocation5 + $0x54] sm:$0xf]
    %v747 = vld [vmem:[#allocation5 + $0x58] sm:$0xf]
    %v748 = vld [vmem:[#allocation5 + $0x5c] sm:$0xf]
    %v749 = vld [vmem:[#allocation5 + $0x60] sm:$0xf]
    %v750 = vld [vmem:[#allocation5 + $0x64] sm:$0xf]
    %v751 = vld [vmem:[#allocation5 + $0x68] sm:$0xf]
    %v752 = vld [vmem:[#allocation5 + $0x6c] sm:$0xf]
    %v753 = vld [vmem:[#allocation5 + $0x70] sm:$0xf]
    %v754 = vld [vmem:[#allocation5 + $0x74] sm:$0xf]
    %v755 = vld [vmem:[#allocation5 + $0x78] sm:$0xf]
    %v756 = vld [vmem:[#allocation5 + $0x7c] sm:$0xf]
    %v757 = vld [vmem:[#allocation5 + $0x80] sm:$0xf]
    %v758 = vld [vmem:[#allocation5 + $0x84] sm:$0xf]
    %v759 = vld [vmem:[#allocation5 + $0x88] sm:$0xf]
    %v760 = vld [vmem:[#allocation5 + $0x8c] sm:$0xf]
    %v761 = vld [vmem:[#allocation5 + $0x90] sm:$0xf]
    %v762 = vld [vmem:[#allocation5 + $0x94] sm:$0xf]
    %v763 = vld [vmem:[#allocation5 + $0x98] sm:$0xf]
    %v764 = vld [vmem:[#allocation5 + $0x9c] sm:$0xf]
    %v765 = vld [vmem:[#allocation5 + $0xa0] sm:$0xf]
    %v766 = vld [vmem:[#allocation5 + $0xa4] sm:$0xf]
    %v767 = vld [vmem:[#allocation5 + $0xa8] sm:$0xf]
    %v768 = vld [vmem:[#allocation5 + $0xac] sm:$0xf]
    %v769 = vld [vmem:[#allocation5 + $0xb0] sm:$0xf]
    %v770 = vld [vmem:[#allocation5 + $0xb4] sm:$0xf]
    %v771 = vld [vmem:[#allocation5 + $0xb8] sm:$0xf]
    %v772 = vld [vmem:[#allocation5 + $0xbc] sm:$0xf]
    %v773 = vld [vmem:[#allocation5 + $0xc0] sm:$0xf]
    %v774 = vld [vmem:[#allocation5 + $0xc4] sm:$0xf]
    %v775 = vld [vmem:[#allocation5 + $0xc8] sm:$0xf]
    %v776 = vld [vmem:[#allocation5 + $0xcc] sm:$0xf]
    %v777 = vld [vmem:[#allocation5 + $0xd0] sm:$0xf]
    %v778 = vld [vmem:[#allocation5 + $0xd4] sm:$0xf]
    %v779 = vld [vmem:[#allocation5 + $0xd8] sm:$0xf]
    %v780 = vld [vmem:[#allocation5 + $0xdc] sm:$0xf]
    %v781 = vld [vmem:[#allocation5 + $0xe0] sm:$0xf]
    %v782 = vld [vmem:[#allocation5 + $0xe4] sm:$0xf]
    %v783 = vld [vmem:[#allocation5 + $0xe8] sm:$0xf]
    %v784 = vld [vmem:[#allocation5 + $0xec] sm:$0xf]
    %v785 = vld [vmem:[#allocation5 + $0xf0] sm:$0xf]
    %v786 = vld [vmem:[#allocation5 + $0xf4] sm:$0xf]
    %v787 = vld [vmem:[#allocation5 + $0xf8] sm:$0xf]
    %v788 = vld [vmem:[#allocation5 + $0xfc] sm:$0xf]
    %v789 = vld [vmem:[#allocation5 + $0x100] sm:$0xf]
    %v790 = vld [vmem:[#allocation5 + $0x104] sm:$0xf]
    %v791 = vld [vmem:[#allocation5 + $0x108] sm:$0xf]
    %v792 = vld [vmem:[#allocation5 + $0x10c] sm:$0xf]
    %v793 = vld [vmem:[#allocation5 + $0x110] sm:$0xf]
    %v794 = vld [vmem:[#allocation5 + $0x114] sm:$0xf]
    %v795 = vld [vmem:[#allocation5 + $0x118] sm:$0xf]
    %v796 = vld [vmem:[#allocation5 + $0x11c] sm:$0xf]
    %v797 = vld [vmem:[#allocation5 + $0x120] sm:$0xf]
    %v798 = vld [vmem:[#allocation5 + $0x124] sm:$0xf]
    %v799 = vld [vmem:[#allocation5 + $0x128] sm:$0xf]
    %v800 = vld [vmem:[#allocation5 + $0x12c] sm:$0xf]
    %v801 = vld [vmem:[#allocation5 + $0x130] sm:$0xf]
    %v802 = vld [vmem:[#allocation5 + $0x134] sm:$0xf]
    %v803 = vld [vmem:[#allocation5 + $0x138] sm:$0xf]
    %v804 = vld [vmem:[#allocation5 + $0x13c] sm:$0xf]
    %v805 = vld [vmem:[#allocation5 + $0x140] sm:$0xf]
    %v806 = vld [vmem:[#allocation5 + $0x144] sm:$0xf]
    %v807 = vld [vmem:[#allocation5 + $0x148] sm:$0xf]
    %v808 = vld [vmem:[#allocation5 + $0x14c] sm:$0xf]
    %v809 = vld [vmem:[#allocation5 + $0x150] sm:$0xf]
    %v810 = vld [vmem:[#allocation5 + $0x154] sm:$0xf]
    %v811 = vld [vmem:[#allocation5 + $0x158] sm:$0xf]
    %v812 = vld [vmem:[#allocation5 + $0x15c] sm:$0xf]
    %v813 = vld [vmem:[#allocation5 + $0x160] sm:$0xf]
    %v814 = vld [vmem:[#allocation5 + $0x164] sm:$0xf]
    %v815 = vld [vmem:[#allocation5 + $0x168] sm:$0xf]
    %v816 = vld [vmem:[#allocation5 + $0x16c] sm:$0xf]
    %v817 = vld [vmem:[#allocation5 + $0x170] sm:$0xf]
    %v818 = vld [vmem:[#allocation5 + $0x174] sm:$0xf]
    %v819 = vld [vmem:[#allocation5 + $0x178] sm:$0xf]
    %v820 = vld [vmem:[#allocation5 + $0x17c] sm:$0xf]
    %v821 = vld [vmem:[#allocation5 + $0x180] sm:$0xf]
    %v822 = vld [vmem:[#allocation5 + $0x184] sm:$0xf]
    %v823 = vld [vmem:[#allocation5 + $0x188] sm:$0xf]
    %v824 = vld [vmem:[#allocation5 + $0x18c] sm:$0xf]
    %v825 = vld [vmem:[#allocation5 + $0x190] sm:$0xf]
    %v826 = vld [vmem:[#allocation5 + $0x194] sm:$0xf]
    %v827 = vld [vmem:[#allocation5 + $0x198] sm:$0xf]
    %v828 = vld [vmem:[#allocation5 + $0x19c] sm:$0xf]
    %v829 = vld [vmem:[#allocation5 + $0x1a0] sm:$0xf]
    %v830 = vld [vmem:[#allocation5 + $0x1a4] sm:$0xf]
    %v831 = vld [vmem:[#allocation5 + $0x1a8] sm:$0xf]
    %v832 = vld [vmem:[#allocation5 + $0x1ac] sm:$0xf]
    %v833 = vld [vmem:[#allocation5 + $0x1b0] sm:$0xf]
    %v834 = vld [vmem:[#allocation5 + $0x1b4] sm:$0xf]
    %v835 = vld [vmem:[#allocation5 + $0x1b8] sm:$0xf]
    %v836 = vld [vmem:[#allocation5 + $0x1bc] sm:$0xf]
    %v837 = vld [vmem:[#allocation5 + $0x1c0] sm:$0xf]
    %v838 = vld [vmem:[#allocation5 + $0x1c4] sm:$0xf]
    %v839 = vld [vmem:[#allocation5 + $0x1c8] sm:$0xf]
    %v840 = vld [vmem:[#allocation5 + $0x1cc] sm:$0xf]
    %v841 = vld [vmem:[#allocation5 + $0x1d0] sm:$0xf]
    %v842 = vld [vmem:[#allocation5 + $0x1d4] sm:$0xf]
    %v843 = vld [vmem:[#allocation5 + $0x1d8] sm:$0xf]
    %v844 = vld [vmem:[#allocation5 + $0x1dc] sm:$0xf]
    %v845 = vld [vmem:[#allocation5 + $0x1e0] sm:$0xf]
    %v846 = vld [vmem:[#allocation5 + $0x1e4] sm:$0xf]
    %v847 = vld [vmem:[#allocation5 + $0x1e8] sm:$0xf]
    %v848 = vld [vmem:[#allocation5 + $0x1ec] sm:$0xf]
    %v849 = vld [vmem:[#allocation5 + $0x1f0] sm:$0xf]
    %v850 = vld [vmem:[#allocation5 + $0x1f4] sm:$0xf]
    %v851 = vld [vmem:[#allocation5 + $0x1f8] sm:$0xf]
    %v852 = vld [vmem:[#allocation5 + $0x1fc] sm:$0xf]
    %v853 = vld [vmem:[#allocation5 + $0x200] sm:$0xf]
    %v854 = vld [vmem:[#allocation5 + $0x204] sm:$0xf]
    %v855 = vld [vmem:[#allocation5 + $0x208] sm:$0xf]
    %v856 = vld [vmem:[#allocation5 + $0x20c] sm:$0xf]
    %v857 = vld [vmem:[#allocation5 + $0x210] sm:$0xf]
    %v858 = vld [vmem:[#allocation5 + $0x214] sm:$0xf]
    %v859 = vld [vmem:[#allocation5 + $0x218] sm:$0xf]
    %v860 = vld [vmem:[#allocation5 + $0x21c] sm:$0xf]
    %v861 = vld [vmem:[#allocation5 + $0x220] sm:$0xf]
    %v862 = vld [vmem:[#allocation5 + $0x224] sm:$0xf]
    %v863 = vld [vmem:[#allocation5 + $0x228] sm:$0xf]
    %v864 = vld [vmem:[#allocation5 + $0x22c] sm:$0xf]
    %v865 = vld [vmem:[#allocation5 + $0x230] sm:$0xf]
    %v866 = vld [vmem:[#allocation5 + $0x234] sm:$0xf]
    %v867 = vld [vmem:[#allocation5 + $0x238] sm:$0xf]
    %v868 = vld [vmem:[#allocation5 + $0x23c] sm:$0xf]
    %v869 = vld [vmem:[#allocation5 + $0x240] sm:$0xf]
    %v870 = vld [vmem:[#allocation5 + $0x244] sm:$0xf]
    %v871 = vld [vmem:[#allocation5 + $0x248] sm:$0xf]
    %v872 = vld [vmem:[#allocation5 + $0x24c] sm:$0xf]
    %v873 = vld [vmem:[#allocation5 + $0x250] sm:$0xf]
    %v874 = vld [vmem:[#allocation5 + $0x254] sm:$0xf]
    %v875 = vld [vmem:[#allocation5 + $0x258] sm:$0xf]
    %v876 = vld [vmem:[#allocation5 + $0x25c] sm:$0xf]
    %v877 = vld [vmem:[#allocation5 + $0x260] sm:$0xf]
    %v878 = vld [vmem:[#allocation5 + $0x264] sm:$0xf]
    %v879 = vld [vmem:[#allocation5 + $0x268] sm:$0xf]
    %v880 = vld [vmem:[#allocation5 + $0x26c] sm:$0xf]
    %v881 = vld [vmem:[#allocation5 + $0x270] sm:$0xf]
    %v882 = vld [vmem:[#allocation5 + $0x274] sm:$0xf]
    %v883 = vld [vmem:[#allocation5 + $0x278] sm:$0xf]
    %v884 = vld [vmem:[#allocation5 + $0x27c] sm:$0xf]
    %v885 = vld [vmem:[#allocation7] sm:$0x1]
    %v887 = vperm.slane %v885, 0
    %v909 = vunpack.c.l.b16 %v705
    %v910 = vunpack.c.l.b16 %v706
    %v911 = vunpack.c.l.b16 %v707
    %v912 = vunpack.c.l.b16 %v708
    %v913 = vunpack.c.l.b16 %v709
    %v914 = vunpack.c.l.b16 %v710
    %v915 = vunpack.c.l.b16 %v711
    %v916 = vunpack.c.l.b16 %v712
    %v917 = vunpack.c.l.b16 %v713
    %v918 = vunpack.c.l.b16 %v714
    %v919 = vunpack.c.l.b16 %v715
    %v920 = vunpack.c.l.b16 %v716
    %v921 = vunpack.c.l.b16 %v717
    %v922 = vunpack.c.l.b16 %v718
    %v923 = vunpack.c.l.b16 %v719
    %v924 = vunpack.c.l.b16 %v720
    %v925 = vunpack.c.l.b16 %v721
    %v926 = vunpack.c.l.b16 %v722
    %v927 = vunpack.c.l.b16 %v723
    %v928 = vunpack.c.l.b16 %v724
    %vm929 = vcmask 1041409
    %v930 = vsel %vm929, %v919, %v909
    %v931 = vsel %vm929, %v920, %v910
    %v932 = vsel %vm929, %v921, %v911
    %v933 = vsel %vm929, %v922, %v912
    %v934 = vsel %vm929, %v923, %v913
    %v935 = vsel %vm929, %v924, %v914
    %v936 = vsel %vm929, %v925, %v915
    %v937 = vsel %vm929, %v926, %v916
    %v938 = vsel %vm929, %v927, %v917
    %v939 = vsel %vm929, %v928, %v918
    %v940 = vpack.c.b16 %v930, %v930
    %v941 = vpack.c.b16 %v931, %v931
    %v942 = vpack.c.b16 %v932, %v932
    %v943 = vpack.c.b16 %v933, %v933
    %v944 = vpack.c.b16 %v934, %v934
    %v945 = vpack.c.b16 %v935, %v935
    %v946 = vpack.c.b16 %v936, %v936
    %v947 = vpack.c.b16 %v937, %v937
    %v948 = vpack.c.b16 %v938, %v938
    %v949 = vpack.c.b16 %v939, %v939
    %v1120 = vunpack.c.l.b16 %v725
    %v1121 = vunpack.c.l.b16 %v726
    %v1122 = vunpack.c.l.b16 %v727
    %v1123 = vunpack.c.l.b16 %v728
    %v1124 = vunpack.c.l.b16 %v729
    %v1125 = vunpack.c.l.b16 %v730
    %v1126 = vunpack.c.l.b16 %v731
    %v1127 = vunpack.c.l.b16 %v732
    %v1128 = vunpack.c.l.b16 %v733
    %v1129 = vunpack.c.l.b16 %v734
    %v1130 = vunpack.c.l.b16 %v735
    %v1131 = vunpack.c.l.b16 %v736
    %v1132 = vunpack.c.l.b16 %v737
    %v1133 = vunpack.c.l.b16 %v738
    %v1134 = vunpack.c.l.b16 %v739
    %v1135 = vunpack.c.l.b16 %v740
    %v1136 = vunpack.c.l.b16 %v741
    %v1137 = vunpack.c.l.b16 %v742
    %v1138 = vunpack.c.l.b16 %v743
    %v1139 = vunpack.c.l.b16 %v744
    %v1140 = vunpack.c.l.b16 %v745
    %v1141 = vunpack.c.l.b16 %v746
    %v1142 = vunpack.c.l.b16 %v747
    %v1143 = vunpack.c.l.b16 %v748
    %v1144 = vunpack.c.l.b16 %v749
    %v1145 = vunpack.c.l.b16 %v750
    %v1146 = vunpack.c.l.b16 %v751
    %v1147 = vunpack.c.l.b16 %v752
    %v1148 = vunpack.c.l.b16 %v753
    %v1149 = vunpack.c.l.b16 %v754
    %v1150 = vunpack.c.l.b16 %v755
    %v1151 = vunpack.c.l.b16 %v756
    %v1152 = vunpack.c.l.b16 %v757
    %v1153 = vunpack.c.l.b16 %v758
    %v1154 = vunpack.c.l.b16 %v759
    %v1155 = vunpack.c.l.b16 %v760
    %v1156 = vunpack.c.l.b16 %v761
    %v1157 = vunpack.c.l.b16 %v762
    %v1158 = vunpack.c.l.b16 %v763
    %v1159 = vunpack.c.l.b16 %v764
    %v1160 = vunpack.c.l.b16 %v765
    %v1161 = vunpack.c.l.b16 %v766
    %v1162 = vunpack.c.l.b16 %v767
    %v1163 = vunpack.c.l.b16 %v768
    %v1164 = vunpack.c.l.b16 %v769
    %v1165 = vunpack.c.l.b16 %v770
    %v1166 = vunpack.c.l.b16 %v771
    %v1167 = vunpack.c.l.b16 %v772
    %v1168 = vunpack.c.l.b16 %v773
    %v1169 = vunpack.c.l.b16 %v774
    %v1170 = vunpack.c.l.b16 %v775
    %v1171 = vunpack.c.l.b16 %v776
    %v1172 = vunpack.c.l.b16 %v777
    %v1173 = vunpack.c.l.b16 %v778
    %v1174 = vunpack.c.l.b16 %v779
    %v1175 = vunpack.c.l.b16 %v780
    %v1176 = vunpack.c.l.b16 %v781
    %v1177 = vunpack.c.l.b16 %v782
    %v1178 = vunpack.c.l.b16 %v783
    %v1179 = vunpack.c.l.b16 %v784
    %v1180 = vunpack.c.l.b16 %v785
    %v1181 = vunpack.c.l.b16 %v786
    %v1182 = vunpack.c.l.b16 %v787
    %v1183 = vunpack.c.l.b16 %v788
    %v1184 = vunpack.c.l.b16 %v789
    %v1185 = vunpack.c.l.b16 %v790
    %v1186 = vunpack.c.l.b16 %v791
    %v1187 = vunpack.c.l.b16 %v792
    %v1188 = vunpack.c.l.b16 %v793
    %v1189 = vunpack.c.l.b16 %v794
    %v1190 = vunpack.c.l.b16 %v795
    %v1191 = vunpack.c.l.b16 %v796
    %v1192 = vunpack.c.l.b16 %v797
    %v1193 = vunpack.c.l.b16 %v798
    %v1194 = vunpack.c.l.b16 %v799
    %v1195 = vunpack.c.l.b16 %v800
    %v1196 = vunpack.c.l.b16 %v801
    %v1197 = vunpack.c.l.b16 %v802
    %v1198 = vunpack.c.l.b16 %v803
    %v1199 = vunpack.c.l.b16 %v804
    %v1200 = vunpack.c.l.b16 %v805
    %v1201 = vunpack.c.l.b16 %v806
    %v1202 = vunpack.c.l.b16 %v807
    %v1203 = vunpack.c.l.b16 %v808
    %v1204 = vunpack.c.l.b16 %v809
    %v1205 = vunpack.c.l.b16 %v810
    %v1206 = vunpack.c.l.b16 %v811
    %v1207 = vunpack.c.l.b16 %v812
    %v1208 = vunpack.c.l.b16 %v813
    %v1209 = vunpack.c.l.b16 %v814
    %v1210 = vunpack.c.l.b16 %v815
    %v1211 = vunpack.c.l.b16 %v816
    %v1212 = vunpack.c.l.b16 %v817
    %v1213 = vunpack.c.l.b16 %v818
    %v1214 = vunpack.c.l.b16 %v819
    %v1215 = vunpack.c.l.b16 %v820
    %v1216 = vunpack.c.l.b16 %v821
    %v1217 = vunpack.c.l.b16 %v822
    %v1218 = vunpack.c.l.b16 %v823
    %v1219 = vunpack.c.l.b16 %v824
    %v1220 = vunpack.c.l.b16 %v825
    %v1221 = vunpack.c.l.b16 %v826
    %v1222 = vunpack.c.l.b16 %v827
    %v1223 = vunpack.c.l.b16 %v828
    %v1224 = vunpack.c.l.b16 %v829
    %v1225 = vunpack.c.l.b16 %v830
    %v1226 = vunpack.c.l.b16 %v831
    %v1227 = vunpack.c.l.b16 %v832
    %v1228 = vunpack.c.l.b16 %v833
    %v1229 = vunpack.c.l.b16 %v834
    %v1230 = vunpack.c.l.b16 %v835
    %v1231 = vunpack.c.l.b16 %v836
    %v1232 = vunpack.c.l.b16 %v837
    %v1233 = vunpack.c.l.b16 %v838
    %v1234 = vunpack.c.l.b16 %v839
    %v1235 = vunpack.c.l.b16 %v840
    %v1236 = vunpack.c.l.b16 %v841
    %v1237 = vunpack.c.l.b16 %v842
    %v1238 = vunpack.c.l.b16 %v843
    %v1239 = vunpack.c.l.b16 %v844
    %v1240 = vunpack.c.l.b16 %v845
    %v1241 = vunpack.c.l.b16 %v846
    %v1242 = vunpack.c.l.b16 %v847
    %v1243 = vunpack.c.l.b16 %v848
    %v1244 = vunpack.c.l.b16 %v849
    %v1245 = vunpack.c.l.b16 %v850
    %v1246 = vunpack.c.l.b16 %v851
    %v1247 = vunpack.c.l.b16 %v852
    %v1248 = vunpack.c.l.b16 %v853
    %v1249 = vunpack.c.l.b16 %v854
    %v1250 = vunpack.c.l.b16 %v855
    %v1251 = vunpack.c.l.b16 %v856
    %v1252 = vunpack.c.l.b16 %v857
    %v1253 = vunpack.c.l.b16 %v858
    %v1254 = vunpack.c.l.b16 %v859
    %v1255 = vunpack.c.l.b16 %v860
    %v1256 = vunpack.c.l.b16 %v861
    %v1257 = vunpack.c.l.b16 %v862
    %v1258 = vunpack.c.l.b16 %v863
    %v1259 = vunpack.c.l.b16 %v864
    %v1260 = vunpack.c.l.b16 %v865
    %v1261 = vunpack.c.l.b16 %v866
    %v1262 = vunpack.c.l.b16 %v867
    %v1263 = vunpack.c.l.b16 %v868
    %v1264 = vunpack.c.l.b16 %v869
    %v1265 = vunpack.c.l.b16 %v870
    %v1266 = vunpack.c.l.b16 %v871
    %v1267 = vunpack.c.l.b16 %v872
    %v1268 = vunpack.c.l.b16 %v873
    %v1269 = vunpack.c.l.b16 %v874
    %v1270 = vunpack.c.l.b16 %v875
    %v1271 = vunpack.c.l.b16 %v876
    %v1272 = vunpack.c.l.b16 %v877
    %v1273 = vunpack.c.l.b16 %v878
    %v1274 = vunpack.c.l.b16 %v879
    %v1275 = vunpack.c.l.b16 %v880
    %v1276 = vunpack.c.l.b16 %v881
    %v1277 = vunpack.c.l.b16 %v882
    %v1278 = vunpack.c.l.b16 %v883
    %v1279 = vunpack.c.l.b16 %v884
    %v1280 = vpack.c.b16 %v1121, %v1120
    %v1281 = vpack.c.b16 %v1123, %v1122
    %v1282 = vpack.c.b16 %v1125, %v1124
    %v1283 = vpack.c.b16 %v1127, %v1126
    %v1284 = vpack.c.b16 %v1129, %v1128
    %v1285 = vpack.c.b16 %v1131, %v1130
    %v1286 = vpack.c.b16 %v1133, %v1132
    %v1287 = vpack.c.b16 %v1135, %v1134
    %v1288 = vpack.c.b16 %v1137, %v1136
    %v1289 = vpack.c.b16 %v1139, %v1138
    %v1290 = vpack.c.b16 %v1141, %v1140
    %v1291 = vpack.c.b16 %v1143, %v1142
    %v1292 = vpack.c.b16 %v1145, %v1144
    %v1293 = vpack.c.b16 %v1147, %v1146
    %v1294 = vpack.c.b16 %v1149, %v1148
    %v1295 = vpack.c.b16 %v1151, %v1150
    %v1296 = vpack.c.b16 %v1153, %v1152
    %v1297 = vpack.c.b16 %v1155, %v1154
    %v1298 = vpack.c.b16 %v1157, %v1156
    %v1299 = vpack.c.b16 %v1159, %v1158
    %v1300 = vpack.c.b16 %v1161, %v1160
    %v1301 = vpack.c.b16 %v1163, %v1162
    %v1302 = vpack.c.b16 %v1165, %v1164
    %v1303 = vpack.c.b16 %v1167, %v1166
    %v1304 = vpack.c.b16 %v1169, %v1168
    %v1305 = vpack.c.b16 %v1171, %v1170
    %v1306 = vpack.c.b16 %v1173, %v1172
    %v1307 = vpack.c.b16 %v1175, %v1174
    %v1308 = vpack.c.b16 %v1177, %v1176
    %v1309 = vpack.c.b16 %v1179, %v1178
    %v1310 = vpack.c.b16 %v1181, %v1180
    %v1311 = vpack.c.b16 %v1183, %v1182
    %v1312 = vpack.c.b16 %v1185, %v1184
    %v1313 = vpack.c.b16 %v1187, %v1186
    %v1314 = vpack.c.b16 %v1189, %v1188
    %v1315 = vpack.c.b16 %v1191, %v1190
    %v1316 = vpack.c.b16 %v1193, %v1192
    %v1317 = vpack.c.b16 %v1195, %v1194
    %v1318 = vpack.c.b16 %v1197, %v1196
    %v1319 = vpack.c.b16 %v1199, %v1198
    %v1320 = vpack.c.b16 %v1201, %v1200
    %v1321 = vpack.c.b16 %v1203, %v1202
    %v1322 = vpack.c.b16 %v1205, %v1204
    %v1323 = vpack.c.b16 %v1207, %v1206
    %v1324 = vpack.c.b16 %v1209, %v1208
    %v1325 = vpack.c.b16 %v1211, %v1210
    %v1326 = vpack.c.b16 %v1213, %v1212
    %v1327 = vpack.c.b16 %v1215, %v1214
    %v1328 = vpack.c.b16 %v1217, %v1216
    %v1329 = vpack.c.b16 %v1219, %v1218
    %v1330 = vpack.c.b16 %v1221, %v1220
    %v1331 = vpack.c.b16 %v1223, %v1222
    %v1332 = vpack.c.b16 %v1225, %v1224
    %v1333 = vpack.c.b16 %v1227, %v1226
    %v1334 = vpack.c.b16 %v1229, %v1228
    %v1335 = vpack.c.b16 %v1231, %v1230
    %v1336 = vpack.c.b16 %v1233, %v1232
    %v1337 = vpack.c.b16 %v1235, %v1234
    %v1338 = vpack.c.b16 %v1237, %v1236
    %v1339 = vpack.c.b16 %v1239, %v1238
    %v1340 = vpack.c.b16 %v1241, %v1240
    %v1341 = vpack.c.b16 %v1243, %v1242
    %v1342 = vpack.c.b16 %v1245, %v1244
    %v1343 = vpack.c.b16 %v1247, %v1246
    %v1344 = vpack.c.b16 %v1249, %v1248
    %v1345 = vpack.c.b16 %v1251, %v1250
    %v1346 = vpack.c.b16 %v1253, %v1252
    %v1347 = vpack.c.b16 %v1255, %v1254
    %v1348 = vpack.c.b16 %v1257, %v1256
    %v1349 = vpack.c.b16 %v1259, %v1258
    %v1350 = vpack.c.b16 %v1261, %v1260
    %v1351 = vpack.c.b16 %v1263, %v1262
    %v1352 = vpack.c.b16 %v1265, %v1264
    %v1353 = vpack.c.b16 %v1267, %v1266
    %v1354 = vpack.c.b16 %v1269, %v1268
    %v1355 = vpack.c.b16 %v1271, %v1270
    %v1356 = vpack.c.b16 %v1273, %v1272
    %v1357 = vpack.c.b16 %v1275, %v1274
    %v1358 = vpack.c.b16 %v1277, %v1276
    %v1359 = vpack.c.b16 %v1279, %v1278
    %1440 = vmatpush.bf16.msra.mxu0 %v1287
    %1441 = vmatpush.bf16.msra.mxu0 %v1286
    %1442 = vmatpush.bf16.msra.mxu0 %v1285
    %1443 = vmatpush.bf16.msra.mxu0 %v1284
    %1444 = vmatpush.bf16.msra.mxu0 %v1283
    %1445 = vmatpush.bf16.msra.mxu0 %v1282
    %1446 = vmatpush.bf16.msra.mxu0 %v1281
    %1447 = vmatpush.bf16.msra.mxu0 %v1280
    %1448 = vmatmul.bf16.gmra.mxu0 %v940
    %v1449 = vpop.f32.mrf.mxu0
    %v1450 = vadd.f32 %v887, %v1449
    %v1451 = vpop.f32.mrf.mxu0
    %1452 = vdwg.mxu0
    %1453 = vmatpush.bf16.msra.mxu0 %v1295
    %1454 = vmatpush.bf16.msra.mxu0 %v1294
    %1455 = vmatpush.bf16.msra.mxu0 %v1293
    %1456 = vmatpush.bf16.msra.mxu0 %v1292
    %1457 = vmatpush.bf16.msra.mxu0 %v1291
    %1458 = vmatpush.bf16.msra.mxu0 %v1290
    %1459 = vmatpush.bf16.msra.mxu0 %v1289
    %1460 = vmatpush.bf16.msra.mxu0 %v1288
    %1461 = vmatmul.bf16.gmra.mxu0 %v941
    %v1462 = vpop.f32.mrf.mxu0
    %v1463 = vadd.f32 %v1450, %v1462
    %v1464 = vpop.f32.mrf.mxu0
    %1465 = vdwg.mxu0
    %1466 = vmatpush.bf16.msra.mxu0 %v1303
    %1467 = vmatpush.bf16.msra.mxu0 %v1302
    %1468 = vmatpush.bf16.msra.mxu0 %v1301
    %1469 = vmatpush.bf16.msra.mxu0 %v1300
    %1470 = vmatpush.bf16.msra.mxu0 %v1299
    %1471 = vmatpush.bf16.msra.mxu0 %v1298
    %1472 = vmatpush.bf16.msra.mxu0 %v1297
    %1473 = vmatpush.bf16.msra.mxu0 %v1296
    %1474 = vmatmul.bf16.gmra.mxu0 %v942
    %v1475 = vpop.f32.mrf.mxu0
    %v1476 = vadd.f32 %v1463, %v1475
    %v1477 = vpop.f32.mrf.mxu0
    %1478 = vdwg.mxu0
    %1479 = vmatpush.bf16.msra.mxu0 %v1311
    %1480 = vmatpush.bf16.msra.mxu0 %v1310
    %1481 = vmatpush.bf16.msra.mxu0 %v1309
    %1482 = vmatpush.bf16.msra.mxu0 %v1308
    %1483 = vmatpush.bf16.msra.mxu0 %v1307
    %1484 = vmatpush.bf16.msra.mxu0 %v1306
    %1485 = vmatpush.bf16.msra.mxu0 %v1305
    %1486 = vmatpush.bf16.msra.mxu0 %v1304
    %1487 = vmatmul.bf16.gmra.mxu0 %v943
    %v1488 = vpop.f32.mrf.mxu0
    %v1489 = vadd.f32 %v1476, %v1488
    %v1490 = vpop.f32.mrf.mxu0
    %1491 = vdwg.mxu0
    %1492 = vmatpush.bf16.msra.mxu0 %v1319
    %1493 = vmatpush.bf16.msra.mxu0 %v1318
    %1494 = vmatpush.bf16.msra.mxu0 %v1317
    %1495 = vmatpush.bf16.msra.mxu0 %v1316
    %1496 = vmatpush.bf16.msra.mxu0 %v1315
    %1497 = vmatpush.bf16.msra.mxu0 %v1314
    %1498 = vmatpush.bf16.msra.mxu0 %v1313
    %1499 = vmatpush.bf16.msra.mxu0 %v1312
    %1500 = vmatmul.bf16.gmra.mxu0 %v944
    %v1501 = vpop.f32.mrf.mxu0
    %v1502 = vadd.f32 %v1489, %v1501
    %v1503 = vpop.f32.mrf.mxu0
    %1504 = vdwg.mxu0
    %1505 = vmatpush.bf16.msra.mxu0 %v1327
    %1506 = vmatpush.bf16.msra.mxu0 %v1326
    %1507 = vmatpush.bf16.msra.mxu0 %v1325
    %1508 = vmatpush.bf16.msra.mxu0 %v1324
    %1509 = vmatpush.bf16.msra.mxu0 %v1323
    %1510 = vmatpush.bf16.msra.mxu0 %v1322
    %1511 = vmatpush.bf16.msra.mxu0 %v1321
    %1512 = vmatpush.bf16.msra.mxu0 %v1320
    %1513 = vmatmul.bf16.gmra.mxu0 %v945
    %v1514 = vpop.f32.mrf.mxu0
    %v1515 = vadd.f32 %v1502, %v1514
    %v1516 = vpop.f32.mrf.mxu0
    %1517 = vdwg.mxu0
    %1518 = vmatpush.bf16.msra.mxu0 %v1335
    %1519 = vmatpush.bf16.msra.mxu0 %v1334
    %1520 = vmatpush.bf16.msra.mxu0 %v1333
    %1521 = vmatpush.bf16.msra.mxu0 %v1332
    %1522 = vmatpush.bf16.msra.mxu0 %v1331
    %1523 = vmatpush.bf16.msra.mxu0 %v1330
    %1524 = vmatpush.bf16.msra.mxu0 %v1329
    %1525 = vmatpush.bf16.msra.mxu0 %v1328
    %1526 = vmatmul.bf16.gmra.mxu0 %v946
    %v1527 = vpop.f32.mrf.mxu0
    %v1528 = vadd.f32 %v1515, %v1527
    %v1529 = vpop.f32.mrf.mxu0
    %1530 = vdwg.mxu0
    %1531 = vmatpush.bf16.msra.mxu0 %v1343
    %1532 = vmatpush.bf16.msra.mxu0 %v1342
    %1533 = vmatpush.bf16.msra.mxu0 %v1341
    %1534 = vmatpush.bf16.msra.mxu0 %v1340
    %1535 = vmatpush.bf16.msra.mxu0 %v1339
    %1536 = vmatpush.bf16.msra.mxu0 %v1338
    %1537 = vmatpush.bf16.msra.mxu0 %v1337
    %1538 = vmatpush.bf16.msra.mxu0 %v1336
    %1539 = vmatmul.bf16.gmra.mxu0 %v947
    %v1540 = vpop.f32.mrf.mxu0
    %v1541 = vadd.f32 %v1528, %v1540
    %v1542 = vpop.f32.mrf.mxu0
    %1543 = vdwg.mxu0
    %1544 = vmatpush.bf16.msra.mxu0 %v1351
    %1545 = vmatpush.bf16.msra.mxu0 %v1350
    %1546 = vmatpush.bf16.msra.mxu0 %v1349
    %1547 = vmatpush.bf16.msra.mxu0 %v1348
    %1548 = vmatpush.bf16.msra.mxu0 %v1347
    %1549 = vmatpush.bf16.msra.mxu0 %v1346
    %1550 = vmatpush.bf16.msra.mxu0 %v1345
    %1551 = vmatpush.bf16.msra.mxu0 %v1344
    %1552 = vmatmul.bf16.gmra.mxu0 %v948
    %v1553 = vpop.f32.mrf.mxu0
    %v1554 = vadd.f32 %v1541, %v1553
    %v1555 = vpop.f32.mrf.mxu0
    %1556 = vdwg.mxu0
    %1557 = vmatpush.bf16.msra.mxu0 %v1359
    %1558 = vmatpush.bf16.msra.mxu0 %v1358
    %1559 = vmatpush.bf16.msra.mxu0 %v1357
    %1560 = vmatpush.bf16.msra.mxu0 %v1356
    %1561 = vmatpush.bf16.msra.mxu0 %v1355
    %1562 = vmatpush.bf16.msra.mxu0 %v1354
    %1563 = vmatpush.bf16.msra.mxu0 %v1353
    %1564 = vmatpush.bf16.msra.mxu0 %v1352
    %1565 = vmatmul.bf16.gmra.mxu0 %v949
    %v1566 = vpop.f32.mrf.mxu0
    %v1567 = vadd.f32 %v1554, %v1566
    %v1568 = vpop.f32.mrf.mxu0
    %1569 = vdwg.mxu0
    %v1570 = vmax.f32 %v1567, 0.0
    %v1571 = vpack.c.bf16 %v1570, %v1570
    %v1572 = vld [vmem:[#allocation8] sm:$0xff]
    %v1573 = vld [vmem:[#allocation8 + $0x8] sm:$0xff]
    %v1574 = vld [vmem:[#allocation8 + $0x10] sm:$0xff]
    %v1575 = vld [vmem:[#allocation8 + $0x18] sm:$0xff]
    %v1576 = vld [vmem:[#allocation8 + $0x20] sm:$0xff]
    %v1577 = vld [vmem:[#allocation8 + $0x28] sm:$0xff]
    %v1578 = vld [vmem:[#allocation8 + $0x30] sm:$0xff]
    %v1579 = vld [vmem:[#allocation8 + $0x38] sm:$0xff]
    %v1580 = vld [vmem:[#allocation8 + $0x40] sm:$0xff]
    %v1581 = vld [vmem:[#allocation8 + $0x48] sm:$0xff]
    %v1582 = vld [vmem:[#allocation8 + $0x50] sm:$0xff]
    %v1583 = vld [vmem:[#allocation8 + $0x58] sm:$0xff]
    %v1584 = vld [vmem:[#allocation8 + $0x60] sm:$0xff]
    %v1585 = vld [vmem:[#allocation8 + $0x68] sm:$0xff]
    %v1586 = vld [vmem:[#allocation8 + $0x70] sm:$0xff]
    %v1587 = vld [vmem:[#allocation8 + $0x78] sm:$0xff]
    %v1588 = vld [vmem:[#allocation8 + $0x80] sm:$0xff]
    %v1589 = vld [vmem:[#allocation8 + $0x88] sm:$0xff]
    %v1590 = vld [vmem:[#allocation8 + $0x90] sm:$0xff]
    %v1591 = vld [vmem:[#allocation8 + $0x98] sm:$0xff]
    %v1592 = vld [vmem:[#allocation8 + $0xa0] sm:$0xff]
    %v1593 = vld [vmem:[#allocation8 + $0xa8] sm:$0xff]
    %v1594 = vld [vmem:[#allocation8 + $0xb0] sm:$0xff]
    %v1595 = vld [vmem:[#allocation8 + $0xb8] sm:$0xff]
    %v1596 = vld [vmem:[#allocation8 + $0xc0] sm:$0xff]
    %v1597 = vld [vmem:[#allocation8 + $0xc8] sm:$0xff]
    %v1598 = vld [vmem:[#allocation8 + $0xd0] sm:$0xff]
    %v1599 = vld [vmem:[#allocation8 + $0xd8] sm:$0xff]
    %v1600 = vld [vmem:[#allocation8 + $0xe0] sm:$0xff]
    %v1601 = vld [vmem:[#allocation8 + $0xe8] sm:$0xff]
    %v1602 = vld [vmem:[#allocation8 + $0xf0] sm:$0xff]
    %v1603 = vld [vmem:[#allocation8 + $0xf8] sm:$0xff]
    %v1604 = vld [vmem:[#allocation8 + $0x100] sm:$0xff]
    %v1605 = vld [vmem:[#allocation8 + $0x108] sm:$0xff]
    %v1606 = vld [vmem:[#allocation8 + $0x110] sm:$0xff]
    %v1607 = vld [vmem:[#allocation8 + $0x118] sm:$0xff]
    %v1608 = vld [vmem:[#allocation8 + $0x120] sm:$0xff]
    %v1609 = vld [vmem:[#allocation8 + $0x128] sm:$0xff]
    %v1610 = vld [vmem:[#allocation8 + $0x130] sm:$0xff]
    %v1611 = vld [vmem:[#allocation8 + $0x138] sm:$0xff]
    %v1612 = vld [vmem:[#allocation8 + $0x140] sm:$0xff]
    %v1613 = vld [vmem:[#allocation8 + $0x148] sm:$0xff]
    %v1614 = vld [vmem:[#allocation8 + $0x150] sm:$0xff]
    %v1615 = vld [vmem:[#allocation8 + $0x158] sm:$0xff]
    %v1616 = vld [vmem:[#allocation8 + $0x160] sm:$0xff]
    %v1617 = vld [vmem:[#allocation8 + $0x168] sm:$0xff]
    %v1618 = vld [vmem:[#allocation8 + $0x170] sm:$0xff]
    %v1619 = vld [vmem:[#allocation8 + $0x178] sm:$0xff]
    %v1620 = vld [vmem:[#allocation8 + $0x180] sm:$0xff]
    %v1621 = vld [vmem:[#allocation8 + $0x188] sm:$0xff]
    %v1622 = vld [vmem:[#allocation8 + $0x190] sm:$0xff]
    %v1623 = vld [vmem:[#allocation8 + $0x198] sm:$0xff]
    %v1624 = vld [vmem:[#allocation8 + $0x1a0] sm:$0xff]
    %v1625 = vld [vmem:[#allocation8 + $0x1a8] sm:$0xff]
    %v1626 = vld [vmem:[#allocation8 + $0x1b0] sm:$0xff]
    %v1627 = vld [vmem:[#allocation8 + $0x1b8] sm:$0xff]
    %v1628 = vld [vmem:[#allocation8 + $0x1c0] sm:$0xff]
    %v1629 = vld [vmem:[#allocation8 + $0x1c8] sm:$0xff]
    %v1630 = vld [vmem:[#allocation8 + $0x1d0] sm:$0xff]
    %v1631 = vld [vmem:[#allocation8 + $0x1d8] sm:$0xff]
    %v1632 = vld [vmem:[#allocation8 + $0x1e0] sm:$0xff]
    %v1633 = vld [vmem:[#allocation8 + $0x1e8] sm:$0xff]
    %v1634 = vld [vmem:[#allocation8 + $0x1f0] sm:$0xff]
    %v1635 = vld [vmem:[#allocation8 + $0x1f8] sm:$0xff]
    %v1636 = vld [vmem:[#allocation8 + $0x200] sm:$0xff]
    %v1637 = vld [vmem:[#allocation8 + $0x208] sm:$0xff]
    %v1638 = vld [vmem:[#allocation8 + $0x210] sm:$0xff]
    %v1639 = vld [vmem:[#allocation8 + $0x218] sm:$0xff]
    %v1640 = vld [vmem:[#allocation8 + $0x220] sm:$0xff]
    %v1641 = vld [vmem:[#allocation8 + $0x228] sm:$0xff]
    %v1642 = vld [vmem:[#allocation8 + $0x230] sm:$0xff]
    %v1643 = vld [vmem:[#allocation8 + $0x238] sm:$0xff]
    %v1644 = vld [vmem:[#allocation8 + $0x240] sm:$0xff]
    %v1645 = vld [vmem:[#allocation8 + $0x248] sm:$0xff]
    %v1646 = vld [vmem:[#allocation8 + $0x250] sm:$0xff]
    %v1647 = vld [vmem:[#allocation8 + $0x258] sm:$0xff]
    %v1648 = vld [vmem:[#allocation8 + $0x260] sm:$0xff]
    %v1649 = vld [vmem:[#allocation8 + $0x268] sm:$0xff]
    %v1650 = vld [vmem:[#allocation8 + $0x270] sm:$0xff]
    %v1651 = vld [vmem:[#allocation8 + $0x278] sm:$0xff]
    %v1652 = vld [vmem:[#allocation10] sm:$0xff]
    %v1653 = vld [vmem:[#allocation10 + $0x8] sm:$0x3]
    %v1656 = vperm.slane %v1652, 0
    %v1657 = vperm.slane %v1652, 1
    %v1658 = vperm.slane %v1652, 2
    %v1659 = vperm.slane %v1652, 3
    %v1660 = vperm.slane %v1652, 4
    %v1661 = vperm.slane %v1652, 5
    %v1662 = vperm.slane %v1652, 6
    %v1663 = vperm.slane %v1652, 7
    %v1664 = vperm.slane %v1653, 0
    %v1665 = vperm.slane %v1653, 1
    %v1756 = vunpack.c.l.b16 %v1572
    %v1757 = vunpack.c.h.b16 %v1572
    %v1758 = vunpack.c.l.b16 %v1573
    %v1759 = vunpack.c.h.b16 %v1573
    %v1760 = vunpack.c.l.b16 %v1574
    %v1761 = vunpack.c.h.b16 %v1574
    %v1762 = vunpack.c.l.b16 %v1575
    %v1763 = vunpack.c.h.b16 %v1575
    %v1764 = vunpack.c.l.b16 %v1576
    %v1765 = vunpack.c.h.b16 %v1576
    %v1766 = vunpack.c.l.b16 %v1577
    %v1767 = vunpack.c.h.b16 %v1577
    %v1768 = vunpack.c.l.b16 %v1578
    %v1769 = vunpack.c.h.b16 %v1578
    %v1770 = vunpack.c.l.b16 %v1579
    %v1771 = vunpack.c.h.b16 %v1579
    %v1772 = vunpack.c.l.b16 %v1580
    %v1773 = vunpack.c.h.b16 %v1580
    %v1774 = vunpack.c.l.b16 %v1581
    %v1775 = vunpack.c.h.b16 %v1581
    %v1776 = vunpack.c.l.b16 %v1582
    %v1777 = vunpack.c.h.b16 %v1582
    %v1778 = vunpack.c.l.b16 %v1583
    %v1779 = vunpack.c.h.b16 %v1583
    %v1780 = vunpack.c.l.b16 %v1584
    %v1781 = vunpack.c.h.b16 %v1584
    %v1782 = vunpack.c.l.b16 %v1585
    %v1783 = vunpack.c.h.b16 %v1585
    %v1784 = vunpack.c.l.b16 %v1586
    %v1785 = vunpack.c.h.b16 %v1586
    %v1786 = vunpack.c.l.b16 %v1587
    %v1787 = vunpack.c.h.b16 %v1587
    %v1788 = vunpack.c.l.b16 %v1588
    %v1789 = vunpack.c.h.b16 %v1588
    %v1790 = vunpack.c.l.b16 %v1589
    %v1791 = vunpack.c.h.b16 %v1589
    %v1792 = vunpack.c.l.b16 %v1590
    %v1793 = vunpack.c.h.b16 %v1590
    %v1794 = vunpack.c.l.b16 %v1591
    %v1795 = vunpack.c.h.b16 %v1591
    %v1796 = vunpack.c.l.b16 %v1592
    %v1797 = vunpack.c.h.b16 %v1592
    %v1798 = vunpack.c.l.b16 %v1593
    %v1799 = vunpack.c.h.b16 %v1593
    %v1800 = vunpack.c.l.b16 %v1594
    %v1801 = vunpack.c.h.b16 %v1594
    %v1802 = vunpack.c.l.b16 %v1595
    %v1803 = vunpack.c.h.b16 %v1595
    %v1804 = vunpack.c.l.b16 %v1596
    %v1805 = vunpack.c.h.b16 %v1596
    %v1806 = vunpack.c.l.b16 %v1597
    %v1807 = vunpack.c.h.b16 %v1597
    %v1808 = vunpack.c.l.b16 %v1598
    %v1809 = vunpack.c.h.b16 %v1598
    %v1810 = vunpack.c.l.b16 %v1599
    %v1811 = vunpack.c.h.b16 %v1599
    %v1812 = vunpack.c.l.b16 %v1600
    %v1813 = vunpack.c.h.b16 %v1600
    %v1814 = vunpack.c.l.b16 %v1601
    %v1815 = vunpack.c.h.b16 %v1601
    %v1816 = vunpack.c.l.b16 %v1602
    %v1817 = vunpack.c.h.b16 %v1602
    %v1818 = vunpack.c.l.b16 %v1603
    %v1819 = vunpack.c.h.b16 %v1603
    %v1820 = vunpack.c.l.b16 %v1604
    %v1821 = vunpack.c.h.b16 %v1604
    %v1822 = vunpack.c.l.b16 %v1605
    %v1823 = vunpack.c.h.b16 %v1605
    %v1824 = vunpack.c.l.b16 %v1606
    %v1825 = vunpack.c.h.b16 %v1606
    %v1826 = vunpack.c.l.b16 %v1607
    %v1827 = vunpack.c.h.b16 %v1607
    %v1828 = vunpack.c.l.b16 %v1608
    %v1829 = vunpack.c.h.b16 %v1608
    %v1830 = vunpack.c.l.b16 %v1609
    %v1831 = vunpack.c.h.b16 %v1609
    %v1832 = vunpack.c.l.b16 %v1610
    %v1833 = vunpack.c.h.b16 %v1610
    %v1834 = vunpack.c.l.b16 %v1611
    %v1835 = vunpack.c.h.b16 %v1611
    %v1836 = vunpack.c.l.b16 %v1612
    %v1837 = vunpack.c.h.b16 %v1612
    %v1838 = vunpack.c.l.b16 %v1613
    %v1839 = vunpack.c.h.b16 %v1613
    %v1840 = vunpack.c.l.b16 %v1614
    %v1841 = vunpack.c.h.b16 %v1614
    %v1842 = vunpack.c.l.b16 %v1615
    %v1843 = vunpack.c.h.b16 %v1615
    %v1844 = vunpack.c.l.b16 %v1616
    %v1845 = vunpack.c.h.b16 %v1616
    %v1846 = vunpack.c.l.b16 %v1617
    %v1847 = vunpack.c.h.b16 %v1617
    %v1848 = vunpack.c.l.b16 %v1618
    %v1849 = vunpack.c.h.b16 %v1618
    %v1850 = vunpack.c.l.b16 %v1619
    %v1851 = vunpack.c.h.b16 %v1619
    %v1852 = vunpack.c.l.b16 %v1620
    %v1853 = vunpack.c.h.b16 %v1620
    %v1854 = vunpack.c.l.b16 %v1621
    %v1855 = vunpack.c.h.b16 %v1621
    %v1856 = vunpack.c.l.b16 %v1622
    %v1857 = vunpack.c.h.b16 %v1622
    %v1858 = vunpack.c.l.b16 %v1623
    %v1859 = vunpack.c.h.b16 %v1623
    %v1860 = vunpack.c.l.b16 %v1624
    %v1861 = vunpack.c.h.b16 %v1624
    %v1862 = vunpack.c.l.b16 %v1625
    %v1863 = vunpack.c.h.b16 %v1625
    %v1864 = vunpack.c.l.b16 %v1626
    %v1865 = vunpack.c.h.b16 %v1626
    %v1866 = vunpack.c.l.b16 %v1627
    %v1867 = vunpack.c.h.b16 %v1627
    %v1868 = vunpack.c.l.b16 %v1628
    %v1869 = vunpack.c.h.b16 %v1628
    %v1870 = vunpack.c.l.b16 %v1629
    %v1871 = vunpack.c.h.b16 %v1629
    %v1872 = vunpack.c.l.b16 %v1630
    %v1873 = vunpack.c.h.b16 %v1630
    %v1874 = vunpack.c.l.b16 %v1631
    %v1875 = vunpack.c.h.b16 %v1631
    %v1876 = vunpack.c.l.b16 %v1632
    %v1877 = vunpack.c.h.b16 %v1632
    %v1878 = vunpack.c.l.b16 %v1633
    %v1879 = vunpack.c.h.b16 %v1633
    %v1880 = vunpack.c.l.b16 %v1634
    %v1881 = vunpack.c.h.b16 %v1634
    %v1882 = vunpack.c.l.b16 %v1635
    %v1883 = vunpack.c.h.b16 %v1635
    %v1884 = vunpack.c.l.b16 %v1636
    %v1885 = vunpack.c.h.b16 %v1636
    %v1886 = vunpack.c.l.b16 %v1637
    %v1887 = vunpack.c.h.b16 %v1637
    %v1888 = vunpack.c.l.b16 %v1638
    %v1889 = vunpack.c.h.b16 %v1638
    %v1890 = vunpack.c.l.b16 %v1639
    %v1891 = vunpack.c.h.b16 %v1639
    %v1892 = vunpack.c.l.b16 %v1640
    %v1893 = vunpack.c.h.b16 %v1640
    %v1894 = vunpack.c.l.b16 %v1641
    %v1895 = vunpack.c.h.b16 %v1641
    %v1896 = vunpack.c.l.b16 %v1642
    %v1897 = vunpack.c.h.b16 %v1642
    %v1898 = vunpack.c.l.b16 %v1643
    %v1899 = vunpack.c.h.b16 %v1643
    %v1900 = vunpack.c.l.b16 %v1644
    %v1901 = vunpack.c.h.b16 %v1644
    %v1902 = vunpack.c.l.b16 %v1645
    %v1903 = vunpack.c.h.b16 %v1645
    %v1904 = vunpack.c.l.b16 %v1646
    %v1905 = vunpack.c.h.b16 %v1646
    %v1906 = vunpack.c.l.b16 %v1647
    %v1907 = vunpack.c.h.b16 %v1647
    %v1908 = vunpack.c.l.b16 %v1648
    %v1909 = vunpack.c.h.b16 %v1648
    %v1910 = vunpack.c.l.b16 %v1649
    %v1911 = vunpack.c.h.b16 %v1649
    %v1912 = vunpack.c.l.b16 %v1650
    %v1913 = vunpack.c.h.b16 %v1650
    %v1914 = vunpack.c.l.b16 %v1651
    %v1915 = vunpack.c.h.b16 %v1651
    %v1916 = vpack.c.b16 %v1766, %v1756
    %v1917 = vpack.c.b16 %v1767, %v1757
    %v1918 = vpack.c.b16 %v1768, %v1758
    %v1919 = vpack.c.b16 %v1769, %v1759
    %v1920 = vpack.c.b16 %v1770, %v1760
    %v1921 = vpack.c.b16 %v1771, %v1761
    %v1922 = vpack.c.b16 %v1772, %v1762
    %v1923 = vpack.c.b16 %v1773, %v1763
    %v1924 = vpack.c.b16 %v1774, %v1764
    %v1925 = vpack.c.b16 %v1775, %v1765
    %v1926 = vpack.c.b16 %v1786, %v1776
    %v1927 = vpack.c.b16 %v1787, %v1777
    %v1928 = vpack.c.b16 %v1788, %v1778
    %v1929 = vpack.c.b16 %v1789, %v1779
    %v1930 = vpack.c.b16 %v1790, %v1780
    %v1931 = vpack.c.b16 %v1791, %v1781
    %v1932 = vpack.c.b16 %v1792, %v1782
    %v1933 = vpack.c.b16 %v1793, %v1783
    %v1934 = vpack.c.b16 %v1794, %v1784
    %v1935 = vpack.c.b16 %v1795, %v1785
    %v1936 = vpack.c.b16 %v1806, %v1796
    %v1937 = vpack.c.b16 %v1807, %v1797
    %v1938 = vpack.c.b16 %v1808, %v1798
    %v1939 = vpack.c.b16 %v1809, %v1799
    %v1940 = vpack.c.b16 %v1810, %v1800
    %v1941 = vpack.c.b16 %v1811, %v1801
    %v1942 = vpack.c.b16 %v1812, %v1802
    %v1943 = vpack.c.b16 %v1813, %v1803
    %v1944 = vpack.c.b16 %v1814, %v1804
    %v1945 = vpack.c.b16 %v1815, %v1805
    %v1946 = vpack.c.b16 %v1826, %v1816
    %v1947 = vpack.c.b16 %v1827, %v1817
    %v1948 = vpack.c.b16 %v1828, %v1818
    %v1949 = vpack.c.b16 %v1829, %v1819
    %v1950 = vpack.c.b16 %v1830, %v1820
    %v1951 = vpack.c.b16 %v1831, %v1821
    %v1952 = vpack.c.b16 %v1832, %v1822
    %v1953 = vpack.c.b16 %v1833, %v1823
    %v1954 = vpack.c.b16 %v1834, %v1824
    %v1955 = vpack.c.b16 %v1835, %v1825
    %v1956 = vpack.c.b16 %v1846, %v1836
    %v1957 = vpack.c.b16 %v1847, %v1837
    %v1958 = vpack.c.b16 %v1848, %v1838
    %v1959 = vpack.c.b16 %v1849, %v1839
    %v1960 = vpack.c.b16 %v1850, %v1840
    %v1961 = vpack.c.b16 %v1851, %v1841
    %v1962 = vpack.c.b16 %v1852, %v1842
    %v1963 = vpack.c.b16 %v1853, %v1843
    %v1964 = vpack.c.b16 %v1854, %v1844
    %v1965 = vpack.c.b16 %v1855, %v1845
    %v1966 = vpack.c.b16 %v1866, %v1856
    %v1967 = vpack.c.b16 %v1867, %v1857
    %v1968 = vpack.c.b16 %v1868, %v1858
    %v1969 = vpack.c.b16 %v1869, %v1859
    %v1970 = vpack.c.b16 %v1870, %v1860
    %v1971 = vpack.c.b16 %v1871, %v1861
    %v1972 = vpack.c.b16 %v1872, %v1862
    %v1973 = vpack.c.b16 %v1873, %v1863
    %v1974 = vpack.c.b16 %v1874, %v1864
    %v1975 = vpack.c.b16 %v1875, %v1865
    %v1976 = vpack.c.b16 %v1886, %v1876
    %v1977 = vpack.c.b16 %v1887, %v1877
    %v1978 = vpack.c.b16 %v1888, %v1878
    %v1979 = vpack.c.b16 %v1889, %v1879
    %v1980 = vpack.c.b16 %v1890, %v1880
    %v1981 = vpack.c.b16 %v1891, %v1881
    %v1982 = vpack.c.b16 %v1892, %v1882
    %v1983 = vpack.c.b16 %v1893, %v1883
    %v1984 = vpack.c.b16 %v1894, %v1884
    %v1985 = vpack.c.b16 %v1895, %v1885
    %v1986 = vpack.c.b16 %v1906, %v1896
    %v1987 = vpack.c.b16 %v1907, %v1897
    %v1988 = vpack.c.b16 %v1908, %v1898
    %v1989 = vpack.c.b16 %v1909, %v1899
    %v1990 = vpack.c.b16 %v1910, %v1900
    %v1991 = vpack.c.b16 %v1911, %v1901
    %v1992 = vpack.c.b16 %v1912, %v1902
    %v1993 = vpack.c.b16 %v1913, %v1903
    %v1994 = vpack.c.b16 %v1914, %v1904
    %v1995 = vpack.c.b16 %v1915, %v1905
    %2076 = vmatpush.bf16.msra.mxu0 %v1986
    %2077 = vmatpush.bf16.msra.mxu0 %v1976
    %2078 = vmatpush.bf16.msra.mxu0 %v1966
    %2079 = vmatpush.bf16.msra.mxu0 %v1956
    %2080 = vmatpush.bf16.msra.mxu0 %v1946
    %2081 = vmatpush.bf16.msra.mxu0 %v1936
    %2082 = vmatpush.bf16.msra.mxu0 %v1926
    %2083 = vmatpush.bf16.msra.mxu0 %v1916
    %2084 = vmatmul.bf16.gmra.mxu0 %v1571
    %v2085 = vpop.f32.mrf.mxu0
    %v2086 = vadd.f32 %v1656, %v2085
    %v2087 = vpop.f32.mrf.mxu0
    %2088 = vdwg.mxu0
    %2089 = vmatpush.bf16.msra.mxu0 %v1987
    %2090 = vmatpush.bf16.msra.mxu0 %v1977
    %2091 = vmatpush.bf16.msra.mxu0 %v1967
    %2092 = vmatpush.bf16.msra.mxu0 %v1957
    %2093 = vmatpush.bf16.msra.mxu0 %v1947
    %2094 = vmatpush.bf16.msra.mxu0 %v1937
    %2095 = vmatpush.bf16.msra.mxu0 %v1927
    %2096 = vmatpush.bf16.msra.mxu0 %v1917
    %2097 = vmatmul.bf16.gmra.mxu0 %v1571
    %v2098 = vpop.f32.mrf.mxu0
    %v2099 = vadd.f32 %v1657, %v2098
    %v2100 = vpop.f32.mrf.mxu0
    %2101 = vdwg.mxu0
    %2102 = vmatpush.bf16.msra.mxu0 %v1988
    %2103 = vmatpush.bf16.msra.mxu0 %v1978
    %2104 = vmatpush.bf16.msra.mxu0 %v1968
    %2105 = vmatpush.bf16.msra.mxu0 %v1958
    %2106 = vmatpush.bf16.msra.mxu0 %v1948
    %2107 = vmatpush.bf16.msra.mxu0 %v1938
    %2108 = vmatpush.bf16.msra.mxu0 %v1928
    %2109 = vmatpush.bf16.msra.mxu0 %v1918
    %2110 = vmatmul.bf16.gmra.mxu0 %v1571
    %v2111 = vpop.f32.mrf.mxu0
    %v2112 = vadd.f32 %v1658, %v2111
    %v2113 = vpop.f32.mrf.mxu0
    %2114 = vdwg.mxu0
    %2115 = vmatpush.bf16.msra.mxu0 %v1989
    %2116 = vmatpush.bf16.msra.mxu0 %v1979
    %2117 = vmatpush.bf16.msra.mxu0 %v1969
    %2118 = vmatpush.bf16.msra.mxu0 %v1959
    %2119 = vmatpush.bf16.msra.mxu0 %v1949
    %2120 = vmatpush.bf16.msra.mxu0 %v1939
    %2121 = vmatpush.bf16.msra.mxu0 %v1929
    %2122 = vmatpush.bf16.msra.mxu0 %v1919
    %2123 = vmatmul.bf16.gmra.mxu0 %v1571
    %v2124 = vpop.f32.mrf.mxu0
    %v2125 = vadd.f32 %v1659, %v2124
    %v2126 = vpop.f32.mrf.mxu0
    %2127 = vdwg.mxu0
    %2128 = vmatpush.bf16.msra.mxu0 %v1990
    %2129 = vmatpush.bf16.msra.mxu0 %v1980
    %2130 = vmatpush.bf16.msra.mxu0 %v1970
    %2131 = vmatpush.bf16.msra.mxu0 %v1960
    %2132 = vmatpush.bf16.msra.mxu0 %v1950
    %2133 = vmatpush.bf16.msra.mxu0 %v1940
    %2134 = vmatpush.bf16.msra.mxu0 %v1930
    %2135 = vmatpush.bf16.msra.mxu0 %v1920
    %2136 = vmatmul.bf16.gmra.mxu0 %v1571
    %v2137 = vpop.f32.mrf.mxu0
    %v2138 = vadd.f32 %v1660, %v2137
    %v2139 = vpop.f32.mrf.mxu0
    %2140 = vdwg.mxu0
    %2141 = vmatpush.bf16.msra.mxu0 %v1991
    %2142 = vmatpush.bf16.msra.mxu0 %v1981
    %2143 = vmatpush.bf16.msra.mxu0 %v1971
    %2144 = vmatpush.bf16.msra.mxu0 %v1961
    %2145 = vmatpush.bf16.msra.mxu0 %v1951
    %2146 = vmatpush.bf16.msra.mxu0 %v1941
    %2147 = vmatpush.bf16.msra.mxu0 %v1931
    %2148 = vmatpush.bf16.msra.mxu0 %v1921
    %2149 = vmatmul.bf16.gmra.mxu0 %v1571
    %v2150 = vpop.f32.mrf.mxu0
    %v2151 = vadd.f32 %v1661, %v2150
    %v2152 = vpop.f32.mrf.mxu0
    %2153 = vdwg.mxu0
    %2154 = vmatpush.bf16.msra.mxu0 %v1992
    %2155 = vmatpush.bf16.msra.mxu0 %v1982
    %2156 = vmatpush.bf16.msra.mxu0 %v1972
    %2157 = vmatpush.bf16.msra.mxu0 %v1962
    %2158 = vmatpush.bf16.msra.mxu0 %v1952
    %2159 = vmatpush.bf16.msra.mxu0 %v1942
    %2160 = vmatpush.bf16.msra.mxu0 %v1932
    %2161 = vmatpush.bf16.msra.mxu0 %v1922
    %2162 = vmatmul.bf16.gmra.mxu0 %v1571
    %v2163 = vpop.f32.mrf.mxu0
    %v2164 = vadd.f32 %v1662, %v2163
    %v2165 = vpop.f32.mrf.mxu0
    %2166 = vdwg.mxu0
    %2167 = vmatpush.bf16.msra.mxu0 %v1993
    %2168 = vmatpush.bf16.msra.mxu0 %v1983
    %2169 = vmatpush.bf16.msra.mxu0 %v1973
    %2170 = vmatpush.bf16.msra.mxu0 %v1963
    %2171 = vmatpush.bf16.msra.mxu0 %v1953
    %2172 = vmatpush.bf16.msra.mxu0 %v1943
    %2173 = vmatpush.bf16.msra.mxu0 %v1933
    %2174 = vmatpush.bf16.msra.mxu0 %v1923
    %2175 = vmatmul.bf16.gmra.mxu0 %v1571
    %v2176 = vpop.f32.mrf.mxu0
    %v2177 = vadd.f32 %v1663, %v2176
    %v2178 = vpop.f32.mrf.mxu0
    %2179 = vdwg.mxu0
    %2180 = vmatpush.bf16.msra.mxu0 %v1994
    %2181 = vmatpush.bf16.msra.mxu0 %v1984
    %2182 = vmatpush.bf16.msra.mxu0 %v1974
    %2183 = vmatpush.bf16.msra.mxu0 %v1964
    %2184 = vmatpush.bf16.msra.mxu0 %v1954
    %2185 = vmatpush.bf16.msra.mxu0 %v1944
    %2186 = vmatpush.bf16.msra.mxu0 %v1934
    %2187 = vmatpush.bf16.msra.mxu0 %v1924
    %2188 = vmatmul.bf16.gmra.mxu0 %v1571
    %v2189 = vpop.f32.mrf.mxu0
    %v2190 = vadd.f32 %v1664, %v2189
    %v2191 = vpop.f32.mrf.mxu0
    %2192 = vdwg.mxu0
    %2193 = vmatpush.bf16.msra.mxu0 %v1995
    %2194 = vmatpush.bf16.msra.mxu0 %v1985
    %2195 = vmatpush.bf16.msra.mxu0 %v1975
    %2196 = vmatpush.bf16.msra.mxu0 %v1965
    %2197 = vmatpush.bf16.msra.mxu0 %v1955
    %2198 = vmatpush.bf16.msra.mxu0 %v1945
    %2199 = vmatpush.bf16.msra.mxu0 %v1935
    %2200 = vmatpush.bf16.msra.mxu0 %v1925
    %2201 = vmatmul.bf16.gmra.mxu0 %v1571
    %v2202 = vpop.f32.mrf.mxu0
    %v2203 = vadd.f32 %v1665, %v2202
    %v2204 = vpop.f32.mrf.mxu0
    %2205 = vdwg.mxu0
    %v2206 = vsub.f32 0.0, %v2086
    %v2207 = vsub.f32 0.0, %v2099
    %v2208 = vsub.f32 0.0, %v2112
    %v2209 = vsub.f32 0.0, %v2125
    %v2210 = vsub.f32 0.0, %v2138
    %v2211 = vsub.f32 0.0, %v2151
    %v2212 = vsub.f32 0.0, %v2164
    %v2213 = vsub.f32 0.0, %v2177
    %v2214 = vsub.f32 0.0, %v2190
    %v2215 = vsub.f32 0.0, %v2203
    %v2216 = vmul.f32 %v2206, 1.442695
    %v2217 = vpow.pop %v2216
    %v2218 = vmul.f32 %v2207, 1.442695
    %v2219 = vpow.pop %v2218
    %v2220 = vmul.f32 %v2208, 1.442695
    %v2221 = vpow.pop %v2220
    %v2222 = vmul.f32 %v2209, 1.442695
    %v2223 = vpow.pop %v2222
    %v2224 = vmul.f32 %v2210, 1.442695
    %v2225 = vpow.pop %v2224
    %v2226 = vmul.f32 %v2211, 1.442695
    %v2227 = vpow.pop %v2226
    %v2228 = vmul.f32 %v2212, 1.442695
    %v2229 = vpow.pop %v2228
    %v2230 = vmul.f32 %v2213, 1.442695
    %v2231 = vpow.pop %v2230
    %v2232 = vmul.f32 %v2214, 1.442695
    %v2233 = vpow.pop %v2232
    %v2234 = vmul.f32 %v2215, 1.442695
    %v2235 = vpow.pop %v2234
    %v2236 = vadd.f32 %v2217, 1.0
    %v2237 = vadd.f32 %v2219, 1.0
    %v2238 = vadd.f32 %v2221, 1.0
    %v2239 = vadd.f32 %v2223, 1.0
    %v2240 = vadd.f32 %v2225, 1.0
    %v2241 = vadd.f32 %v2227, 1.0
    %v2242 = vadd.f32 %v2229, 1.0
    %v2243 = vadd.f32 %v2231, 1.0
    %v2244 = vadd.f32 %v2233, 1.0
    %v2245 = vadd.f32 %v2235, 1.0
    %v2246 = vrcp.pop %v2236
    %v2247 = vrcp.pop %v2237
    %v2248 = vrcp.pop %v2238
    %v2249 = vrcp.pop %v2239
    %v2250 = vrcp.pop %v2240
    %v2251 = vrcp.pop %v2241
    %v2252 = vrcp.pop %v2242
    %v2253 = vrcp.pop %v2243
    %v2254 = vrcp.pop %v2244
    %v2255 = vrcp.pop %v2245
    %v2266 = vrot.slane %v2247, 7
    %v2267 = vrot.slane %v2248, 6
    %v2268 = vrot.slane %v2249, 5
    %v2269 = vrot.slane %v2250, 4
    %v2270 = vrot.slane %v2251, 3
    %v2271 = vrot.slane %v2252, 2
    %v2272 = vrot.slane %v2253, 1
    %v2273 = vrot.slane %v2255, 7
    %vm2274 = vcmask 1040384
    %v2275 = vsel %vm2274, %v2246, %v2266
    %vm2276 = vcmask 1042434
    %v2277 = vsel %vm2276, %v2267, %v2268
    %vm2278 = vcmask 1041408
    %v2279 = vsel %vm2278, %v2275, %v2277
    %vm2280 = vcmask 1044484
    %v2281 = vsel %vm2280, %v2269, %v2270
    %vm2282 = vcmask 1046534
    %v2283 = vsel %vm2282, %v2271, %v2272
    %vm2284 = vcmask 1045508
    %v2285 = vsel %vm2284, %v2281, %v2283
    %vm2286 = vcmask 1043456
    %v2287 = vsel %vm2286, %v2279, %v2285
    %v2288 = vsel %vm2274, %v2254, %v2273
    %v2289 = vsel %vm929, %v2246, %v2266
    %vm2290 = vcmask 1043459
    %v2291 = vsel %vm2290, %v2267, %v2268
    %vm2292 = vcmask 1042433
    %v2293 = vsel %vm2292, %v2289, %v2291
    %vm2294 = vcmask 1045509
    %v2295 = vsel %vm2294, %v2269, %v2270
    %vm2296 = vcmask 1046528
    %v2297 = vsel %vm2296, %v2272, %v2271
    %vm2298 = vcmask 1046533
    %v2299 = vsel %vm2298, %v2295, %v2297
    %vm2300 = vcmask 1044481
    %v2301 = vsel %vm2300, %v2293, %v2299
    %v2302 = vrot.slane %v2301, 1
    %v2303 = vsel %vm929, %v2254, %v2273
    %v2304 = vrot.slane %v2303, 1
    %v2305 = vperm.slane %v2287, 0
    %v2306 = vperm.slane %v2287, 1
    %v2307 = vperm.slane %v2287, 2
    %v2308 = vperm.slane %v2287, 3
    %v2309 = vperm.slane %v2287, 4
    %v2310 = vperm.slane %v2287, 5
    %v2311 = vperm.slane %v2287, 6
    %v2312 = vperm.slane %v2287, 7
    %v2313 = vperm.slane %v2288, 0
    %v2314 = vperm.slane %v2288, 1
    %v2315 = vperm.slane %v2302, 0
    %v2316 = vperm.slane %v2302, 1
    %v2317 = vperm.slane %v2302, 2
    %v2318 = vperm.slane %v2302, 3
    %v2319 = vperm.slane %v2302, 4
    %v2320 = vperm.slane %v2302, 5
    %v2321 = vperm.slane %v2302, 6
    %v2322 = vperm.slane %v2302, 7
    %v2323 = vperm.slane %v2304, 0
    %v2324 = vperm.slane %v2304, 1
    %v2345 = vmul.f32 %v265, %v2305
    %v2346 = vmul.f32 %v266, %v2306
    %v2347 = vmul.f32 %v267, %v2307
    %v2348 = vmul.f32 %v268, %v2308
    %v2349 = vmul.f32 %v269, %v2309
    %v2350 = vmul.f32 %v270, %v2310
    %v2351 = vmul.f32 %v271, %v2311
    %v2352 = vmul.f32 %v272, %v2312
    %v2353 = vmul.f32 %v273, %v2313
    %v2354 = vmul.f32 %v274, %v2314
    %v2355 = vmul.f32 %v275, %v2305
    %v2356 = vmul.f32 %v276, %v2306
    %v2357 = vmul.f32 %v277, %v2307
    %v2358 = vmul.f32 %v278, %v2308
    %v2359 = vmul.f32 %v279, %v2309
    %v2360 = vmul.f32 %v280, %v2310
    %v2361 = vmul.f32 %v281, %v2311
    %v2362 = vmul.f32 %v282, %v2312
    %v2363 = vmul.f32 %v283, %v2313
    %v2364 = vmul.f32 %v284, %v2314
    %v2365 = vmul.f32 %v285, %v2305
    %v2366 = vmul.f32 %v286, %v2306
    %v2367 = vmul.f32 %v287, %v2307
    %v2368 = vmul.f32 %v288, %v2308
    %v2369 = vmul.f32 %v289, %v2309
    %v2370 = vmul.f32 %v290, %v2310
    %v2371 = vmul.f32 %v291, %v2311
    %v2372 = vmul.f32 %v292, %v2312
    %v2373 = vmul.f32 %v293, %v2313
    %v2374 = vmul.f32 %v294, %v2314
    %v2375 = vmul.f32 %v295, %v2305
    %v2376 = vmul.f32 %v296, %v2306
    %v2377 = vmul.f32 %v297, %v2307
    %v2378 = vmul.f32 %v298, %v2308
    %v2379 = vmul.f32 %v299, %v2309
    %v2380 = vmul.f32 %v300, %v2310
    %v2381 = vmul.f32 %v301, %v2311
    %v2382 = vmul.f32 %v302, %v2312
    %v2383 = vmul.f32 %v303, %v2313
    %v2384 = vmul.f32 %v304, %v2314
    %v2385 = vmul.f32 %v305, %v2305
    %v2386 = vmul.f32 %v306, %v2306
    %v2387 = vmul.f32 %v307, %v2307
    %v2388 = vmul.f32 %v308, %v2308
    %v2389 = vmul.f32 %v309, %v2309
    %v2390 = vmul.f32 %v310, %v2310
    %v2391 = vmul.f32 %v311, %v2311
    %v2392 = vmul.f32 %v312, %v2312
    %v2393 = vmul.f32 %v313, %v2313
    %v2394 = vmul.f32 %v314, %v2314
    %v2395 = vmul.f32 %v315, %v2305
    %v2396 = vmul.f32 %v316, %v2306
    %v2397 = vmul.f32 %v317, %v2307
    %v2398 = vmul.f32 %v318, %v2308
    %v2399 = vmul.f32 %v319, %v2309
    %v2400 = vmul.f32 %v320, %v2310
    %v2401 = vmul.f32 %v321, %v2311
    %v2402 = vmul.f32 %v322, %v2312
    %v2403 = vmul.f32 %v323, %v2313
    %v2404 = vmul.f32 %v324, %v2314
    %v2405 = vmul.f32 %v325, %v2305
    %v2406 = vmul.f32 %v326, %v2306
    %v2407 = vmul.f32 %v327, %v2307
    %v2408 = vmul.f32 %v328, %v2308
    %v2409 = vmul.f32 %v329, %v2309
    %v2410 = vmul.f32 %v330, %v2310
    %v2411 = vmul.f32 %v331, %v2311
    %v2412 = vmul.f32 %v332, %v2312
    %v2413 = vmul.f32 %v333, %v2313
    %v2414 = vmul.f32 %v334, %v2314
    %v2415 = vmul.f32 %v335, %v2305
    %v2416 = vmul.f32 %v336, %v2306
    %v2417 = vmul.f32 %v337, %v2307
    %v2418 = vmul.f32 %v338, %v2308
    %v2419 = vmul.f32 %v339, %v2309
    %v2420 = vmul.f32 %v340, %v2310
    %v2421 = vmul.f32 %v341, %v2311
    %v2422 = vmul.f32 %v342, %v2312
    %v2423 = vmul.f32 %v343, %v2313
    %v2424 = vmul.f32 %v344, %v2314
    %v2425 = vmul.f32 %v345, %v2315
    %v2426 = vmul.f32 %v346, %v2316
    %v2427 = vmul.f32 %v347, %v2317
    %v2428 = vmul.f32 %v348, %v2318
    %v2429 = vmul.f32 %v349, %v2319
    %v2430 = vmul.f32 %v350, %v2320
    %v2431 = vmul.f32 %v351, %v2321
    %v2432 = vmul.f32 %v352, %v2322
    %v2433 = vmul.f32 %v353, %v2323
    %v2434 = vmul.f32 %v354, %v2324
    %v2435 = vmul.f32 %v355, %v2315
    %v2436 = vmul.f32 %v356, %v2316
    %v2437 = vmul.f32 %v357, %v2317
    %v2438 = vmul.f32 %v358, %v2318
    %v2439 = vmul.f32 %v359, %v2319
    %v2440 = vmul.f32 %v360, %v2320
    %v2441 = vmul.f32 %v361, %v2321
    %v2442 = vmul.f32 %v362, %v2322
    %v2443 = vmul.f32 %v363, %v2323
    %v2444 = vmul.f32 %v364, %v2324
    %v2445 = vmul.f32 %v365, %v2315
    %v2446 = vmul.f32 %v366, %v2316
    %v2447 = vmul.f32 %v367, %v2317
    %v2448 = vmul.f32 %v368, %v2318
    %v2449 = vmul.f32 %v369, %v2319
    %v2450 = vmul.f32 %v370, %v2320
    %v2451 = vmul.f32 %v371, %v2321
    %v2452 = vmul.f32 %v372, %v2322
    %v2453 = vmul.f32 %v373, %v2323
    %v2454 = vmul.f32 %v374, %v2324
    %v2455 = vmul.f32 %v375, %v2315
    %v2456 = vmul.f32 %v376, %v2316
    %v2457 = vmul.f32 %v377, %v2317
    %v2458 = vmul.f32 %v378, %v2318
    %v2459 = vmul.f32 %v379, %v2319
    %v2460 = vmul.f32 %v380, %v2320
    %v2461 = vmul.f32 %v381, %v2321
    %v2462 = vmul.f32 %v382, %v2322
    %v2463 = vmul.f32 %v383, %v2323
    %v2464 = vmul.f32 %v384, %v2324
    %v2465 = vmul.f32 %v385, %v2315
    %v2466 = vmul.f32 %v386, %v2316
    %v2467 = vmul.f32 %v387, %v2317
    %v2468 = vmul.f32 %v388, %v2318
    %v2469 = vmul.f32 %v389, %v2319
    %v2470 = vmul.f32 %v390, %v2320
    %v2471 = vmul.f32 %v391, %v2321
    %v2472 = vmul.f32 %v392, %v2322
    %v2473 = vmul.f32 %v393, %v2323
    %v2474 = vmul.f32 %v394, %v2324
    %v2475 = vmul.f32 %v395, %v2315
    %v2476 = vmul.f32 %v396, %v2316
    %v2477 = vmul.f32 %v397, %v2317
    %v2478 = vmul.f32 %v398, %v2318
    %v2479 = vmul.f32 %v399, %v2319
    %v2480 = vmul.f32 %v400, %v2320
    %v2481 = vmul.f32 %v401, %v2321
    %v2482 = vmul.f32 %v402, %v2322
    %v2483 = vmul.f32 %v403, %v2323
    %v2484 = vmul.f32 %v404, %v2324
    %v2485 = vmul.f32 %v405, %v2315
    %v2486 = vmul.f32 %v406, %v2316
    %v2487 = vmul.f32 %v407, %v2317
    %v2488 = vmul.f32 %v408, %v2318
    %v2489 = vmul.f32 %v409, %v2319
    %v2490 = vmul.f32 %v410, %v2320
    %v2491 = vmul.f32 %v411, %v2321
    %v2492 = vmul.f32 %v412, %v2322
    %v2493 = vmul.f32 %v413, %v2323
    %v2494 = vmul.f32 %v414, %v2324
    %v2495 = vmul.f32 %v415, %v2315
    %v2496 = vmul.f32 %v416, %v2316
    %v2497 = vmul.f32 %v417, %v2317
    %v2498 = vmul.f32 %v418, %v2318
    %v2499 = vmul.f32 %v419, %v2319
    %v2500 = vmul.f32 %v420, %v2320
    %v2501 = vmul.f32 %v421, %v2321
    %v2502 = vmul.f32 %v422, %v2322
    %v2503 = vmul.f32 %v423, %v2323
    %v2504 = vmul.f32 %v424, %v2324
    %v2505 = vmax.f32 %v2345, %v2346
    %v2506 = vmax.f32 %v2505, %v2347
    %v2507 = vmax.f32 %v2506, %v2348
    %v2508 = vmax.f32 %v2507, %v2349
    %v2509 = vmax.f32 %v2508, %v2350
    %v2510 = vmax.f32 %v2509, %v2351
    %v2511 = vmax.f32 %v2510, %v2352
    %v2512 = vmax.f32 %v2511, %v2353
    %v2513 = vmax.f32 %v2512, %v2354
    %2514 = vmax.xlane.f32.xlu0 %v2513
    %v2515 = vpop.xlane.xlu0 %2514
    %v2516 = vmax.f32 %v2355, %v2356
    %v2517 = vmax.f32 %v2516, %v2357
    %v2518 = vmax.f32 %v2517, %v2358
    %v2519 = vmax.f32 %v2518, %v2359
    %v2520 = vmax.f32 %v2519, %v2360
    %v2521 = vmax.f32 %v2520, %v2361
    %v2522 = vmax.f32 %v2521, %v2362
    %v2523 = vmax.f32 %v2522, %v2363
    %v2524 = vmax.f32 %v2523, %v2364
    %2525 = vmax.xlane.f32.xlu0 %v2524
    %v2526 = vpop.xlane.xlu0 %2525
    %v2527 = vmax.f32 %v2365, %v2366
    %v2528 = vmax.f32 %v2527, %v2367
    %v2529 = vmax.f32 %v2528, %v2368
    %v2530 = vmax.f32 %v2529, %v2369
    %v2531 = vmax.f32 %v2530, %v2370
    %v2532 = vmax.f32 %v2531, %v2371
    %v2533 = vmax.f32 %v2532, %v2372
    %v2534 = vmax.f32 %v2533, %v2373
    %v2535 = vmax.f32 %v2534, %v2374
    %2536 = vmax.xlane.f32.xlu0 %v2535
    %v2537 = vpop.xlane.xlu0 %2536
    %v2538 = vmax.f32 %v2375, %v2376
    %v2539 = vmax.f32 %v2538, %v2377
    %v2540 = vmax.f32 %v2539, %v2378
    %v2541 = vmax.f32 %v2540, %v2379
    %v2542 = vmax.f32 %v2541, %v2380
    %v2543 = vmax.f32 %v2542, %v2381
    %v2544 = vmax.f32 %v2543, %v2382
    %v2545 = vmax.f32 %v2544, %v2383
    %v2546 = vmax.f32 %v2545, %v2384
    %2547 = vmax.xlane.f32.xlu0 %v2546
    %v2548 = vpop.xlane.xlu0 %2547
    %v2549 = vmax.f32 %v2385, %v2386
    %v2550 = vmax.f32 %v2549, %v2387
    %v2551 = vmax.f32 %v2550, %v2388
    %v2552 = vmax.f32 %v2551, %v2389
    %v2553 = vmax.f32 %v2552, %v2390
    %v2554 = vmax.f32 %v2553, %v2391
    %v2555 = vmax.f32 %v2554, %v2392
    %v2556 = vmax.f32 %v2555, %v2393
    %v2557 = vmax.f32 %v2556, %v2394
    %2558 = vmax.xlane.f32.xlu0 %v2557
    %v2559 = vpop.xlane.xlu0 %2558
    %v2560 = vmax.f32 %v2395, %v2396
    %v2561 = vmax.f32 %v2560, %v2397
    %v2562 = vmax.f32 %v2561, %v2398
    %v2563 = vmax.f32 %v2562, %v2399
    %v2564 = vmax.f32 %v2563, %v2400
    %v2565 = vmax.f32 %v2564, %v2401
    %v2566 = vmax.f32 %v2565, %v2402
    %v2567 = vmax.f32 %v2566, %v2403
    %v2568 = vmax.f32 %v2567, %v2404
    %2569 = vmax.xlane.f32.xlu0 %v2568
    %v2570 = vpop.xlane.xlu0 %2569
    %v2571 = vmax.f32 %v2405, %v2406
    %v2572 = vmax.f32 %v2571, %v2407
    %v2573 = vmax.f32 %v2572, %v2408
    %v2574 = vmax.f32 %v2573, %v2409
    %v2575 = vmax.f32 %v2574, %v2410
    %v2576 = vmax.f32 %v2575, %v2411
    %v2577 = vmax.f32 %v2576, %v2412
    %v2578 = vmax.f32 %v2577, %v2413
    %v2579 = vmax.f32 %v2578, %v2414
    %2580 = vmax.xlane.f32.xlu0 %v2579
    %v2581 = vpop.xlane.xlu0 %2580
    %v2582 = vmax.f32 %v2415, %v2416
    %v2583 = vmax.f32 %v2582, %v2417
    %v2584 = vmax.f32 %v2583, %v2418
    %v2585 = vmax.f32 %v2584, %v2419
    %v2586 = vmax.f32 %v2585, %v2420
    %v2587 = vmax.f32 %v2586, %v2421
    %v2588 = vmax.f32 %v2587, %v2422
    %v2589 = vmax.f32 %v2588, %v2423
    %v2590 = vmax.f32 %v2589, %v2424
    %2591 = vmax.xlane.f32.xlu0 %v2590
    %v2592 = vpop.xlane.xlu0 %2591
    %v2593 = vmax.f32 %v2425, %v2426
    %v2594 = vmax.f32 %v2593, %v2427
    %v2595 = vmax.f32 %v2594, %v2428
    %v2596 = vmax.f32 %v2595, %v2429
    %v2597 = vmax.f32 %v2596, %v2430
    %v2598 = vmax.f32 %v2597, %v2431
    %v2599 = vmax.f32 %v2598, %v2432
    %v2600 = vmax.f32 %v2599, %v2433
    %v2601 = vmax.f32 %v2600, %v2434
    %2602 = vmax.xlane.f32.xlu0 %v2601
    %v2603 = vpop.xlane.xlu0 %2602
    %v2604 = vmax.f32 %v2435, %v2436
    %v2605 = vmax.f32 %v2604, %v2437
    %v2606 = vmax.f32 %v2605, %v2438
    %v2607 = vmax.f32 %v2606, %v2439
    %v2608 = vmax.f32 %v2607, %v2440
    %v2609 = vmax.f32 %v2608, %v2441
    %v2610 = vmax.f32 %v2609, %v2442
    %v2611 = vmax.f32 %v2610, %v2443
    %v2612 = vmax.f32 %v2611, %v2444
    %2613 = vmax.xlane.f32.xlu0 %v2612
    %v2614 = vpop.xlane.xlu0 %2613
    %v2615 = vmax.f32 %v2445, %v2446
    %v2616 = vmax.f32 %v2615, %v2447
    %v2617 = vmax.f32 %v2616, %v2448
    %v2618 = vmax.f32 %v2617, %v2449
    %v2619 = vmax.f32 %v2618, %v2450
    %v2620 = vmax.f32 %v2619, %v2451
    %v2621 = vmax.f32 %v2620, %v2452
    %v2622 = vmax.f32 %v2621, %v2453
    %v2623 = vmax.f32 %v2622, %v2454
    %2624 = vmax.xlane.f32.xlu0 %v2623
    %v2625 = vpop.xlane.xlu0 %2624
    %v2626 = vmax.f32 %v2455, %v2456
    %v2627 = vmax.f32 %v2626, %v2457
    %v2628 = vmax.f32 %v2627, %v2458
    %v2629 = vmax.f32 %v2628, %v2459
    %v2630 = vmax.f32 %v2629, %v2460
    %v2631 = vmax.f32 %v2630, %v2461
    %v2632 = vmax.f32 %v2631, %v2462
    %v2633 = vmax.f32 %v2632, %v2463
    %v2634 = vmax.f32 %v2633, %v2464
    %2635 = vmax.xlane.f32.xlu0 %v2634
    %v2636 = vpop.xlane.xlu0 %2635
    %v2637 = vmax.f32 %v2465, %v2466
    %v2638 = vmax.f32 %v2637, %v2467
    %v2639 = vmax.f32 %v2638, %v2468
    %v2640 = vmax.f32 %v2639, %v2469
    %v2641 = vmax.f32 %v2640, %v2470
    %v2642 = vmax.f32 %v2641, %v2471
    %v2643 = vmax.f32 %v2642, %v2472
    %v2644 = vmax.f32 %v2643, %v2473
    %v2645 = vmax.f32 %v2644, %v2474
    %2646 = vmax.xlane.f32.xlu0 %v2645
    %v2647 = vpop.xlane.xlu0 %2646
    %v2648 = vmax.f32 %v2475, %v2476
    %v2649 = vmax.f32 %v2648, %v2477
    %v2650 = vmax.f32 %v2649, %v2478
    %v2651 = vmax.f32 %v2650, %v2479
    %v2652 = vmax.f32 %v2651, %v2480
    %v2653 = vmax.f32 %v2652, %v2481
    %v2654 = vmax.f32 %v2653, %v2482
    %v2655 = vmax.f32 %v2654, %v2483
    %v2656 = vmax.f32 %v2655, %v2484
    %2657 = vmax.xlane.f32.xlu0 %v2656
    %v2658 = vpop.xlane.xlu0 %2657
    %v2659 = vmax.f32 %v2485, %v2486
    %v2660 = vmax.f32 %v2659, %v2487
    %v2661 = vmax.f32 %v2660, %v2488
    %v2662 = vmax.f32 %v2661, %v2489
    %v2663 = vmax.f32 %v2662, %v2490
    %v2664 = vmax.f32 %v2663, %v2491
    %v2665 = vmax.f32 %v2664, %v2492
    %v2666 = vmax.f32 %v2665, %v2493
    %v2667 = vmax.f32 %v2666, %v2494
    %2668 = vmax.xlane.f32.xlu0 %v2667
    %v2669 = vpop.xlane.xlu0 %2668
    %v2670 = vmax.f32 %v2495, %v2496
    %v2671 = vmax.f32 %v2670, %v2497
    %v2672 = vmax.f32 %v2671, %v2498
    %v2673 = vmax.f32 %v2672, %v2499
    %v2674 = vmax.f32 %v2673, %v2500
    %v2675 = vmax.f32 %v2674, %v2501
    %v2676 = vmax.f32 %v2675, %v2502
    %v2677 = vmax.f32 %v2676, %v2503
    %v2678 = vmax.f32 %v2677, %v2504
    %2679 = vmax.xlane.f32.xlu0 %v2678
    %v2680 = vpop.xlane.xlu0 %2679
    %v2681 = vadd.f32 %v2345, %v2346
    %v2682 = vadd.f32 %v2681, %v2347
    %v2683 = vadd.f32 %v2682, %v2348
    %v2684 = vadd.f32 %v2683, %v2349
    %v2685 = vadd.f32 %v2684, %v2350
    %v2686 = vadd.f32 %v2685, %v2351
    %v2687 = vadd.f32 %v2686, %v2352
    %v2688 = vadd.f32 %v2687, %v2353
    %v2689 = vadd.f32 %v2688, %v2354
    %2690 = vadd.xlane.f32.xlu0 %v2689
    %v2691 = vpop.xlane.xlu0 %2690
    %v2692 = vadd.f32 %v2355, %v2356
    %v2693 = vadd.f32 %v2692, %v2357
    %v2694 = vadd.f32 %v2693, %v2358
    %v2695 = vadd.f32 %v2694, %v2359
    %v2696 = vadd.f32 %v2695, %v2360
    %v2697 = vadd.f32 %v2696, %v2361
    %v2698 = vadd.f32 %v2697, %v2362
    %v2699 = vadd.f32 %v2698, %v2363
    %v2700 = vadd.f32 %v2699, %v2364
    %2701 = vadd.xlane.f32.xlu0 %v2700
    %v2702 = vpop.xlane.xlu0 %2701
    %v2703 = vadd.f32 %v2365, %v2366
    %v2704 = vadd.f32 %v2703, %v2367
    %v2705 = vadd.f32 %v2704, %v2368
    %v2706 = vadd.f32 %v2705, %v2369
    %v2707 = vadd.f32 %v2706, %v2370
    %v2708 = vadd.f32 %v2707, %v2371
    %v2709 = vadd.f32 %v2708, %v2372
    %v2710 = vadd.f32 %v2709, %v2373
    %v2711 = vadd.f32 %v2710, %v2374
    %2712 = vadd.xlane.f32.xlu0 %v2711
    %v2713 = vpop.xlane.xlu0 %2712
    %v2714 = vadd.f32 %v2375, %v2376
    %v2715 = vadd.f32 %v2714, %v2377
    %v2716 = vadd.f32 %v2715, %v2378
    %v2717 = vadd.f32 %v2716, %v2379
    %v2718 = vadd.f32 %v2717, %v2380
    %v2719 = vadd.f32 %v2718, %v2381
    %v2720 = vadd.f32 %v2719, %v2382
    %v2721 = vadd.f32 %v2720, %v2383
    %v2722 = vadd.f32 %v2721, %v2384
    %2723 = vadd.xlane.f32.xlu0 %v2722
    %v2724 = vpop.xlane.xlu0 %2723
    %v2725 = vadd.f32 %v2385, %v2386
    %v2726 = vadd.f32 %v2725, %v2387
    %v2727 = vadd.f32 %v2726, %v2388
    %v2728 = vadd.f32 %v2727, %v2389
    %v2729 = vadd.f32 %v2728, %v2390
    %v2730 = vadd.f32 %v2729, %v2391
    %v2731 = vadd.f32 %v2730, %v2392
    %v2732 = vadd.f32 %v2731, %v2393
    %v2733 = vadd.f32 %v2732, %v2394
    %2734 = vadd.xlane.f32.xlu0 %v2733
    %v2735 = vpop.xlane.xlu0 %2734
    %v2736 = vadd.f32 %v2395, %v2396
    %v2737 = vadd.f32 %v2736, %v2397
    %v2738 = vadd.f32 %v2737, %v2398
    %v2739 = vadd.f32 %v2738, %v2399
    %v2740 = vadd.f32 %v2739, %v2400
    %v2741 = vadd.f32 %v2740, %v2401
    %v2742 = vadd.f32 %v2741, %v2402
    %v2743 = vadd.f32 %v2742, %v2403
    %v2744 = vadd.f32 %v2743, %v2404
    %2745 = vadd.xlane.f32.xlu0 %v2744
    %v2746 = vpop.xlane.xlu0 %2745
    %v2747 = vadd.f32 %v2405, %v2406
    %v2748 = vadd.f32 %v2747, %v2407
    %v2749 = vadd.f32 %v2748, %v2408
    %v2750 = vadd.f32 %v2749, %v2409
    %v2751 = vadd.f32 %v2750, %v2410
    %v2752 = vadd.f32 %v2751, %v2411
    %v2753 = vadd.f32 %v2752, %v2412
    %v2754 = vadd.f32 %v2753, %v2413
    %v2755 = vadd.f32 %v2754, %v2414
    %2756 = vadd.xlane.f32.xlu0 %v2755
    %v2757 = vpop.xlane.xlu0 %2756
    %v2758 = vadd.f32 %v2415, %v2416
    %v2759 = vadd.f32 %v2758, %v2417
    %v2760 = vadd.f32 %v2759, %v2418
    %v2761 = vadd.f32 %v2760, %v2419
    %v2762 = vadd.f32 %v2761, %v2420
    %v2763 = vadd.f32 %v2762, %v2421
    %v2764 = vadd.f32 %v2763, %v2422
    %v2765 = vadd.f32 %v2764, %v2423
    %v2766 = vadd.f32 %v2765, %v2424
    %2767 = vadd.xlane.f32.xlu0 %v2766
    %v2768 = vpop.xlane.xlu0 %2767
    %v2769 = vadd.f32 %v2425, %v2426
    %v2770 = vadd.f32 %v2769, %v2427
    %v2771 = vadd.f32 %v2770, %v2428
    %v2772 = vadd.f32 %v2771, %v2429
    %v2773 = vadd.f32 %v2772, %v2430
    %v2774 = vadd.f32 %v2773, %v2431
    %v2775 = vadd.f32 %v2774, %v2432
    %v2776 = vadd.f32 %v2775, %v2433
    %v2777 = vadd.f32 %v2776, %v2434
    %2778 = vadd.xlane.f32.xlu0 %v2777
    %v2779 = vpop.xlane.xlu0 %2778
    %v2780 = vadd.f32 %v2435, %v2436
    %v2781 = vadd.f32 %v2780, %v2437
    %v2782 = vadd.f32 %v2781, %v2438
    %v2783 = vadd.f32 %v2782, %v2439
    %v2784 = vadd.f32 %v2783, %v2440
    %v2785 = vadd.f32 %v2784, %v2441
    %v2786 = vadd.f32 %v2785, %v2442
    %v2787 = vadd.f32 %v2786, %v2443
    %v2788 = vadd.f32 %v2787, %v2444
    %2789 = vadd.xlane.f32.xlu0 %v2788
    %v2790 = vpop.xlane.xlu0 %2789
    %v2791 = vadd.f32 %v2445, %v2446
    %v2792 = vadd.f32 %v2791, %v2447
    %v2793 = vadd.f32 %v2792, %v2448
    %v2794 = vadd.f32 %v2793, %v2449
    %v2795 = vadd.f32 %v2794, %v2450
    %v2796 = vadd.f32 %v2795, %v2451
    %v2797 = vadd.f32 %v2796, %v2452
    %v2798 = vadd.f32 %v2797, %v2453
    %v2799 = vadd.f32 %v2798, %v2454
    %2800 = vadd.xlane.f32.xlu0 %v2799
    %v2801 = vpop.xlane.xlu0 %2800
    %v2802 = vadd.f32 %v2455, %v2456
    %v2803 = vadd.f32 %v2802, %v2457
    %v2804 = vadd.f32 %v2803, %v2458
    %v2805 = vadd.f32 %v2804, %v2459
    %v2806 = vadd.f32 %v2805, %v2460
    %v2807 = vadd.f32 %v2806, %v2461
    %v2808 = vadd.f32 %v2807, %v2462
    %v2809 = vadd.f32 %v2808, %v2463
    %v2810 = vadd.f32 %v2809, %v2464
    %2811 = vadd.xlane.f32.xlu0 %v2810
    %v2812 = vpop.xlane.xlu0 %2811
    %v2813 = vadd.f32 %v2465, %v2466
    %v2814 = vadd.f32 %v2813, %v2467
    %v2815 = vadd.f32 %v2814, %v2468
    %v2816 = vadd.f32 %v2815, %v2469
    %v2817 = vadd.f32 %v2816, %v2470
    %v2818 = vadd.f32 %v2817, %v2471
    %v2819 = vadd.f32 %v2818, %v2472
    %v2820 = vadd.f32 %v2819, %v2473
    %v2821 = vadd.f32 %v2820, %v2474
    %2822 = vadd.xlane.f32.xlu0 %v2821
    %v2823 = vpop.xlane.xlu0 %2822
    %v2824 = vadd.f32 %v2475, %v2476
    %v2825 = vadd.f32 %v2824, %v2477
    %v2826 = vadd.f32 %v2825, %v2478
    %v2827 = vadd.f32 %v2826, %v2479
    %v2828 = vadd.f32 %v2827, %v2480
    %v2829 = vadd.f32 %v2828, %v2481
    %v2830 = vadd.f32 %v2829, %v2482
    %v2831 = vadd.f32 %v2830, %v2483
    %v2832 = vadd.f32 %v2831, %v2484
    %2833 = vadd.xlane.f32.xlu0 %v2832
    %v2834 = vpop.xlane.xlu0 %2833
    %v2835 = vadd.f32 %v2485, %v2486
    %v2836 = vadd.f32 %v2835, %v2487
    %v2837 = vadd.f32 %v2836, %v2488
    %v2838 = vadd.f32 %v2837, %v2489
    %v2839 = vadd.f32 %v2838, %v2490
    %v2840 = vadd.f32 %v2839, %v2491
    %v2841 = vadd.f32 %v2840, %v2492
    %v2842 = vadd.f32 %v2841, %v2493
    %v2843 = vadd.f32 %v2842, %v2494
    %2844 = vadd.xlane.f32.xlu0 %v2843
    %v2845 = vpop.xlane.xlu0 %2844
    %v2846 = vadd.f32 %v2495, %v2496
    %v2847 = vadd.f32 %v2846, %v2497
    %v2848 = vadd.f32 %v2847, %v2498
    %v2849 = vadd.f32 %v2848, %v2499
    %v2850 = vadd.f32 %v2849, %v2500
    %v2851 = vadd.f32 %v2850, %v2501
    %v2852 = vadd.f32 %v2851, %v2502
    %v2853 = vadd.f32 %v2852, %v2503
    %v2854 = vadd.f32 %v2853, %v2504
    %2855 = vadd.xlane.f32.xlu0 %v2854
    %v2856 = vpop.xlane.xlu0 %2855
    %v2857 = vmul.f32 %v2691, 0.00078125
    %v2858 = vmul.f32 %v2702, 0.00078125
    %v2859 = vmul.f32 %v2713, 0.00078125
    %v2860 = vmul.f32 %v2724, 0.00078125
    %v2861 = vmul.f32 %v2735, 0.00078125
    %v2862 = vmul.f32 %v2746, 0.00078125
    %v2863 = vmul.f32 %v2757, 0.00078125
    %v2864 = vmul.f32 %v2768, 0.00078125
    %v2865 = vmul.f32 %v2779, 0.00078125
    %v2866 = vmul.f32 %v2790, 0.00078125
    %v2867 = vmul.f32 %v2801, 0.00078125
    %v2868 = vmul.f32 %v2812, 0.00078125
    %v2869 = vmul.f32 %v2823, 0.00078125
    %v2870 = vmul.f32 %v2834, 0.00078125
    %v2871 = vmul.f32 %v2845, 0.00078125
    %v2872 = vmul.f32 %v2856, 0.00078125
    %v2889 = vlaneseq
    %v2890 = vand.u32 %v2889, 127
    %v2891 = vperm.slane %v2515, %v2890
    %v2892 = vadd.s32 %v2890, 4294967288
    %v2893 = vperm.slane %v2526, %v2892
    %vm2894 = vcmask 130112
    %v2895 = vsel %vm2894, %v2893, %v2891
    %v2896 = vadd.s32 %v2890, 4294967280
    %v2897 = vperm.slane %v2537, %v2896
    %vm2898 = vcmask 195712
    %v2899 = vsel %vm2898, %v2897, %v2895
    %v2900 = vadd.s32 %v2890, 4294967272
    %v2901 = vperm.slane %v2548, %v2900
    %vm2902 = vcmask 261312
    %v2903 = vsel %vm2902, %v2901, %v2899
    %v2904 = vadd.s32 %v2890, 4294967264
    %v2905 = vperm.slane %v2559, %v2904
    %vm2906 = vcmask 326912
    %v2907 = vsel %vm2906, %v2905, %v2903
    %v2908 = vadd.s32 %v2890, 4294967256
    %v2909 = vperm.slane %v2570, %v2908
    %vm2910 = vcmask 392512
    %v2911 = vsel %vm2910, %v2909, %v2907
    %v2912 = vadd.s32 %v2890, 4294967248
    %v2913 = vperm.slane %v2581, %v2912
    %vm2914 = vcmask 458112
    %v2915 = vsel %vm2914, %v2913, %v2911
    %v2916 = vadd.s32 %v2890, 4294967240
    %v2917 = vperm.slane %v2592, %v2916
    %vm2918 = vcmask 523712
    %v2919 = vsel %vm2918, %v2917, %v2915
    %v2920 = vperm.slane %v2603, %v2890
    %v2921 = vperm.slane %v2614, %v2892
    %v2922 = vsel %vm2894, %v2921, %v2920
    %v2923 = vperm.slane %v2625, %v2896
    %v2924 = vsel %vm2898, %v2923, %v2922
    %v2925 = vperm.slane %v2636, %v2900
    %v2926 = vsel %vm2902, %v2925, %v2924
    %v2927 = vperm.slane %v2647, %v2904
    %v2928 = vsel %vm2906, %v2927, %v2926
    %v2929 = vperm.slane %v2658, %v2908
    %v2930 = vsel %vm2910, %v2929, %v2928
    %v2931 = vperm.slane %v2669, %v2912
    %v2932 = vsel %vm2914, %v2931, %v2930
    %v2933 = vperm.slane %v2680, %v2916
    %v2934 = vsel %vm2918, %v2933, %v2932
    %v2935 = vsel %vm929, %v2934, %v2919
    %v2953 = vadd.s32 %v2890, 4294967232
    %v2954 = vperm.slane %v2857, %v2953
    %v2955 = vadd.s32 %v2890, 4294967224
    %v2956 = vperm.slane %v2858, %v2955
    %vm2957 = vcmask 654912
    %v2958 = vsel %vm2957, %v2956, %v2954
    %v2959 = vadd.s32 %v2890, 4294967216
    %v2960 = vperm.slane %v2859, %v2959
    %vm2961 = vcmask 720512
    %v2962 = vsel %vm2961, %v2960, %v2958
    %v2963 = vadd.s32 %v2890, 4294967208
    %v2964 = vperm.slane %v2860, %v2963
    %vm2965 = vcmask 786112
    %v2966 = vsel %vm2965, %v2964, %v2962
    %v2967 = vadd.s32 %v2890, 4294967200
    %v2968 = vperm.slane %v2861, %v2967
    %vm2969 = vcmask 851712
    %v2970 = vsel %vm2969, %v2968, %v2966
    %v2971 = vadd.s32 %v2890, 4294967192
    %v2972 = vperm.slane %v2862, %v2971
    %vm2973 = vcmask 917312
    %v2974 = vsel %vm2973, %v2972, %v2970
    %v2975 = vadd.s32 %v2890, 4294967184
    %v2976 = vperm.slane %v2863, %v2975
    %vm2977 = vcmask 982912
    %v2978 = vsel %vm2977, %v2976, %v2974
    %v2979 = vadd.s32 %v2890, 4294967176
    %v2980 = vperm.slane %v2864, %v2979
    %vm2981 = vcmask 1048512
    %v2982 = vsel %vm2981, %v2980, %v2978
    %v2983 = vperm.slane %v2865, %v2953
    %v2984 = vperm.slane %v2866, %v2955
    %v2985 = vsel %vm2957, %v2984, %v2983
    %v2986 = vperm.slane %v2867, %v2959
    %v2987 = vsel %vm2961, %v2986, %v2985
    %v2988 = vperm.slane %v2868, %v2963
    %v2989 = vsel %vm2965, %v2988, %v2987
    %v2990 = vperm.slane %v2869, %v2967
    %v2991 = vsel %vm2969, %v2990, %v2989
    %v2992 = vperm.slane %v2870, %v2971
    %v2993 = vsel %vm2973, %v2992, %v2991
    %v2994 = vperm.slane %v2871, %v2975
    %v2995 = vsel %vm2977, %v2994, %v2993
    %v2996 = vperm.slane %v2872, %v2979
    %v2997 = vsel %vm2981, %v2996, %v2995
    %v2998 = vsel %vm929, %v2997, %v2982
    %vm3000 = vcmask 523264
    %v3001 = vsel %vm3000, %v2935, %v2998
    %v3002 = vpack.c.bf16 %v3001, %v3001
    %v3003 = vld [vmem:[%s5] sm:$0xf]
    %v3004 = vld [vmem:[%s5 + $0x4] sm:$0xf]
    %v3005 = vld [vmem:[%s5 + $0x8] sm:$0xf]
    %v3006 = vld [vmem:[%s5 + $0xc] sm:$0xf]
    %v3007 = vld [vmem:[%s5 + $0x10] sm:$0xf]
    %v3008 = vld [vmem:[%s5 + $0x14] sm:$0xf]
    %v3009 = vld [vmem:[%s5 + $0x18] sm:$0xf]
    %v3010 = vld [vmem:[%s5 + $0x1c] sm:$0xf]
    %v3011 = vld [vmem:[%s5 + $0x20] sm:$0xf]
    %v3012 = vld [vmem:[%s5 + $0x24] sm:$0xf]
    %v3013 = vld [vmem:[%s5 + $0x28] sm:$0xf]
    %v3014 = vld [vmem:[%s5 + $0x2c] sm:$0xf]
    %v3015 = vld [vmem:[%s5 + $0x30] sm:$0xf]
    %v3016 = vld [vmem:[%s5 + $0x34] sm:$0xf]
    %v3017 = vld [vmem:[%s5 + $0x38] sm:$0xf]
    %v3018 = vld [vmem:[%s5 + $0x3c] sm:$0xf]
    %v3019 = vld [vmem:[#allocation11] sm:$0x1]
    %v3021 = vperm.slane %v3019, 0
    %v3039 = vunpack.c.l.b16 %v3003
    %v3040 = vunpack.c.l.b16 %v3004
    %v3041 = vunpack.c.l.b16 %v3005
    %v3042 = vunpack.c.l.b16 %v3006
    %v3043 = vunpack.c.l.b16 %v3007
    %v3044 = vunpack.c.l.b16 %v3008
    %v3045 = vunpack.c.l.b16 %v3009
    %v3046 = vunpack.c.l.b16 %v3010
    %v3047 = vunpack.c.l.b16 %v3011
    %v3048 = vunpack.c.l.b16 %v3012
    %v3049 = vunpack.c.l.b16 %v3013
    %v3050 = vunpack.c.l.b16 %v3014
    %v3051 = vunpack.c.l.b16 %v3015
    %v3052 = vunpack.c.l.b16 %v3016
    %v3053 = vunpack.c.l.b16 %v3017
    %v3054 = vunpack.c.l.b16 %v3018
    %v3055 = vpack.c.b16 %v3040, %v3039
    %v3056 = vpack.c.b16 %v3042, %v3041
    %v3057 = vpack.c.b16 %v3044, %v3043
    %v3058 = vpack.c.b16 %v3046, %v3045
    %v3059 = vpack.c.b16 %v3048, %v3047
    %v3060 = vpack.c.b16 %v3050, %v3049
    %v3061 = vpack.c.b16 %v3052, %v3051
    %v3062 = vpack.c.b16 %v3054, %v3053
    %3071 = vmatpush.bf16.msra.mxu0 %v3062
    %3072 = vmatpush.bf16.msra.mxu0 %v3061
    %3073 = vmatpush.bf16.msra.mxu0 %v3060
    %3074 = vmatpush.bf16.msra.mxu0 %v3059
    %3075 = vmatpush.bf16.msra.mxu0 %v3058
    %3076 = vmatpush.bf16.msra.mxu0 %v3057
    %3077 = vmatpush.bf16.msra.mxu0 %v3056
    %3078 = vmatpush.bf16.msra.mxu0 %v3055
    %3079 = vmatmul.bf16.gmra.mxu0 %v3002
    %v3080 = vpop.f32.mrf.mxu0
    %v3081 = vadd.f32 %v3021, %v3080
    %v3082 = vpop.f32.mrf.mxu0
    %3083 = vdwg.mxu0
    %v3084 = vsub.f32 0.0, %v3081
    %v3085 = vmul.f32 %v3084, 1.442695
    %v3086 = vpow.pop %v3085
    %v3087 = vadd.f32 %v3086, 1.0
    %v3088 = vrcp.pop %v3087
    %v3089 = vperm.slane %v3088, 0
    %v3090 = vlaneseq
    %v3091 = vshrl.u32 %v3090, 7
    %3093 = vset.pattern.permute.xlu0 %v3091
    %3094 = vperm.xlu0 %3093, %v3089
    %v3095 = vpop.permute.xlu0 %3094
    %v3096 = vlaneseq
    %v3097 = vshrl.u32 %v3096, 7
    %v3098 = vadd.s32 %v3097, 8
    %3099 = vset.pattern.permute.xlu0 %v3098
    %3100 = vperm.xlu0 %3099, %v3089
    %v3101 = vpop.permute.xlu0 %3100
    %v3102 = vlaneseq
    %v3103 = vshrl.u32 %v3102, 7
    %v3104 = vadd.s32 %v3103, 16
    %3105 = vset.pattern.permute.xlu0 %v3104
    %3106 = vperm.xlu0 %3105, %v3089
    %v3107 = vpop.permute.xlu0 %3106
    %v3108 = vlaneseq
    %v3109 = vshrl.u32 %v3108, 7
    %v3110 = vadd.s32 %v3109, 24
    %3111 = vset.pattern.permute.xlu0 %v3110
    %3112 = vperm.xlu0 %3111, %v3089
    %v3113 = vpop.permute.xlu0 %3112
    %v3114 = vlaneseq
    %v3115 = vshrl.u32 %v3114, 7
    %v3116 = vadd.s32 %v3115, 32
    %3117 = vset.pattern.permute.xlu0 %v3116
    %3118 = vperm.xlu0 %3117, %v3089
    %v3119 = vpop.permute.xlu0 %3118
    %v3120 = vlaneseq
    %v3121 = vshrl.u32 %v3120, 7
    %v3122 = vadd.s32 %v3121, 40
    %3123 = vset.pattern.permute.xlu0 %v3122
    %3124 = vperm.xlu0 %3123, %v3089
    %v3125 = vpop.permute.xlu0 %3124
    %v3126 = vlaneseq
    %v3127 = vshrl.u32 %v3126, 7
    %v3128 = vadd.s32 %v3127, 48
    %3129 = vset.pattern.permute.xlu0 %v3128
    %3130 = vperm.xlu0 %3129, %v3089
    %v3131 = vpop.permute.xlu0 %3130
    %v3132 = vlaneseq
    %v3133 = vshrl.u32 %v3132, 7
    %v3134 = vadd.s32 %v3133, 56
    %3135 = vset.pattern.permute.xlu0 %v3134
    %3136 = vperm.xlu0 %3135, %v3089
    %v3137 = vpop.permute.xlu0 %3136
    %v3138 = vperm.slane %v3088, 1
    %v3139 = vlaneseq
    %v3140 = vshrl.u32 %v3139, 7
    %3142 = vset.pattern.permute.xlu0 %v3140
    %3143 = vperm.xlu0 %3142, %v3138
    %v3144 = vpop.permute.xlu0 %3143
    %v3145 = vlaneseq
    %v3146 = vshrl.u32 %v3145, 7
    %v3147 = vadd.s32 %v3146, 8
    %3148 = vset.pattern.permute.xlu0 %v3147
    %3149 = vperm.xlu0 %3148, %v3138
    %v3150 = vpop.permute.xlu0 %3149
    %v3151 = vlaneseq
    %v3152 = vshrl.u32 %v3151, 7
    %v3153 = vadd.s32 %v3152, 16
    %3154 = vset.pattern.permute.xlu0 %v3153
    %3155 = vperm.xlu0 %3154, %v3138
    %v3156 = vpop.permute.xlu0 %3155
    %v3157 = vlaneseq
    %v3158 = vshrl.u32 %v3157, 7
    %v3159 = vadd.s32 %v3158, 24
    %3160 = vset.pattern.permute.xlu0 %v3159
    %3161 = vperm.xlu0 %3160, %v3138
    %v3162 = vpop.permute.xlu0 %3161
    %v3163 = vlaneseq
    %v3164 = vshrl.u32 %v3163, 7
    %v3165 = vadd.s32 %v3164, 32
    %3166 = vset.pattern.permute.xlu0 %v3165
    %3167 = vperm.xlu0 %3166, %v3138
    %v3168 = vpop.permute.xlu0 %3167
    %v3169 = vlaneseq
    %v3170 = vshrl.u32 %v3169, 7
    %v3171 = vadd.s32 %v3170, 40
    %3172 = vset.pattern.permute.xlu0 %v3171
    %3173 = vperm.xlu0 %3172, %v3138
    %v3174 = vpop.permute.xlu0 %3173
    %v3175 = vlaneseq
    %v3176 = vshrl.u32 %v3175, 7
    %v3177 = vadd.s32 %v3176, 48
    %3178 = vset.pattern.permute.xlu0 %v3177
    %3179 = vperm.xlu0 %3178, %v3138
    %v3180 = vpop.permute.xlu0 %3179
    %v3181 = vlaneseq
    %v3182 = vshrl.u32 %v3181, 7
    %v3183 = vadd.s32 %v3182, 56
    %3184 = vset.pattern.permute.xlu0 %v3183
    %3185 = vperm.xlu0 %3184, %v3138
    %v3186 = vpop.permute.xlu0 %3185
    %v3187 = vmul.f32 %v2345, %v3095
    %v3188 = vmul.f32 %v2346, %v3095
    %v3189 = vmul.f32 %v2347, %v3095
    %v3190 = vmul.f32 %v2348, %v3095
    %v3191 = vmul.f32 %v2349, %v3095
    %v3192 = vmul.f32 %v2350, %v3095
    %v3193 = vmul.f32 %v2351, %v3095
    %v3194 = vmul.f32 %v2352, %v3095
    %v3195 = vmul.f32 %v2353, %v3095
    %v3196 = vmul.f32 %v2354, %v3095
    %v3197 = vmul.f32 %v2355, %v3101
    %v3198 = vmul.f32 %v2356, %v3101
    %v3199 = vmul.f32 %v2357, %v3101
    %v3200 = vmul.f32 %v2358, %v3101
    %v3201 = vmul.f32 %v2359, %v3101
    %v3202 = vmul.f32 %v2360, %v3101
    %v3203 = vmul.f32 %v2361, %v3101
    %v3204 = vmul.f32 %v2362, %v3101
    %v3205 = vmul.f32 %v2363, %v3101
    %v3206 = vmul.f32 %v2364, %v3101
    %v3207 = vmul.f32 %v2365, %v3107
    %v3208 = vmul.f32 %v2366, %v3107
    %v3209 = vmul.f32 %v2367, %v3107
    %v3210 = vmul.f32 %v2368, %v3107
    %v3211 = vmul.f32 %v2369, %v3107
    %v3212 = vmul.f32 %v2370, %v3107
    %v3213 = vmul.f32 %v2371, %v3107
    %v3214 = vmul.f32 %v2372, %v3107
    %v3215 = vmul.f32 %v2373, %v3107
    %v3216 = vmul.f32 %v2374, %v3107
    %v3217 = vmul.f32 %v2375, %v3113
    %v3218 = vmul.f32 %v2376, %v3113
    %v3219 = vmul.f32 %v2377, %v3113
    %v3220 = vmul.f32 %v2378, %v3113
    %v3221 = vmul.f32 %v2379, %v3113
    %v3222 = vmul.f32 %v2380, %v3113
    %v3223 = vmul.f32 %v2381, %v3113
    %v3224 = vmul.f32 %v2382, %v3113
    %v3225 = vmul.f32 %v2383, %v3113
    %v3226 = vmul.f32 %v2384, %v3113
    %v3227 = vmul.f32 %v2385, %v3119
    %v3228 = vmul.f32 %v2386, %v3119
    %v3229 = vmul.f32 %v2387, %v3119
    %v3230 = vmul.f32 %v2388, %v3119
    %v3231 = vmul.f32 %v2389, %v3119
    %v3232 = vmul.f32 %v2390, %v3119
    %v3233 = vmul.f32 %v2391, %v3119
    %v3234 = vmul.f32 %v2392, %v3119
    %v3235 = vmul.f32 %v2393, %v3119
    %v3236 = vmul.f32 %v2394, %v3119
    %v3237 = vmul.f32 %v2395, %v3125
    %v3238 = vmul.f32 %v2396, %v3125
    %v3239 = vmul.f32 %v2397, %v3125
    %v3240 = vmul.f32 %v2398, %v3125
    %v3241 = vmul.f32 %v2399, %v3125
    %v3242 = vmul.f32 %v2400, %v3125
    %v3243 = vmul.f32 %v2401, %v3125
    %v3244 = vmul.f32 %v2402, %v3125
    %v3245 = vmul.f32 %v2403, %v3125
    %v3246 = vmul.f32 %v2404, %v3125
    %v3247 = vmul.f32 %v2405, %v3131
    %v3248 = vmul.f32 %v2406, %v3131
    %v3249 = vmul.f32 %v2407, %v3131
    %v3250 = vmul.f32 %v2408, %v3131
    %v3251 = vmul.f32 %v2409, %v3131
    %v3252 = vmul.f32 %v2410, %v3131
    %v3253 = vmul.f32 %v2411, %v3131
    %v3254 = vmul.f32 %v2412, %v3131
    %v3255 = vmul.f32 %v2413, %v3131
    %v3256 = vmul.f32 %v2414, %v3131
    %v3257 = vmul.f32 %v2415, %v3137
    %v3258 = vmul.f32 %v2416, %v3137
    %v3259 = vmul.f32 %v2417, %v3137
    %v3260 = vmul.f32 %v2418, %v3137
    %v3261 = vmul.f32 %v2419, %v3137
    %v3262 = vmul.f32 %v2420, %v3137
    %v3263 = vmul.f32 %v2421, %v3137
    %v3264 = vmul.f32 %v2422, %v3137
    %v3265 = vmul.f32 %v2423, %v3137
    %v3266 = vmul.f32 %v2424, %v3137
    %v3267 = vmul.f32 %v2425, %v3144
    %v3268 = vmul.f32 %v2426, %v3144
    %v3269 = vmul.f32 %v2427, %v3144
    %v3270 = vmul.f32 %v2428, %v3144
    %v3271 = vmul.f32 %v2429, %v3144
    %v3272 = vmul.f32 %v2430, %v3144
    %v3273 = vmul.f32 %v2431, %v3144
    %v3274 = vmul.f32 %v2432, %v3144
    %v3275 = vmul.f32 %v2433, %v3144
    %v3276 = vmul.f32 %v2434, %v3144
    %v3277 = vmul.f32 %v2435, %v3150
    %v3278 = vmul.f32 %v2436, %v3150
    %v3279 = vmul.f32 %v2437, %v3150
    %v3280 = vmul.f32 %v2438, %v3150
    %v3281 = vmul.f32 %v2439, %v3150
    %v3282 = vmul.f32 %v2440, %v3150
    %v3283 = vmul.f32 %v2441, %v3150
    %v3284 = vmul.f32 %v2442, %v3150
    %v3285 = vmul.f32 %v2443, %v3150
    %v3286 = vmul.f32 %v2444, %v3150
    %v3287 = vmul.f32 %v2445, %v3156
    %v3288 = vmul.f32 %v2446, %v3156
    %v3289 = vmul.f32 %v2447, %v3156
    %v3290 = vmul.f32 %v2448, %v3156
    %v3291 = vmul.f32 %v2449, %v3156
    %v3292 = vmul.f32 %v2450, %v3156
    %v3293 = vmul.f32 %v2451, %v3156
    %v3294 = vmul.f32 %v2452, %v3156
    %v3295 = vmul.f32 %v2453, %v3156
    %v3296 = vmul.f32 %v2454, %v3156
    %v3297 = vmul.f32 %v2455, %v3162
    %v3298 = vmul.f32 %v2456, %v3162
    %v3299 = vmul.f32 %v2457, %v3162
    %v3300 = vmul.f32 %v2458, %v3162
    %v3301 = vmul.f32 %v2459, %v3162
    %v3302 = vmul.f32 %v2460, %v3162
    %v3303 = vmul.f32 %v2461, %v3162
    %v3304 = vmul.f32 %v2462, %v3162
    %v3305 = vmul.f32 %v2463, %v3162
    %v3306 = vmul.f32 %v2464, %v3162
    %v3307 = vmul.f32 %v2465, %v3168
    %v3308 = vmul.f32 %v2466, %v3168
    %v3309 = vmul.f32 %v2467, %v3168
    %v3310 = vmul.f32 %v2468, %v3168
    %v3311 = vmul.f32 %v2469, %v3168
    %v3312 = vmul.f32 %v2470, %v3168
    %v3313 = vmul.f32 %v2471, %v3168
    %v3314 = vmul.f32 %v2472, %v3168
    %v3315 = vmul.f32 %v2473, %v3168
    %v3316 = vmul.f32 %v2474, %v3168
    %v3317 = vmul.f32 %v2475, %v3174
    %v3318 = vmul.f32 %v2476, %v3174
    %v3319 = vmul.f32 %v2477, %v3174
    %v3320 = vmul.f32 %v2478, %v3174
    %v3321 = vmul.f32 %v2479, %v3174
    %v3322 = vmul.f32 %v2480, %v3174
    %v3323 = vmul.f32 %v2481, %v3174
    %v3324 = vmul.f32 %v2482, %v3174
    %v3325 = vmul.f32 %v2483, %v3174
    %v3326 = vmul.f32 %v2484, %v3174
    %v3327 = vmul.f32 %v2485, %v3180
    %v3328 = vmul.f32 %v2486, %v3180
    %v3329 = vmul.f32 %v2487, %v3180
    %v3330 = vmul.f32 %v2488, %v3180
    %v3331 = vmul.f32 %v2489, %v3180
    %v3332 = vmul.f32 %v2490, %v3180
    %v3333 = vmul.f32 %v2491, %v3180
    %v3334 = vmul.f32 %v2492, %v3180
    %v3335 = vmul.f32 %v2493, %v3180
    %v3336 = vmul.f32 %v2494, %v3180
    %v3337 = vmul.f32 %v2495, %v3186
    %v3338 = vmul.f32 %v2496, %v3186
    %v3339 = vmul.f32 %v2497, %v3186
    %v3340 = vmul.f32 %v2498, %v3186
    %v3341 = vmul.f32 %v2499, %v3186
    %v3342 = vmul.f32 %v2500, %v3186
    %v3343 = vmul.f32 %v2501, %v3186
    %v3344 = vmul.f32 %v2502, %v3186
    %v3345 = vmul.f32 %v2503, %v3186
    %v3346 = vmul.f32 %v2504, %v3186
    %v3347 = vadd.f32 %v3187, %v3197
    %v3348 = vadd.f32 %v3347, %v3207
    %v3349 = vadd.f32 %v3348, %v3217
    %v3350 = vadd.f32 %v3349, %v3227
    %v3351 = vadd.f32 %v3350, %v3237
    %v3352 = vadd.f32 %v3351, %v3247
    %v3353 = vadd.f32 %v3352, %v3257
    %v3354 = vrot.slane %v3353, 4
    %v3355 = vadd.f32 %v3353, %v3354
    %v3356 = vrot.slane %v3355, 2
    %v3357 = vadd.f32 %v3355, %v3356
    %v3358 = vrot.slane %v3357, 1
    %v3359 = vadd.f32 %v3357, %v3358
    %v3360 = vadd.f32 %v3188, %v3198
    %v3361 = vadd.f32 %v3360, %v3208
    %v3362 = vadd.f32 %v3361, %v3218
    %v3363 = vadd.f32 %v3362, %v3228
    %v3364 = vadd.f32 %v3363, %v3238
    %v3365 = vadd.f32 %v3364, %v3248
    %v3366 = vadd.f32 %v3365, %v3258
    %v3367 = vrot.slane %v3366, 4
    %v3368 = vadd.f32 %v3366, %v3367
    %v3369 = vrot.slane %v3368, 2
    %v3370 = vadd.f32 %v3368, %v3369
    %v3371 = vrot.slane %v3370, 1
    %v3372 = vadd.f32 %v3370, %v3371
    %v3373 = vadd.f32 %v3189, %v3199
    %v3374 = vadd.f32 %v3373, %v3209
    %v3375 = vadd.f32 %v3374, %v3219
    %v3376 = vadd.f32 %v3375, %v3229
    %v3377 = vadd.f32 %v3376, %v3239
    %v3378 = vadd.f32 %v3377, %v3249
    %v3379 = vadd.f32 %v3378, %v3259
    %v3380 = vrot.slane %v3379, 4
    %v3381 = vadd.f32 %v3379, %v3380
    %v3382 = vrot.slane %v3381, 2
    %v3383 = vadd.f32 %v3381, %v3382
    %v3384 = vrot.slane %v3383, 1
    %v3385 = vadd.f32 %v3383, %v3384
    %v3386 = vadd.f32 %v3190, %v3200
    %v3387 = vadd.f32 %v3386, %v3210
    %v3388 = vadd.f32 %v3387, %v3220
    %v3389 = vadd.f32 %v3388, %v3230
    %v3390 = vadd.f32 %v3389, %v3240
    %v3391 = vadd.f32 %v3390, %v3250
    %v3392 = vadd.f32 %v3391, %v3260
    %v3393 = vrot.slane %v3392, 4
    %v3394 = vadd.f32 %v3392, %v3393
    %v3395 = vrot.slane %v3394, 2
    %v3396 = vadd.f32 %v3394, %v3395
    %v3397 = vrot.slane %v3396, 1
    %v3398 = vadd.f32 %v3396, %v3397
    %v3399 = vadd.f32 %v3191, %v3201
    %v3400 = vadd.f32 %v3399, %v3211
    %v3401 = vadd.f32 %v3400, %v3221
    %v3402 = vadd.f32 %v3401, %v3231
    %v3403 = vadd.f32 %v3402, %v3241
    %v3404 = vadd.f32 %v3403, %v3251
    %v3405 = vadd.f32 %v3404, %v3261
    %v3406 = vrot.slane %v3405, 4
    %v3407 = vadd.f32 %v3405, %v3406
    %v3408 = vrot.slane %v3407, 2
    %v3409 = vadd.f32 %v3407, %v3408
    %v3410 = vrot.slane %v3409, 1
    %v3411 = vadd.f32 %v3409, %v3410
    %v3412 = vadd.f32 %v3192, %v3202
    %v3413 = vadd.f32 %v3412, %v3212
    %v3414 = vadd.f32 %v3413, %v3222
    %v3415 = vadd.f32 %v3414, %v3232
    %v3416 = vadd.f32 %v3415, %v3242
    %v3417 = vadd.f32 %v3416, %v3252
    %v3418 = vadd.f32 %v3417, %v3262
    %v3419 = vrot.slane %v3418, 4
    %v3420 = vadd.f32 %v3418, %v3419
    %v3421 = vrot.slane %v3420, 2
    %v3422 = vadd.f32 %v3420, %v3421
    %v3423 = vrot.slane %v3422, 1
    %v3424 = vadd.f32 %v3422, %v3423
    %v3425 = vadd.f32 %v3193, %v3203
    %v3426 = vadd.f32 %v3425, %v3213
    %v3427 = vadd.f32 %v3426, %v3223
    %v3428 = vadd.f32 %v3427, %v3233
    %v3429 = vadd.f32 %v3428, %v3243
    %v3430 = vadd.f32 %v3429, %v3253
    %v3431 = vadd.f32 %v3430, %v3263
    %v3432 = vrot.slane %v3431, 4
    %v3433 = vadd.f32 %v3431, %v3432
    %v3434 = vrot.slane %v3433, 2
    %v3435 = vadd.f32 %v3433, %v3434
    %v3436 = vrot.slane %v3435, 1
    %v3437 = vadd.f32 %v3435, %v3436
    %v3438 = vadd.f32 %v3194, %v3204
    %v3439 = vadd.f32 %v3438, %v3214
    %v3440 = vadd.f32 %v3439, %v3224
    %v3441 = vadd.f32 %v3440, %v3234
    %v3442 = vadd.f32 %v3441, %v3244
    %v3443 = vadd.f32 %v3442, %v3254
    %v3444 = vadd.f32 %v3443, %v3264
    %v3445 = vrot.slane %v3444, 4
    %v3446 = vadd.f32 %v3444, %v3445
    %v3447 = vrot.slane %v3446, 2
    %v3448 = vadd.f32 %v3446, %v3447
    %v3449 = vrot.slane %v3448, 1
    %v3450 = vadd.f32 %v3448, %v3449
    %v3451 = vadd.f32 %v3195, %v3205
    %v3452 = vadd.f32 %v3451, %v3215
    %v3453 = vadd.f32 %v3452, %v3225
    %v3454 = vadd.f32 %v3453, %v3235
    %v3455 = vadd.f32 %v3454, %v3245
    %v3456 = vadd.f32 %v3455, %v3255
    %v3457 = vadd.f32 %v3456, %v3265
    %v3458 = vrot.slane %v3457, 4
    %v3459 = vadd.f32 %v3457, %v3458
    %v3460 = vrot.slane %v3459, 2
    %v3461 = vadd.f32 %v3459, %v3460
    %v3462 = vrot.slane %v3461, 1
    %v3463 = vadd.f32 %v3461, %v3462
    %v3464 = vadd.f32 %v3196, %v3206
    %v3465 = vadd.f32 %v3464, %v3216
    %v3466 = vadd.f32 %v3465, %v3226
    %v3467 = vadd.f32 %v3466, %v3236
    %v3468 = vadd.f32 %v3467, %v3246
    %v3469 = vadd.f32 %v3468, %v3256
    %v3470 = vadd.f32 %v3469, %v3266
    %v3471 = vrot.slane %v3470, 4
    %v3472 = vadd.f32 %v3470, %v3471
    %v3473 = vrot.slane %v3472, 2
    %v3474 = vadd.f32 %v3472, %v3473
    %v3475 = vrot.slane %v3474, 1
    %v3476 = vadd.f32 %v3474, %v3475
    %v3477 = vadd.f32 %v3267, %v3277
    %v3478 = vadd.f32 %v3477, %v3287
    %v3479 = vadd.f32 %v3478, %v3297
    %v3480 = vadd.f32 %v3479, %v3307
    %v3481 = vadd.f32 %v3480, %v3317
    %v3482 = vadd.f32 %v3481, %v3327
    %v3483 = vadd.f32 %v3482, %v3337
    %v3484 = vrot.slane %v3483, 4
    %v3485 = vadd.f32 %v3483, %v3484
    %v3486 = vrot.slane %v3485, 2
    %v3487 = vadd.f32 %v3485, %v3486
    %v3488 = vrot.slane %v3487, 1
    %v3489 = vadd.f32 %v3487, %v3488
    %v3490 = vadd.f32 %v3268, %v3278
    %v3491 = vadd.f32 %v3490, %v3288
    %v3492 = vadd.f32 %v3491, %v3298
    %v3493 = vadd.f32 %v3492, %v3308
    %v3494 = vadd.f32 %v3493, %v3318
    %v3495 = vadd.f32 %v3494, %v3328
    %v3496 = vadd.f32 %v3495, %v3338
    %v3497 = vrot.slane %v3496, 4
    %v3498 = vadd.f32 %v3496, %v3497
    %v3499 = vrot.slane %v3498, 2
    %v3500 = vadd.f32 %v3498, %v3499
    %v3501 = vrot.slane %v3500, 1
    %v3502 = vadd.f32 %v3500, %v3501
    %v3503 = vadd.f32 %v3269, %v3279
    %v3504 = vadd.f32 %v3503, %v3289
    %v3505 = vadd.f32 %v3504, %v3299
    %v3506 = vadd.f32 %v3505, %v3309
    %v3507 = vadd.f32 %v3506, %v3319
    %v3508 = vadd.f32 %v3507, %v3329
    %v3509 = vadd.f32 %v3508, %v3339
    %v3510 = vrot.slane %v3509, 4
    %v3511 = vadd.f32 %v3509, %v3510
    %v3512 = vrot.slane %v3511, 2
    %v3513 = vadd.f32 %v3511, %v3512
    %v3514 = vrot.slane %v3513, 1
    %v3515 = vadd.f32 %v3513, %v3514
    %v3516 = vadd.f32 %v3270, %v3280
    %v3517 = vadd.f32 %v3516, %v3290
    %v3518 = vadd.f32 %v3517, %v3300
    %v3519 = vadd.f32 %v3518, %v3310
    %v3520 = vadd.f32 %v3519, %v3320
    %v3521 = vadd.f32 %v3520, %v3330
    %v3522 = vadd.f32 %v3521, %v3340
    %v3523 = vrot.slane %v3522, 4
    %v3524 = vadd.f32 %v3522, %v3523
    %v3525 = vrot.slane %v3524, 2
    %v3526 = vadd.f32 %v3524, %v3525
    %v3527 = vrot.slane %v3526, 1
    %v3528 = vadd.f32 %v3526, %v3527
    %v3529 = vadd.f32 %v3271, %v3281
    %v3530 = vadd.f32 %v3529, %v3291
    %v3531 = vadd.f32 %v3530, %v3301
    %v3532 = vadd.f32 %v3531, %v3311
    %v3533 = vadd.f32 %v3532, %v3321
    %v3534 = vadd.f32 %v3533, %v3331
    %v3535 = vadd.f32 %v3534, %v3341
    %v3536 = vrot.slane %v3535, 4
    %v3537 = vadd.f32 %v3535, %v3536
    %v3538 = vrot.slane %v3537, 2
    %v3539 = vadd.f32 %v3537, %v3538
    %v3540 = vrot.slane %v3539, 1
    %v3541 = vadd.f32 %v3539, %v3540
    %v3542 = vadd.f32 %v3272, %v3282
    %v3543 = vadd.f32 %v3542, %v3292
    %v3544 = vadd.f32 %v3543, %v3302
    %v3545 = vadd.f32 %v3544, %v3312
    %v3546 = vadd.f32 %v3545, %v3322
    %v3547 = vadd.f32 %v3546, %v3332
    %v3548 = vadd.f32 %v3547, %v3342
    %v3549 = vrot.slane %v3548, 4
    %v3550 = vadd.f32 %v3548, %v3549
    %v3551 = vrot.slane %v3550, 2
    %v3552 = vadd.f32 %v3550, %v3551
    %v3553 = vrot.slane %v3552, 1
    %v3554 = vadd.f32 %v3552, %v3553
    %v3555 = vadd.f32 %v3273, %v3283
    %v3556 = vadd.f32 %v3555, %v3293
    %v3557 = vadd.f32 %v3556, %v3303
    %v3558 = vadd.f32 %v3557, %v3313
    %v3559 = vadd.f32 %v3558, %v3323
    %v3560 = vadd.f32 %v3559, %v3333
    %v3561 = vadd.f32 %v3560, %v3343
    %v3562 = vrot.slane %v3561, 4
    %v3563 = vadd.f32 %v3561, %v3562
    %v3564 = vrot.slane %v3563, 2
    %v3565 = vadd.f32 %v3563, %v3564
    %v3566 = vrot.slane %v3565, 1
    %v3567 = vadd.f32 %v3565, %v3566
    %v3568 = vadd.f32 %v3274, %v3284
    %v3569 = vadd.f32 %v3568, %v3294
    %v3570 = vadd.f32 %v3569, %v3304
    %v3571 = vadd.f32 %v3570, %v3314
    %v3572 = vadd.f32 %v3571, %v3324
    %v3573 = vadd.f32 %v3572, %v3334
    %v3574 = vadd.f32 %v3573, %v3344
    %v3575 = vrot.slane %v3574, 4
    %v3576 = vadd.f32 %v3574, %v3575
    %v3577 = vrot.slane %v3576, 2
    %v3578 = vadd.f32 %v3576, %v3577
    %v3579 = vrot.slane %v3578, 1
    %v3580 = vadd.f32 %v3578, %v3579
    %v3581 = vadd.f32 %v3275, %v3285
    %v3582 = vadd.f32 %v3581, %v3295
    %v3583 = vadd.f32 %v3582, %v3305
    %v3584 = vadd.f32 %v3583, %v3315
    %v3585 = vadd.f32 %v3584, %v3325
    %v3586 = vadd.f32 %v3585, %v3335
    %v3587 = vadd.f32 %v3586, %v3345
    %v3588 = vrot.slane %v3587, 4
    %v3589 = vadd.f32 %v3587, %v3588
    %v3590 = vrot.slane %v3589, 2
    %v3591 = vadd.f32 %v3589, %v3590
    %v3592 = vrot.slane %v3591, 1
    %v3593 = vadd.f32 %v3591, %v3592
    %v3594 = vadd.f32 %v3276, %v3286
    %v3595 = vadd.f32 %v3594, %v3296
    %v3596 = vadd.f32 %v3595, %v3306
    %v3597 = vadd.f32 %v3596, %v3316
    %v3598 = vadd.f32 %v3597, %v3326
    %v3599 = vadd.f32 %v3598, %v3336
    %v3600 = vadd.f32 %v3599, %v3346
    %v3601 = vrot.slane %v3600, 4
    %v3602 = vadd.f32 %v3600, %v3601
    %v3603 = vrot.slane %v3602, 2
    %v3604 = vadd.f32 %v3602, %v3603
    %v3605 = vrot.slane %v3604, 1
    %v3606 = vadd.f32 %v3604, %v3605
    %v3607 = vmul.f32 %v3359, 0.015625
    %v3608 = vmul.f32 %v3372, 0.015625
    %v3609 = vmul.f32 %v3385, 0.015625
    %v3610 = vmul.f32 %v3398, 0.015625
    %v3611 = vmul.f32 %v3411, 0.015625
    %v3612 = vmul.f32 %v3424, 0.015625
    %v3613 = vmul.f32 %v3437, 0.015625
    %v3614 = vmul.f32 %v3450, 0.015625
    %v3615 = vmul.f32 %v3463, 0.015625
    %v3616 = vmul.f32 %v3476, 0.015625
    %v3617 = vmul.f32 %v3489, 0.015625
    %v3618 = vmul.f32 %v3502, 0.015625
    %v3619 = vmul.f32 %v3515, 0.015625
    %v3620 = vmul.f32 %v3528, 0.015625
    %v3621 = vmul.f32 %v3541, 0.015625
    %v3622 = vmul.f32 %v3554, 0.015625
    %v3623 = vmul.f32 %v3567, 0.015625
    %v3624 = vmul.f32 %v3580, 0.015625
    %v3625 = vmul.f32 %v3593, 0.015625
    %v3626 = vmul.f32 %v3606, 0.015625
    %v3627 = vpack.c.bf16 %v3607, %v3607
    %v3628 = vpack.c.bf16 %v3608, %v3608
    %v3629 = vpack.c.bf16 %v3609, %v3609
    %v3630 = vpack.c.bf16 %v3610, %v3610
    %v3631 = vpack.c.bf16 %v3611, %v3611
    %v3632 = vpack.c.bf16 %v3612, %v3612
    %v3633 = vpack.c.bf16 %v3613, %v3613
    %v3634 = vpack.c.bf16 %v3614, %v3614
    %v3635 = vpack.c.bf16 %v3615, %v3615
    %v3636 = vpack.c.bf16 %v3616, %v3616
    %v3637 = vpack.c.bf16 %v3617, %v3617
    %v3638 = vpack.c.bf16 %v3618, %v3618
    %v3639 = vpack.c.bf16 %v3619, %v3619
    %v3640 = vpack.c.bf16 %v3620, %v3620
    %v3641 = vpack.c.bf16 %v3621, %v3621
    %v3642 = vpack.c.bf16 %v3622, %v3622
    %v3643 = vpack.c.bf16 %v3623, %v3623
    %v3644 = vpack.c.bf16 %v3624, %v3624
    %v3645 = vpack.c.bf16 %v3625, %v3625
    %v3646 = vpack.c.bf16 %v3626, %v3626
    %v3647 = vld [vmem:[#allocation13] sm:$0xff]
    %v3648 = vld [vmem:[#allocation13 + $0x8] sm:$0xff]
    %v3649 = vld [vmem:[#allocation13 + $0x10] sm:$0xff]
    %v3650 = vld [vmem:[#allocation13 + $0x18] sm:$0xff]
    %v3651 = vld [vmem:[#allocation13 + $0x20] sm:$0xff]
    %v3652 = vld [vmem:[#allocation13 + $0x28] sm:$0xff]
    %v3653 = vld [vmem:[#allocation13 + $0x30] sm:$0xff]
    %v3654 = vld [vmem:[#allocation13 + $0x38] sm:$0xff]
    %v3655 = vld [vmem:[#allocation13 + $0x40] sm:$0xff]
    %v3656 = vld [vmem:[#allocation13 + $0x48] sm:$0xff]
    %v3657 = vld [vmem:[#allocation13 + $0x50] sm:$0xff]
    %v3658 = vld [vmem:[#allocation13 + $0x58] sm:$0xff]
    %v3659 = vld [vmem:[#allocation13 + $0x60] sm:$0xff]
    %v3660 = vld [vmem:[#allocation13 + $0x68] sm:$0xff]
    %v3661 = vld [vmem:[#allocation13 + $0x70] sm:$0xff]
    %v3662 = vld [vmem:[#allocation13 + $0x78] sm:$0xff]
    %v3663 = vld [vmem:[#allocation13 + $0x80] sm:$0xff]
    %v3664 = vld [vmem:[#allocation13 + $0x88] sm:$0xff]
    %v3665 = vld [vmem:[#allocation13 + $0x90] sm:$0xff]
    %v3666 = vld [vmem:[#allocation13 + $0x98] sm:$0xff]
    %v3667 = vld [vmem:[#allocation13 + $0xa0] sm:$0xff]
    %v3668 = vld [vmem:[#allocation13 + $0xa8] sm:$0xff]
    %v3669 = vld [vmem:[#allocation13 + $0xb0] sm:$0xff]
    %v3670 = vld [vmem:[#allocation13 + $0xb8] sm:$0xff]
    %v3671 = vld [vmem:[#allocation13 + $0xc0] sm:$0xff]
    %v3672 = vld [vmem:[#allocation13 + $0xc8] sm:$0xff]
    %v3673 = vld [vmem:[#allocation13 + $0xd0] sm:$0xff]
    %v3674 = vld [vmem:[#allocation13 + $0xd8] sm:$0xff]
    %v3675 = vld [vmem:[#allocation13 + $0xe0] sm:$0xff]
    %v3676 = vld [vmem:[#allocation13 + $0xe8] sm:$0xff]
    %v3677 = vld [vmem:[#allocation13 + $0xf0] sm:$0xff]
    %v3678 = vld [vmem:[#allocation13 + $0xf8] sm:$0xff]
    %v3679 = vld [vmem:[#allocation13 + $0x100] sm:$0xff]
    %v3680 = vld [vmem:[#allocation13 + $0x108] sm:$0xff]
    %v3681 = vld [vmem:[#allocation13 + $0x110] sm:$0xff]
    %v3682 = vld [vmem:[#allocation13 + $0x118] sm:$0xff]
    %v3683 = vld [vmem:[#allocation13 + $0x120] sm:$0xff]
    %v3684 = vld [vmem:[#allocation13 + $0x128] sm:$0xff]
    %v3685 = vld [vmem:[#allocation13 + $0x130] sm:$0xff]
    %v3686 = vld [vmem:[#allocation13 + $0x138] sm:$0xff]
    %v3687 = vld [vmem:[#allocation13 + $0x140] sm:$0xff]
    %v3688 = vld [vmem:[#allocation13 + $0x148] sm:$0xff]
    %v3689 = vld [vmem:[#allocation13 + $0x150] sm:$0xff]
    %v3690 = vld [vmem:[#allocation13 + $0x158] sm:$0xff]
    %v3691 = vld [vmem:[#allocation13 + $0x160] sm:$0xff]
    %v3692 = vld [vmem:[#allocation13 + $0x168] sm:$0xff]
    %v3693 = vld [vmem:[#allocation13 + $0x170] sm:$0xff]
    %v3694 = vld [vmem:[#allocation13 + $0x178] sm:$0xff]
    %v3695 = vld [vmem:[#allocation13 + $0x180] sm:$0xff]
    %v3696 = vld [vmem:[#allocation13 + $0x188] sm:$0xff]
    %v3697 = vld [vmem:[#allocation13 + $0x190] sm:$0xff]
    %v3698 = vld [vmem:[#allocation13 + $0x198] sm:$0xff]
    %v3699 = vld [vmem:[#allocation13 + $0x1a0] sm:$0xff]
    %v3700 = vld [vmem:[#allocation13 + $0x1a8] sm:$0xff]
    %v3701 = vld [vmem:[#allocation13 + $0x1b0] sm:$0xff]
    %v3702 = vld [vmem:[#allocation13 + $0x1b8] sm:$0xff]
    %v3703 = vld [vmem:[#allocation13 + $0x1c0] sm:$0xff]
    %v3704 = vld [vmem:[#allocation13 + $0x1c8] sm:$0xff]
    %v3705 = vld [vmem:[#allocation13 + $0x1d0] sm:$0xff]
    %v3706 = vld [vmem:[#allocation13 + $0x1d8] sm:$0xff]
    %v3707 = vld [vmem:[#allocation13 + $0x1e0] sm:$0xff]
    %v3708 = vld [vmem:[#allocation13 + $0x1e8] sm:$0xff]
    %v3709 = vld [vmem:[#allocation13 + $0x1f0] sm:$0xff]
    %v3710 = vld [vmem:[#allocation13 + $0x1f8] sm:$0xff]
    %v3711 = vld [vmem:[#allocation13 + $0x200] sm:$0xff]
    %v3712 = vld [vmem:[#allocation13 + $0x208] sm:$0xff]
    %v3713 = vld [vmem:[#allocation13 + $0x210] sm:$0xff]
    %v3714 = vld [vmem:[#allocation13 + $0x218] sm:$0xff]
    %v3715 = vld [vmem:[#allocation13 + $0x220] sm:$0xff]
    %v3716 = vld [vmem:[#allocation13 + $0x228] sm:$0xff]
    %v3717 = vld [vmem:[#allocation13 + $0x230] sm:$0xff]
    %v3718 = vld [vmem:[#allocation13 + $0x238] sm:$0xff]
    %v3719 = vld [vmem:[#allocation13 + $0x240] sm:$0xff]
    %v3720 = vld [vmem:[#allocation13 + $0x248] sm:$0xff]
    %v3721 = vld [vmem:[#allocation13 + $0x250] sm:$0xff]
    %v3722 = vld [vmem:[#allocation13 + $0x258] sm:$0xff]
    %v3723 = vld [vmem:[#allocation13 + $0x260] sm:$0xff]
    %v3724 = vld [vmem:[#allocation13 + $0x268] sm:$0xff]
    %v3725 = vld [vmem:[#allocation13 + $0x270] sm:$0xff]
    %v3726 = vld [vmem:[#allocation13 + $0x278] sm:$0xff]
    %v3727 = vld [vmem:[#allocation13 + $0x280] sm:$0xff]
    %v3728 = vld [vmem:[#allocation13 + $0x288] sm:$0xff]
    %v3729 = vld [vmem:[#allocation13 + $0x290] sm:$0xff]
    %v3730 = vld [vmem:[#allocation13 + $0x298] sm:$0xff]
    %v3731 = vld [vmem:[#allocation13 + $0x2a0] sm:$0xff]
    %v3732 = vld [vmem:[#allocation13 + $0x2a8] sm:$0xff]
    %v3733 = vld [vmem:[#allocation13 + $0x2b0] sm:$0xff]
    %v3734 = vld [vmem:[#allocation13 + $0x2b8] sm:$0xff]
    %v3735 = vld [vmem:[#allocation13 + $0x2c0] sm:$0xff]
    %v3736 = vld [vmem:[#allocation13 + $0x2c8] sm:$0xff]
    %v3737 = vld [vmem:[#allocation13 + $0x2d0] sm:$0xff]
    %v3738 = vld [vmem:[#allocation13 + $0x2d8] sm:$0xff]
    %v3739 = vld [vmem:[#allocation13 + $0x2e0] sm:$0xff]
    %v3740 = vld [vmem:[#allocation13 + $0x2e8] sm:$0xff]
    %v3741 = vld [vmem:[#allocation13 + $0x2f0] sm:$0xff]
    %v3742 = vld [vmem:[#allocation13 + $0x2f8] sm:$0xff]
    %v3743 = vld [vmem:[#allocation13 + $0x300] sm:$0xff]
    %v3744 = vld [vmem:[#allocation13 + $0x308] sm:$0xff]
    %v3745 = vld [vmem:[#allocation13 + $0x310] sm:$0xff]
    %v3746 = vld [vmem:[#allocation13 + $0x318] sm:$0xff]
    %v3747 = vld [vmem:[#allocation13 + $0x320] sm:$0xff]
    %v3748 = vld [vmem:[#allocation13 + $0x328] sm:$0xff]
    %v3749 = vld [vmem:[#allocation13 + $0x330] sm:$0xff]
    %v3750 = vld [vmem:[#allocation13 + $0x338] sm:$0xff]
    %v3751 = vld [vmem:[#allocation13 + $0x340] sm:$0xff]
    %v3752 = vld [vmem:[#allocation13 + $0x348] sm:$0xff]
    %v3753 = vld [vmem:[#allocation13 + $0x350] sm:$0xff]
    %v3754 = vld [vmem:[#allocation13 + $0x358] sm:$0xff]
    %v3755 = vld [vmem:[#allocation13 + $0x360] sm:$0xff]
    %v3756 = vld [vmem:[#allocation13 + $0x368] sm:$0xff]
    %v3757 = vld [vmem:[#allocation13 + $0x370] sm:$0xff]
    %v3758 = vld [vmem:[#allocation13 + $0x378] sm:$0xff]
    %v3759 = vld [vmem:[#allocation13 + $0x380] sm:$0xff]
    %v3760 = vld [vmem:[#allocation13 + $0x388] sm:$0xff]
    %v3761 = vld [vmem:[#allocation13 + $0x390] sm:$0xff]
    %v3762 = vld [vmem:[#allocation13 + $0x398] sm:$0xff]
    %v3763 = vld [vmem:[#allocation13 + $0x3a0] sm:$0xff]
    %v3764 = vld [vmem:[#allocation13 + $0x3a8] sm:$0xff]
    %v3765 = vld [vmem:[#allocation13 + $0x3b0] sm:$0xff]
    %v3766 = vld [vmem:[#allocation13 + $0x3b8] sm:$0xff]
    %v3767 = vld [vmem:[#allocation13 + $0x3c0] sm:$0xff]
    %v3768 = vld [vmem:[#allocation13 + $0x3c8] sm:$0xff]
    %v3769 = vld [vmem:[#allocation13 + $0x3d0] sm:$0xff]
    %v3770 = vld [vmem:[#allocation13 + $0x3d8] sm:$0xff]
    %v3771 = vld [vmem:[#allocation13 + $0x3e0] sm:$0xff]
    %v3772 = vld [vmem:[#allocation13 + $0x3e8] sm:$0xff]
    %v3773 = vld [vmem:[#allocation13 + $0x3f0] sm:$0xff]
    %v3774 = vld [vmem:[#allocation13 + $0x3f8] sm:$0xff]
    %v3775 = vld [vmem:[#allocation13 + $0x400] sm:$0xff]
    %v3776 = vld [vmem:[#allocation13 + $0x408] sm:$0xff]
    %v3777 = vld [vmem:[#allocation13 + $0x410] sm:$0xff]
    %v3778 = vld [vmem:[#allocation13 + $0x418] sm:$0xff]
    %v3779 = vld [vmem:[#allocation13 + $0x420] sm:$0xff]
    %v3780 = vld [vmem:[#allocation13 + $0x428] sm:$0xff]
    %v3781 = vld [vmem:[#allocation13 + $0x430] sm:$0xff]
    %v3782 = vld [vmem:[#allocation13 + $0x438] sm:$0xff]
    %v3783 = vld [vmem:[#allocation13 + $0x440] sm:$0xff]
    %v3784 = vld [vmem:[#allocation13 + $0x448] sm:$0xff]
    %v3785 = vld [vmem:[#allocation13 + $0x450] sm:$0xff]
    %v3786 = vld [vmem:[#allocation13 + $0x458] sm:$0xff]
    %v3787 = vld [vmem:[#allocation13 + $0x460] sm:$0xff]
    %v3788 = vld [vmem:[#allocation13 + $0x468] sm:$0xff]
    %v3789 = vld [vmem:[#allocation13 + $0x470] sm:$0xff]
    %v3790 = vld [vmem:[#allocation13 + $0x478] sm:$0xff]
    %v3791 = vld [vmem:[#allocation13 + $0x480] sm:$0xff]
    %v3792 = vld [vmem:[#allocation13 + $0x488] sm:$0xff]
    %v3793 = vld [vmem:[#allocation13 + $0x490] sm:$0xff]
    %v3794 = vld [vmem:[#allocation13 + $0x498] sm:$0xff]
    %v3795 = vld [vmem:[#allocation13 + $0x4a0] sm:$0xff]
    %v3796 = vld [vmem:[#allocation13 + $0x4a8] sm:$0xff]
    %v3797 = vld [vmem:[#allocation13 + $0x4b0] sm:$0xff]
    %v3798 = vld [vmem:[#allocation13 + $0x4b8] sm:$0xff]
    %v3799 = vld [vmem:[#allocation13 + $0x4c0] sm:$0xff]
    %v3800 = vld [vmem:[#allocation13 + $0x4c8] sm:$0xff]
    %v3801 = vld [vmem:[#allocation13 + $0x4d0] sm:$0xff]
    %v3802 = vld [vmem:[#allocation13 + $0x4d8] sm:$0xff]
    %v3803 = vld [vmem:[#allocation13 + $0x4e0] sm:$0xff]
    %v3804 = vld [vmem:[#allocation13 + $0x4e8] sm:$0xff]
    %v3805 = vld [vmem:[#allocation13 + $0x4f0] sm:$0xff]
    %v3806 = vld [vmem:[#allocation13 + $0x4f8] sm:$0xff]
    %v3807 = vld [vmem:[#allocation13 + $0x500] sm:$0xff]
    %v3808 = vld [vmem:[#allocation13 + $0x508] sm:$0xff]
    %v3809 = vld [vmem:[#allocation13 + $0x510] sm:$0xff]
    %v3810 = vld [vmem:[#allocation13 + $0x518] sm:$0xff]
    %v3811 = vld [vmem:[#allocation13 + $0x520] sm:$0xff]
    %v3812 = vld [vmem:[#allocation13 + $0x528] sm:$0xff]
    %v3813 = vld [vmem:[#allocation13 + $0x530] sm:$0xff]
    %v3814 = vld [vmem:[#allocation13 + $0x538] sm:$0xff]
    %v3815 = vld [vmem:[#allocation13 + $0x540] sm:$0xff]
    %v3816 = vld [vmem:[#allocation13 + $0x548] sm:$0xff]
    %v3817 = vld [vmem:[#allocation13 + $0x550] sm:$0xff]
    %v3818 = vld [vmem:[#allocation13 + $0x558] sm:$0xff]
    %v3819 = vld [vmem:[#allocation13 + $0x560] sm:$0xff]
    %v3820 = vld [vmem:[#allocation13 + $0x568] sm:$0xff]
    %v3821 = vld [vmem:[#allocation13 + $0x570] sm:$0xff]
    %v3822 = vld [vmem:[#allocation13 + $0x578] sm:$0xff]
    %v3823 = vld [vmem:[#allocation13 + $0x580] sm:$0xff]
    %v3824 = vld [vmem:[#allocation13 + $0x588] sm:$0xff]
    %v3825 = vld [vmem:[#allocation13 + $0x590] sm:$0xff]
    %v3826 = vld [vmem:[#allocation13 + $0x598] sm:$0xff]
    %v3827 = vld [vmem:[#allocation13 + $0x5a0] sm:$0xff]
    %v3828 = vld [vmem:[#allocation13 + $0x5a8] sm:$0xff]
    %v3829 = vld [vmem:[#allocation13 + $0x5b0] sm:$0xff]
    %v3830 = vld [vmem:[#allocation13 + $0x5b8] sm:$0xff]
    %v3831 = vld [vmem:[#allocation13 + $0x5c0] sm:$0xff]
    %v3832 = vld [vmem:[#allocation13 + $0x5c8] sm:$0xff]
    %v3833 = vld [vmem:[#allocation13 + $0x5d0] sm:$0xff]
    %v3834 = vld [vmem:[#allocation13 + $0x5d8] sm:$0xff]
    %v3835 = vld [vmem:[#allocation13 + $0x5e0] sm:$0xff]
    %v3836 = vld [vmem:[#allocation13 + $0x5e8] sm:$0xff]
    %v3837 = vld [vmem:[#allocation13 + $0x5f0] sm:$0xff]
    %v3838 = vld [vmem:[#allocation13 + $0x5f8] sm:$0xff]
    %v3839 = vld [vmem:[#allocation13 + $0x600] sm:$0xff]
    %v3840 = vld [vmem:[#allocation13 + $0x608] sm:$0xff]
    %v3841 = vld [vmem:[#allocation13 + $0x610] sm:$0xff]
    %v3842 = vld [vmem:[#allocation13 + $0x618] sm:$0xff]
    %v3843 = vld [vmem:[#allocation13 + $0x620] sm:$0xff]
    %v3844 = vld [vmem:[#allocation13 + $0x628] sm:$0xff]
    %v3845 = vld [vmem:[#allocation13 + $0x630] sm:$0xff]
    %v3846 = vld [vmem:[#allocation13 + $0x638] sm:$0xff]
    %v3847 = vld [vmem:[#allocation13 + $0x640] sm:$0xff]
    %v3848 = vld [vmem:[#allocation13 + $0x648] sm:$0xff]
    %v3849 = vld [vmem:[#allocation13 + $0x650] sm:$0xff]
    %v3850 = vld [vmem:[#allocation13 + $0x658] sm:$0xff]
    %v3851 = vld [vmem:[#allocation13 + $0x660] sm:$0xff]
    %v3852 = vld [vmem:[#allocation13 + $0x668] sm:$0xff]
    %v3853 = vld [vmem:[#allocation13 + $0x670] sm:$0xff]
    %v3854 = vld [vmem:[#allocation13 + $0x678] sm:$0xff]
    %v3855 = vld [vmem:[#allocation13 + $0x680] sm:$0xff]
    %v3856 = vld [vmem:[#allocation13 + $0x688] sm:$0xff]
    %v3857 = vld [vmem:[#allocation13 + $0x690] sm:$0xff]
    %v3858 = vld [vmem:[#allocation13 + $0x698] sm:$0xff]
    %v3859 = vld [vmem:[#allocation13 + $0x6a0] sm:$0xff]
    %v3860 = vld [vmem:[#allocation13 + $0x6a8] sm:$0xff]
    %v3861 = vld [vmem:[#allocation13 + $0x6b0] sm:$0xff]
    %v3862 = vld [vmem:[#allocation13 + $0x6b8] sm:$0xff]
    %v3863 = vld [vmem:[#allocation13 + $0x6c0] sm:$0xff]
    %v3864 = vld [vmem:[#allocation13 + $0x6c8] sm:$0xff]
    %v3865 = vld [vmem:[#allocation13 + $0x6d0] sm:$0xff]
    %v3866 = vld [vmem:[#allocation13 + $0x6d8] sm:$0xff]
    %v3867 = vld [vmem:[#allocation13 + $0x6e0] sm:$0xff]
    %v3868 = vld [vmem:[#allocation13 + $0x6e8] sm:$0xff]
    %v3869 = vld [vmem:[#allocation13 + $0x6f0] sm:$0xff]
    %v3870 = vld [vmem:[#allocation13 + $0x6f8] sm:$0xff]
    %v3871 = vld [vmem:[#allocation13 + $0x700] sm:$0xff]
    %v3872 = vld [vmem:[#allocation13 + $0x708] sm:$0xff]
    %v3873 = vld [vmem:[#allocation13 + $0x710] sm:$0xff]
    %v3874 = vld [vmem:[#allocation13 + $0x718] sm:$0xff]
    %v3875 = vld [vmem:[#allocation13 + $0x720] sm:$0xff]
    %v3876 = vld [vmem:[#allocation13 + $0x728] sm:$0xff]
    %v3877 = vld [vmem:[#allocation13 + $0x730] sm:$0xff]
    %v3878 = vld [vmem:[#allocation13 + $0x738] sm:$0xff]
    %v3879 = vld [vmem:[#allocation13 + $0x740] sm:$0xff]
    %v3880 = vld [vmem:[#allocation13 + $0x748] sm:$0xff]
    %v3881 = vld [vmem:[#allocation13 + $0x750] sm:$0xff]
    %v3882 = vld [vmem:[#allocation13 + $0x758] sm:$0xff]
    %v3883 = vld [vmem:[#allocation13 + $0x760] sm:$0xff]
    %v3884 = vld [vmem:[#allocation13 + $0x768] sm:$0xff]
    %v3885 = vld [vmem:[#allocation13 + $0x770] sm:$0xff]
    %v3886 = vld [vmem:[#allocation13 + $0x778] sm:$0xff]
    %v3887 = vld [vmem:[#allocation13 + $0x780] sm:$0xff]
    %v3888 = vld [vmem:[#allocation13 + $0x788] sm:$0xff]
    %v3889 = vld [vmem:[#allocation13 + $0x790] sm:$0xff]
    %v3890 = vld [vmem:[#allocation13 + $0x798] sm:$0xff]
    %v3891 = vld [vmem:[#allocation13 + $0x7a0] sm:$0xff]
    %v3892 = vld [vmem:[#allocation13 + $0x7a8] sm:$0xff]
    %v3893 = vld [vmem:[#allocation13 + $0x7b0] sm:$0xff]
    %v3894 = vld [vmem:[#allocation13 + $0x7b8] sm:$0xff]
    %v3895 = vld [vmem:[#allocation13 + $0x7c0] sm:$0xff]
    %v3896 = vld [vmem:[#allocation13 + $0x7c8] sm:$0xff]
    %v3897 = vld [vmem:[#allocation13 + $0x7d0] sm:$0xff]
    %v3898 = vld [vmem:[#allocation13 + $0x7d8] sm:$0xff]
    %v3899 = vld [vmem:[#allocation13 + $0x7e0] sm:$0xff]
    %v3900 = vld [vmem:[#allocation13 + $0x7e8] sm:$0xff]
    %v3901 = vld [vmem:[#allocation13 + $0x7f0] sm:$0xff]
    %v3902 = vld [vmem:[#allocation13 + $0x7f8] sm:$0xff]
    %v3903 = vld [vmem:[#allocation13 + $0x800] sm:$0xff]
    %v3904 = vld [vmem:[#allocation13 + $0x808] sm:$0xff]
    %v3905 = vld [vmem:[#allocation13 + $0x810] sm:$0xff]
    %v3906 = vld [vmem:[#allocation13 + $0x818] sm:$0xff]
    %v3907 = vld [vmem:[#allocation13 + $0x820] sm:$0xff]
    %v3908 = vld [vmem:[#allocation13 + $0x828] sm:$0xff]
    %v3909 = vld [vmem:[#allocation13 + $0x830] sm:$0xff]
    %v3910 = vld [vmem:[#allocation13 + $0x838] sm:$0xff]
    %v3911 = vld [vmem:[#allocation13 + $0x840] sm:$0xff]
    %v3912 = vld [vmem:[#allocation13 + $0x848] sm:$0xff]
    %v3913 = vld [vmem:[#allocation13 + $0x850] sm:$0xff]
    %v3914 = vld [vmem:[#allocation13 + $0x858] sm:$0xff]
    %v3915 = vld [vmem:[#allocation13 + $0x860] sm:$0xff]
    %v3916 = vld [vmem:[#allocation13 + $0x868] sm:$0xff]
    %v3917 = vld [vmem:[#allocation13 + $0x870] sm:$0xff]
    %v3918 = vld [vmem:[#allocation13 + $0x878] sm:$0xff]
    %v3919 = vld [vmem:[#allocation13 + $0x880] sm:$0xff]
    %v3920 = vld [vmem:[#allocation13 + $0x888] sm:$0xff]
    %v3921 = vld [vmem:[#allocation13 + $0x890] sm:$0xff]
    %v3922 = vld [vmem:[#allocation13 + $0x898] sm:$0xff]
    %v3923 = vld [vmem:[#allocation13 + $0x8a0] sm:$0xff]
    %v3924 = vld [vmem:[#allocation13 + $0x8a8] sm:$0xff]
    %v3925 = vld [vmem:[#allocation13 + $0x8b0] sm:$0xff]
    %v3926 = vld [vmem:[#allocation13 + $0x8b8] sm:$0xff]
    %v3927 = vld [vmem:[#allocation13 + $0x8c0] sm:$0xff]
    %v3928 = vld [vmem:[#allocation13 + $0x8c8] sm:$0xff]
    %v3929 = vld [vmem:[#allocation13 + $0x8d0] sm:$0xff]
    %v3930 = vld [vmem:[#allocation13 + $0x8d8] sm:$0xff]
    %v3931 = vld [vmem:[#allocation13 + $0x8e0] sm:$0xff]
    %v3932 = vld [vmem:[#allocation13 + $0x8e8] sm:$0xff]
    %v3933 = vld [vmem:[#allocation13 + $0x8f0] sm:$0xff]
    %v3934 = vld [vmem:[#allocation13 + $0x8f8] sm:$0xff]
    %v3935 = vld [vmem:[#allocation13 + $0x900] sm:$0xff]
    %v3936 = vld [vmem:[#allocation13 + $0x908] sm:$0xff]
    %v3937 = vld [vmem:[#allocation13 + $0x910] sm:$0xff]
    %v3938 = vld [vmem:[#allocation13 + $0x918] sm:$0xff]
    %v3939 = vld [vmem:[#allocation13 + $0x920] sm:$0xff]
    %v3940 = vld [vmem:[#allocation13 + $0x928] sm:$0xff]
    %v3941 = vld [vmem:[#allocation13 + $0x930] sm:$0xff]
    %v3942 = vld [vmem:[#allocation13 + $0x938] sm:$0xff]
    %v3943 = vld [vmem:[#allocation13 + $0x940] sm:$0xff]
    %v3944 = vld [vmem:[#allocation13 + $0x948] sm:$0xff]
    %v3945 = vld [vmem:[#allocation13 + $0x950] sm:$0xff]
    %v3946 = vld [vmem:[#allocation13 + $0x958] sm:$0xff]
    %v3947 = vld [vmem:[#allocation13 + $0x960] sm:$0xff]
    %v3948 = vld [vmem:[#allocation13 + $0x968] sm:$0xff]
    %v3949 = vld [vmem:[#allocation13 + $0x970] sm:$0xff]
    %v3950 = vld [vmem:[#allocation13 + $0x978] sm:$0xff]
    %v3951 = vld [vmem:[#allocation13 + $0x980] sm:$0xff]
    %v3952 = vld [vmem:[#allocation13 + $0x988] sm:$0xff]
    %v3953 = vld [vmem:[#allocation13 + $0x990] sm:$0xff]
    %v3954 = vld [vmem:[#allocation13 + $0x998] sm:$0xff]
    %v3955 = vld [vmem:[#allocation13 + $0x9a0] sm:$0xff]
    %v3956 = vld [vmem:[#allocation13 + $0x9a8] sm:$0xff]
    %v3957 = vld [vmem:[#allocation13 + $0x9b0] sm:$0xff]
    %v3958 = vld [vmem:[#allocation13 + $0x9b8] sm:$0xff]
    %v3959 = vld [vmem:[#allocation13 + $0x9c0] sm:$0xff]
    %v3960 = vld [vmem:[#allocation13 + $0x9c8] sm:$0xff]
    %v3961 = vld [vmem:[#allocation13 + $0x9d0] sm:$0xff]
    %v3962 = vld [vmem:[#allocation13 + $0x9d8] sm:$0xff]
    %v3963 = vld [vmem:[#allocation13 + $0x9e0] sm:$0xff]
    %v3964 = vld [vmem:[#allocation13 + $0x9e8] sm:$0xff]
    %v3965 = vld [vmem:[#allocation13 + $0x9f0] sm:$0xff]
    %v3966 = vld [vmem:[#allocation13 + $0x9f8] sm:$0xff]
    %v3967 = vld [vmem:[#allocation14] sm:$0xf]
    %v3969 = vperm.slane %v3967, 0
    %v3970 = vperm.slane %v3967, 1
    %v3971 = vperm.slane %v3967, 2
    %v3972 = vperm.slane %v3967, 3
    %v3997 = vunpack.c.l.b16 %v3627
    %v3998 = vunpack.c.l.b16 %v3628
    %v3999 = vunpack.c.l.b16 %v3629
    %v4000 = vunpack.c.l.b16 %v3630
    %v4001 = vunpack.c.l.b16 %v3631
    %v4002 = vunpack.c.l.b16 %v3632
    %v4003 = vunpack.c.l.b16 %v3633
    %v4004 = vunpack.c.l.b16 %v3634
    %v4005 = vunpack.c.l.b16 %v3635
    %v4006 = vunpack.c.l.b16 %v3636
    %v4007 = vunpack.c.l.b16 %v3637
    %v4008 = vunpack.c.l.b16 %v3638
    %v4009 = vunpack.c.l.b16 %v3639
    %v4010 = vunpack.c.l.b16 %v3640
    %v4011 = vunpack.c.l.b16 %v3641
    %v4012 = vunpack.c.l.b16 %v3642
    %v4013 = vunpack.c.l.b16 %v3643
    %v4014 = vunpack.c.l.b16 %v3644
    %v4015 = vunpack.c.l.b16 %v3645
    %v4016 = vunpack.c.l.b16 %v3646
    %v4017 = vsel %vm929, %v4007, %v3997
    %v4018 = vsel %vm929, %v4008, %v3998
    %v4019 = vsel %vm929, %v4009, %v3999
    %v4020 = vsel %vm929, %v4010, %v4000
    %v4021 = vsel %vm929, %v4011, %v4001
    %v4022 = vsel %vm929, %v4012, %v4002
    %v4023 = vsel %vm929, %v4013, %v4003
    %v4024 = vsel %vm929, %v4014, %v4004
    %v4025 = vsel %vm929, %v4015, %v4005
    %v4026 = vsel %vm929, %v4016, %v4006
    %v4027 = vpack.c.b16 %v4017, %v4017
    %v4028 = vpack.c.b16 %v4018, %v4018
    %v4029 = vpack.c.b16 %v4019, %v4019
    %v4030 = vpack.c.b16 %v4020, %v4020
    %v4031 = vpack.c.b16 %v4021, %v4021
    %v4032 = vpack.c.b16 %v4022, %v4022
    %v4033 = vpack.c.b16 %v4023, %v4023
    %v4034 = vpack.c.b16 %v4024, %v4024
    %v4035 = vpack.c.b16 %v4025, %v4025
    %v4036 = vpack.c.b16 %v4026, %v4026
    %v4367 = vunpack.c.l.b16 %v3647
    %v4368 = vunpack.c.h.b16 %v3647
    %v4369 = vunpack.c.l.b16 %v3648
    %v4370 = vunpack.c.h.b16 %v3648
    %v4371 = vunpack.c.l.b16 %v3649
    %v4372 = vunpack.c.h.b16 %v3649
    %v4373 = vunpack.c.l.b16 %v3650
    %v4374 = vunpack.c.h.b16 %v3650
    %v4375 = vunpack.c.l.b16 %v3651
    %v4376 = vunpack.c.h.b16 %v3651
    %v4377 = vunpack.c.l.b16 %v3652
    %v4378 = vunpack.c.h.b16 %v3652
    %v4379 = vunpack.c.l.b16 %v3653
    %v4380 = vunpack.c.h.b16 %v3653
    %v4381 = vunpack.c.l.b16 %v3654
    %v4382 = vunpack.c.h.b16 %v3654
    %v4383 = vunpack.c.l.b16 %v3655
    %v4384 = vunpack.c.h.b16 %v3655
    %v4385 = vunpack.c.l.b16 %v3656
    %v4386 = vunpack.c.h.b16 %v3656
    %v4387 = vunpack.c.l.b16 %v3657
    %v4388 = vunpack.c.h.b16 %v3657
    %v4389 = vunpack.c.l.b16 %v3658
    %v4390 = vunpack.c.h.b16 %v3658
    %v4391 = vunpack.c.l.b16 %v3659
    %v4392 = vunpack.c.h.b16 %v3659
    %v4393 = vunpack.c.l.b16 %v3660
    %v4394 = vunpack.c.h.b16 %v3660
    %v4395 = vunpack.c.l.b16 %v3661
    %v4396 = vunpack.c.h.b16 %v3661
    %v4397 = vunpack.c.l.b16 %v3662
    %v4398 = vunpack.c.h.b16 %v3662
    %v4399 = vunpack.c.l.b16 %v3663
    %v4400 = vunpack.c.h.b16 %v3663
    %v4401 = vunpack.c.l.b16 %v3664
    %v4402 = vunpack.c.h.b16 %v3664
    %v4403 = vunpack.c.l.b16 %v3665
    %v4404 = vunpack.c.h.b16 %v3665
    %v4405 = vunpack.c.l.b16 %v3666
    %v4406 = vunpack.c.h.b16 %v3666
    %v4407 = vunpack.c.l.b16 %v3667
    %v4408 = vunpack.c.h.b16 %v3667
    %v4409 = vunpack.c.l.b16 %v3668
    %v4410 = vunpack.c.h.b16 %v3668
    %v4411 = vunpack.c.l.b16 %v3669
    %v4412 = vunpack.c.h.b16 %v3669
    %v4413 = vunpack.c.l.b16 %v3670
    %v4414 = vunpack.c.h.b16 %v3670
    %v4415 = vunpack.c.l.b16 %v3671
    %v4416 = vunpack.c.h.b16 %v3671
    %v4417 = vunpack.c.l.b16 %v3672
    %v4418 = vunpack.c.h.b16 %v3672
    %v4419 = vunpack.c.l.b16 %v3673
    %v4420 = vunpack.c.h.b16 %v3673
    %v4421 = vunpack.c.l.b16 %v3674
    %v4422 = vunpack.c.h.b16 %v3674
    %v4423 = vunpack.c.l.b16 %v3675
    %v4424 = vunpack.c.h.b16 %v3675
    %v4425 = vunpack.c.l.b16 %v3676
    %v4426 = vunpack.c.h.b16 %v3676
    %v4427 = vunpack.c.l.b16 %v3677
    %v4428 = vunpack.c.h.b16 %v3677
    %v4429 = vunpack.c.l.b16 %v3678
    %v4430 = vunpack.c.h.b16 %v3678
    %v4431 = vunpack.c.l.b16 %v3679
    %v4432 = vunpack.c.h.b16 %v3679
    %v4433 = vunpack.c.l.b16 %v3680
    %v4434 = vunpack.c.h.b16 %v3680
    %v4435 = vunpack.c.l.b16 %v3681
    %v4436 = vunpack.c.h.b16 %v3681
    %v4437 = vunpack.c.l.b16 %v3682
    %v4438 = vunpack.c.h.b16 %v3682
    %v4439 = vunpack.c.l.b16 %v3683
    %v4440 = vunpack.c.h.b16 %v3683
    %v4441 = vunpack.c.l.b16 %v3684
    %v4442 = vunpack.c.h.b16 %v3684
    %v4443 = vunpack.c.l.b16 %v3685
    %v4444 = vunpack.c.h.b16 %v3685
    %v4445 = vunpack.c.l.b16 %v3686
    %v4446 = vunpack.c.h.b16 %v3686
    %v4447 = vunpack.c.l.b16 %v3687
    %v4448 = vunpack.c.h.b16 %v3687
    %v4449 = vunpack.c.l.b16 %v3688
    %v4450 = vunpack.c.h.b16 %v3688
    %v4451 = vunpack.c.l.b16 %v3689
    %v4452 = vunpack.c.h.b16 %v3689
    %v4453 = vunpack.c.l.b16 %v3690
    %v4454 = vunpack.c.h.b16 %v3690
    %v4455 = vunpack.c.l.b16 %v3691
    %v4456 = vunpack.c.h.b16 %v3691
    %v4457 = vunpack.c.l.b16 %v3692
    %v4458 = vunpack.c.h.b16 %v3692
    %v4459 = vunpack.c.l.b16 %v3693
    %v4460 = vunpack.c.h.b16 %v3693
    %v4461 = vunpack.c.l.b16 %v3694
    %v4462 = vunpack.c.h.b16 %v3694
    %v4463 = vunpack.c.l.b16 %v3695
    %v4464 = vunpack.c.h.b16 %v3695
    %v4465 = vunpack.c.l.b16 %v3696
    %v4466 = vunpack.c.h.b16 %v3696
    %v4467 = vunpack.c.l.b16 %v3697
    %v4468 = vunpack.c.h.b16 %v3697
    %v4469 = vunpack.c.l.b16 %v3698
    %v4470 = vunpack.c.h.b16 %v3698
    %v4471 = vunpack.c.l.b16 %v3699
    %v4472 = vunpack.c.h.b16 %v3699
    %v4473 = vunpack.c.l.b16 %v3700
    %v4474 = vunpack.c.h.b16 %v3700
    %v4475 = vunpack.c.l.b16 %v3701
    %v4476 = vunpack.c.h.b16 %v3701
    %v4477 = vunpack.c.l.b16 %v3702
    %v4478 = vunpack.c.h.b16 %v3702
    %v4479 = vunpack.c.l.b16 %v3703
    %v4480 = vunpack.c.h.b16 %v3703
    %v4481 = vunpack.c.l.b16 %v3704
    %v4482 = vunpack.c.h.b16 %v3704
    %v4483 = vunpack.c.l.b16 %v3705
    %v4484 = vunpack.c.h.b16 %v3705
    %v4485 = vunpack.c.l.b16 %v3706
    %v4486 = vunpack.c.h.b16 %v3706
    %v4487 = vunpack.c.l.b16 %v3707
    %v4488 = vunpack.c.h.b16 %v3707
    %v4489 = vunpack.c.l.b16 %v3708
    %v4490 = vunpack.c.h.b16 %v3708
    %v4491 = vunpack.c.l.b16 %v3709
    %v4492 = vunpack.c.h.b16 %v3709
    %v4493 = vunpack.c.l.b16 %v3710
    %v4494 = vunpack.c.h.b16 %v3710
    %v4495 = vunpack.c.l.b16 %v3711
    %v4496 = vunpack.c.h.b16 %v3711
    %v4497 = vunpack.c.l.b16 %v3712
    %v4498 = vunpack.c.h.b16 %v3712
    %v4499 = vunpack.c.l.b16 %v3713
    %v4500 = vunpack.c.h.b16 %v3713
    %v4501 = vunpack.c.l.b16 %v3714
    %v4502 = vunpack.c.h.b16 %v3714
    %v4503 = vunpack.c.l.b16 %v3715
    %v4504 = vunpack.c.h.b16 %v3715
    %v4505 = vunpack.c.l.b16 %v3716
    %v4506 = vunpack.c.h.b16 %v3716
    %v4507 = vunpack.c.l.b16 %v3717
    %v4508 = vunpack.c.h.b16 %v3717
    %v4509 = vunpack.c.l.b16 %v3718
    %v4510 = vunpack.c.h.b16 %v3718
    %v4511 = vunpack.c.l.b16 %v3719
    %v4512 = vunpack.c.h.b16 %v3719
    %v4513 = vunpack.c.l.b16 %v3720
    %v4514 = vunpack.c.h.b16 %v3720
    %v4515 = vunpack.c.l.b16 %v3721
    %v4516 = vunpack.c.h.b16 %v3721
    %v4517 = vunpack.c.l.b16 %v3722
    %v4518 = vunpack.c.h.b16 %v3722
    %v4519 = vunpack.c.l.b16 %v3723
    %v4520 = vunpack.c.h.b16 %v3723
    %v4521 = vunpack.c.l.b16 %v3724
    %v4522 = vunpack.c.h.b16 %v3724
    %v4523 = vunpack.c.l.b16 %v3725
    %v4524 = vunpack.c.h.b16 %v3725
    %v4525 = vunpack.c.l.b16 %v3726
    %v4526 = vunpack.c.h.b16 %v3726
    %v4527 = vunpack.c.l.b16 %v3727
    %v4528 = vunpack.c.h.b16 %v3727
    %v4529 = vunpack.c.l.b16 %v3728
    %v4530 = vunpack.c.h.b16 %v3728
    %v4531 = vunpack.c.l.b16 %v3729
    %v4532 = vunpack.c.h.b16 %v3729
    %v4533 = vunpack.c.l.b16 %v3730
    %v4534 = vunpack.c.h.b16 %v3730
    %v4535 = vunpack.c.l.b16 %v3731
    %v4536 = vunpack.c.h.b16 %v3731
    %v4537 = vunpack.c.l.b16 %v3732
    %v4538 = vunpack.c.h.b16 %v3732
    %v4539 = vunpack.c.l.b16 %v3733
    %v4540 = vunpack.c.h.b16 %v3733
    %v4541 = vunpack.c.l.b16 %v3734
    %v4542 = vunpack.c.h.b16 %v3734
    %v4543 = vunpack.c.l.b16 %v3735
    %v4544 = vunpack.c.h.b16 %v3735
    %v4545 = vunpack.c.l.b16 %v3736
    %v4546 = vunpack.c.h.b16 %v3736
    %v4547 = vunpack.c.l.b16 %v3737
    %v4548 = vunpack.c.h.b16 %v3737
    %v4549 = vunpack.c.l.b16 %v3738
    %v4550 = vunpack.c.h.b16 %v3738
    %v4551 = vunpack.c.l.b16 %v3739
    %v4552 = vunpack.c.h.b16 %v3739
    %v4553 = vunpack.c.l.b16 %v3740
    %v4554 = vunpack.c.h.b16 %v3740
    %v4555 = vunpack.c.l.b16 %v3741
    %v4556 = vunpack.c.h.b16 %v3741
    %v4557 = vunpack.c.l.b16 %v3742
    %v4558 = vunpack.c.h.b16 %v3742
    %v4559 = vunpack.c.l.b16 %v3743
    %v4560 = vunpack.c.h.b16 %v3743
    %v4561 = vunpack.c.l.b16 %v3744
    %v4562 = vunpack.c.h.b16 %v3744
    %v4563 = vunpack.c.l.b16 %v3745
    %v4564 = vunpack.c.h.b16 %v3745
    %v4565 = vunpack.c.l.b16 %v3746
    %v4566 = vunpack.c.h.b16 %v3746
    %v4567 = vunpack.c.l.b16 %v3747
    %v4568 = vunpack.c.h.b16 %v3747
    %v4569 = vunpack.c.l.b16 %v3748
    %v4570 = vunpack.c.h.b16 %v3748
    %v4571 = vunpack.c.l.b16 %v3749
    %v4572 = vunpack.c.h.b16 %v3749
    %v4573 = vunpack.c.l.b16 %v3750
    %v4574 = vunpack.c.h.b16 %v3750
    %v4575 = vunpack.c.l.b16 %v3751
    %v4576 = vunpack.c.h.b16 %v3751
    %v4577 = vunpack.c.l.b16 %v3752
    %v4578 = vunpack.c.h.b16 %v3752
    %v4579 = vunpack.c.l.b16 %v3753
    %v4580 = vunpack.c.h.b16 %v3753
    %v4581 = vunpack.c.l.b16 %v3754
    %v4582 = vunpack.c.h.b16 %v3754
    %v4583 = vunpack.c.l.b16 %v3755
    %v4584 = vunpack.c.h.b16 %v3755
    %v4585 = vunpack.c.l.b16 %v3756
    %v4586 = vunpack.c.h.b16 %v3756
    %v4587 = vunpack.c.l.b16 %v3757
    %v4588 = vunpack.c.h.b16 %v3757
    %v4589 = vunpack.c.l.b16 %v3758
    %v4590 = vunpack.c.h.b16 %v3758
    %v4591 = vunpack.c.l.b16 %v3759
    %v4592 = vunpack.c.h.b16 %v3759
    %v4593 = vunpack.c.l.b16 %v3760
    %v4594 = vunpack.c.h.b16 %v3760
    %v4595 = vunpack.c.l.b16 %v3761
    %v4596 = vunpack.c.h.b16 %v3761
    %v4597 = vunpack.c.l.b16 %v3762
    %v4598 = vunpack.c.h.b16 %v3762
    %v4599 = vunpack.c.l.b16 %v3763
    %v4600 = vunpack.c.h.b16 %v3763
    %v4601 = vunpack.c.l.b16 %v3764
    %v4602 = vunpack.c.h.b16 %v3764
    %v4603 = vunpack.c.l.b16 %v3765
    %v4604 = vunpack.c.h.b16 %v3765
    %v4605 = vunpack.c.l.b16 %v3766
    %v4606 = vunpack.c.h.b16 %v3766
    %v4607 = vunpack.c.l.b16 %v3767
    %v4608 = vunpack.c.h.b16 %v3767
    %v4609 = vunpack.c.l.b16 %v3768
    %v4610 = vunpack.c.h.b16 %v3768
    %v4611 = vunpack.c.l.b16 %v3769
    %v4612 = vunpack.c.h.b16 %v3769
    %v4613 = vunpack.c.l.b16 %v3770
    %v4614 = vunpack.c.h.b16 %v3770
    %v4615 = vunpack.c.l.b16 %v3771
    %v4616 = vunpack.c.h.b16 %v3771
    %v4617 = vunpack.c.l.b16 %v3772
    %v4618 = vunpack.c.h.b16 %v3772
    %v4619 = vunpack.c.l.b16 %v3773
    %v4620 = vunpack.c.h.b16 %v3773
    %v4621 = vunpack.c.l.b16 %v3774
    %v4622 = vunpack.c.h.b16 %v3774
    %v4623 = vunpack.c.l.b16 %v3775
    %v4624 = vunpack.c.h.b16 %v3775
    %v4625 = vunpack.c.l.b16 %v3776
    %v4626 = vunpack.c.h.b16 %v3776
    %v4627 = vunpack.c.l.b16 %v3777
    %v4628 = vunpack.c.h.b16 %v3777
    %v4629 = vunpack.c.l.b16 %v3778
    %v4630 = vunpack.c.h.b16 %v3778
    %v4631 = vunpack.c.l.b16 %v3779
    %v4632 = vunpack.c.h.b16 %v3779
    %v4633 = vunpack.c.l.b16 %v3780
    %v4634 = vunpack.c.h.b16 %v3780
    %v4635 = vunpack.c.l.b16 %v3781
    %v4636 = vunpack.c.h.b16 %v3781
    %v4637 = vunpack.c.l.b16 %v3782
    %v4638 = vunpack.c.h.b16 %v3782
    %v4639 = vunpack.c.l.b16 %v3783
    %v4640 = vunpack.c.h.b16 %v3783
    %v4641 = vunpack.c.l.b16 %v3784
    %v4642 = vunpack.c.h.b16 %v3784
    %v4643 = vunpack.c.l.b16 %v3785
    %v4644 = vunpack.c.h.b16 %v3785
    %v4645 = vunpack.c.l.b16 %v3786
    %v4646 = vunpack.c.h.b16 %v3786
    %v4647 = vunpack.c.l.b16 %v3787
    %v4648 = vunpack.c.h.b16 %v3787
    %v4649 = vunpack.c.l.b16 %v3788
    %v4650 = vunpack.c.h.b16 %v3788
    %v4651 = vunpack.c.l.b16 %v3789
    %v4652 = vunpack.c.h.b16 %v3789
    %v4653 = vunpack.c.l.b16 %v3790
    %v4654 = vunpack.c.h.b16 %v3790
    %v4655 = vunpack.c.l.b16 %v3791
    %v4656 = vunpack.c.h.b16 %v3791
    %v4657 = vunpack.c.l.b16 %v3792
    %v4658 = vunpack.c.h.b16 %v3792
    %v4659 = vunpack.c.l.b16 %v3793
    %v4660 = vunpack.c.h.b16 %v3793
    %v4661 = vunpack.c.l.b16 %v3794
    %v4662 = vunpack.c.h.b16 %v3794
    %v4663 = vunpack.c.l.b16 %v3795
    %v4664 = vunpack.c.h.b16 %v3795
    %v4665 = vunpack.c.l.b16 %v3796
    %v4666 = vunpack.c.h.b16 %v3796
    %v4667 = vunpack.c.l.b16 %v3797
    %v4668 = vunpack.c.h.b16 %v3797
    %v4669 = vunpack.c.l.b16 %v3798
    %v4670 = vunpack.c.h.b16 %v3798
    %v4671 = vunpack.c.l.b16 %v3799
    %v4672 = vunpack.c.h.b16 %v3799
    %v4673 = vunpack.c.l.b16 %v3800
    %v4674 = vunpack.c.h.b16 %v3800
    %v4675 = vunpack.c.l.b16 %v3801
    %v4676 = vunpack.c.h.b16 %v3801
    %v4677 = vunpack.c.l.b16 %v3802
    %v4678 = vunpack.c.h.b16 %v3802
    %v4679 = vunpack.c.l.b16 %v3803
    %v4680 = vunpack.c.h.b16 %v3803
    %v4681 = vunpack.c.l.b16 %v3804
    %v4682 = vunpack.c.h.b16 %v3804
    %v4683 = vunpack.c.l.b16 %v3805
    %v4684 = vunpack.c.h.b16 %v3805
    %v4685 = vunpack.c.l.b16 %v3806
    %v4686 = vunpack.c.h.b16 %v3806
    %v4687 = vunpack.c.l.b16 %v3807
    %v4688 = vunpack.c.h.b16 %v3807
    %v4689 = vunpack.c.l.b16 %v3808
    %v4690 = vunpack.c.h.b16 %v3808
    %v4691 = vunpack.c.l.b16 %v3809
    %v4692 = vunpack.c.h.b16 %v3809
    %v4693 = vunpack.c.l.b16 %v3810
    %v4694 = vunpack.c.h.b16 %v3810
    %v4695 = vunpack.c.l.b16 %v3811
    %v4696 = vunpack.c.h.b16 %v3811
    %v4697 = vunpack.c.l.b16 %v3812
    %v4698 = vunpack.c.h.b16 %v3812
    %v4699 = vunpack.c.l.b16 %v3813
    %v4700 = vunpack.c.h.b16 %v3813
    %v4701 = vunpack.c.l.b16 %v3814
    %v4702 = vunpack.c.h.b16 %v3814
    %v4703 = vunpack.c.l.b16 %v3815
    %v4704 = vunpack.c.h.b16 %v3815
    %v4705 = vunpack.c.l.b16 %v3816
    %v4706 = vunpack.c.h.b16 %v3816
    %v4707 = vunpack.c.l.b16 %v3817
    %v4708 = vunpack.c.h.b16 %v3817
    %v4709 = vunpack.c.l.b16 %v3818
    %v4710 = vunpack.c.h.b16 %v3818
    %v4711 = vunpack.c.l.b16 %v3819
    %v4712 = vunpack.c.h.b16 %v3819
    %v4713 = vunpack.c.l.b16 %v3820
    %v4714 = vunpack.c.h.b16 %v3820
    %v4715 = vunpack.c.l.b16 %v3821
    %v4716 = vunpack.c.h.b16 %v3821
    %v4717 = vunpack.c.l.b16 %v3822
    %v4718 = vunpack.c.h.b16 %v3822
    %v4719 = vunpack.c.l.b16 %v3823
    %v4720 = vunpack.c.h.b16 %v3823
    %v4721 = vunpack.c.l.b16 %v3824
    %v4722 = vunpack.c.h.b16 %v3824
    %v4723 = vunpack.c.l.b16 %v3825
    %v4724 = vunpack.c.h.b16 %v3825
    %v4725 = vunpack.c.l.b16 %v3826
    %v4726 = vunpack.c.h.b16 %v3826
    %v4727 = vunpack.c.l.b16 %v3827
    %v4728 = vunpack.c.h.b16 %v3827
    %v4729 = vunpack.c.l.b16 %v3828
    %v4730 = vunpack.c.h.b16 %v3828
    %v4731 = vunpack.c.l.b16 %v3829
    %v4732 = vunpack.c.h.b16 %v3829
    %v4733 = vunpack.c.l.b16 %v3830
    %v4734 = vunpack.c.h.b16 %v3830
    %v4735 = vunpack.c.l.b16 %v3831
    %v4736 = vunpack.c.h.b16 %v3831
    %v4737 = vunpack.c.l.b16 %v3832
    %v4738 = vunpack.c.h.b16 %v3832
    %v4739 = vunpack.c.l.b16 %v3833
    %v4740 = vunpack.c.h.b16 %v3833
    %v4741 = vunpack.c.l.b16 %v3834
    %v4742 = vunpack.c.h.b16 %v3834
    %v4743 = vunpack.c.l.b16 %v3835
    %v4744 = vunpack.c.h.b16 %v3835
    %v4745 = vunpack.c.l.b16 %v3836
    %v4746 = vunpack.c.h.b16 %v3836
    %v4747 = vunpack.c.l.b16 %v3837
    %v4748 = vunpack.c.h.b16 %v3837
    %v4749 = vunpack.c.l.b16 %v3838
    %v4750 = vunpack.c.h.b16 %v3838
    %v4751 = vunpack.c.l.b16 %v3839
    %v4752 = vunpack.c.h.b16 %v3839
    %v4753 = vunpack.c.l.b16 %v3840
    %v4754 = vunpack.c.h.b16 %v3840
    %v4755 = vunpack.c.l.b16 %v3841
    %v4756 = vunpack.c.h.b16 %v3841
    %v4757 = vunpack.c.l.b16 %v3842
    %v4758 = vunpack.c.h.b16 %v3842
    %v4759 = vunpack.c.l.b16 %v3843
    %v4760 = vunpack.c.h.b16 %v3843
    %v4761 = vunpack.c.l.b16 %v3844
    %v4762 = vunpack.c.h.b16 %v3844
    %v4763 = vunpack.c.l.b16 %v3845
    %v4764 = vunpack.c.h.b16 %v3845
    %v4765 = vunpack.c.l.b16 %v3846
    %v4766 = vunpack.c.h.b16 %v3846
    %v4767 = vunpack.c.l.b16 %v3847
    %v4768 = vunpack.c.h.b16 %v3847
    %v4769 = vunpack.c.l.b16 %v3848
    %v4770 = vunpack.c.h.b16 %v3848
    %v4771 = vunpack.c.l.b16 %v3849
    %v4772 = vunpack.c.h.b16 %v3849
    %v4773 = vunpack.c.l.b16 %v3850
    %v4774 = vunpack.c.h.b16 %v3850
    %v4775 = vunpack.c.l.b16 %v3851
    %v4776 = vunpack.c.h.b16 %v3851
    %v4777 = vunpack.c.l.b16 %v3852
    %v4778 = vunpack.c.h.b16 %v3852
    %v4779 = vunpack.c.l.b16 %v3853
    %v4780 = vunpack.c.h.b16 %v3853
    %v4781 = vunpack.c.l.b16 %v3854
    %v4782 = vunpack.c.h.b16 %v3854
    %v4783 = vunpack.c.l.b16 %v3855
    %v4784 = vunpack.c.h.b16 %v3855
    %v4785 = vunpack.c.l.b16 %v3856
    %v4786 = vunpack.c.h.b16 %v3856
    %v4787 = vunpack.c.l.b16 %v3857
    %v4788 = vunpack.c.h.b16 %v3857
    %v4789 = vunpack.c.l.b16 %v3858
    %v4790 = vunpack.c.h.b16 %v3858
    %v4791 = vunpack.c.l.b16 %v3859
    %v4792 = vunpack.c.h.b16 %v3859
    %v4793 = vunpack.c.l.b16 %v3860
    %v4794 = vunpack.c.h.b16 %v3860
    %v4795 = vunpack.c.l.b16 %v3861
    %v4796 = vunpack.c.h.b16 %v3861
    %v4797 = vunpack.c.l.b16 %v3862
    %v4798 = vunpack.c.h.b16 %v3862
    %v4799 = vunpack.c.l.b16 %v3863
    %v4800 = vunpack.c.h.b16 %v3863
    %v4801 = vunpack.c.l.b16 %v3864
    %v4802 = vunpack.c.h.b16 %v3864
    %v4803 = vunpack.c.l.b16 %v3865
    %v4804 = vunpack.c.h.b16 %v3865
    %v4805 = vunpack.c.l.b16 %v3866
    %v4806 = vunpack.c.h.b16 %v3866
    %v4807 = vunpack.c.l.b16 %v3867
    %v4808 = vunpack.c.h.b16 %v3867
    %v4809 = vunpack.c.l.b16 %v3868
    %v4810 = vunpack.c.h.b16 %v3868
    %v4811 = vunpack.c.l.b16 %v3869
    %v4812 = vunpack.c.h.b16 %v3869
    %v4813 = vunpack.c.l.b16 %v3870
    %v4814 = vunpack.c.h.b16 %v3870
    %v4815 = vunpack.c.l.b16 %v3871
    %v4816 = vunpack.c.h.b16 %v3871
    %v4817 = vunpack.c.l.b16 %v3872
    %v4818 = vunpack.c.h.b16 %v3872
    %v4819 = vunpack.c.l.b16 %v3873
    %v4820 = vunpack.c.h.b16 %v3873
    %v4821 = vunpack.c.l.b16 %v3874
    %v4822 = vunpack.c.h.b16 %v3874
    %v4823 = vunpack.c.l.b16 %v3875
    %v4824 = vunpack.c.h.b16 %v3875
    %v4825 = vunpack.c.l.b16 %v3876
    %v4826 = vunpack.c.h.b16 %v3876
    %v4827 = vunpack.c.l.b16 %v3877
    %v4828 = vunpack.c.h.b16 %v3877
    %v4829 = vunpack.c.l.b16 %v3878
    %v4830 = vunpack.c.h.b16 %v3878
    %v4831 = vunpack.c.l.b16 %v3879
    %v4832 = vunpack.c.h.b16 %v3879
    %v4833 = vunpack.c.l.b16 %v3880
    %v4834 = vunpack.c.h.b16 %v3880
    %v4835 = vunpack.c.l.b16 %v3881
    %v4836 = vunpack.c.h.b16 %v3881
    %v4837 = vunpack.c.l.b16 %v3882
    %v4838 = vunpack.c.h.b16 %v3882
    %v4839 = vunpack.c.l.b16 %v3883
    %v4840 = vunpack.c.h.b16 %v3883
    %v4841 = vunpack.c.l.b16 %v3884
    %v4842 = vunpack.c.h.b16 %v3884
    %v4843 = vunpack.c.l.b16 %v3885
    %v4844 = vunpack.c.h.b16 %v3885
    %v4845 = vunpack.c.l.b16 %v3886
    %v4846 = vunpack.c.h.b16 %v3886
    %v4847 = vunpack.c.l.b16 %v3887
    %v4848 = vunpack.c.h.b16 %v3887
    %v4849 = vunpack.c.l.b16 %v3888
    %v4850 = vunpack.c.h.b16 %v3888
    %v4851 = vunpack.c.l.b16 %v3889
    %v4852 = vunpack.c.h.b16 %v3889
    %v4853 = vunpack.c.l.b16 %v3890
    %v4854 = vunpack.c.h.b16 %v3890
    %v4855 = vunpack.c.l.b16 %v3891
    %v4856 = vunpack.c.h.b16 %v3891
    %v4857 = vunpack.c.l.b16 %v3892
    %v4858 = vunpack.c.h.b16 %v3892
    %v4859 = vunpack.c.l.b16 %v3893
    %v4860 = vunpack.c.h.b16 %v3893
    %v4861 = vunpack.c.l.b16 %v3894
    %v4862 = vunpack.c.h.b16 %v3894
    %v4863 = vunpack.c.l.b16 %v3895
    %v4864 = vunpack.c.h.b16 %v3895
    %v4865 = vunpack.c.l.b16 %v3896
    %v4866 = vunpack.c.h.b16 %v3896
    %v4867 = vunpack.c.l.b16 %v3897
    %v4868 = vunpack.c.h.b16 %v3897
    %v4869 = vunpack.c.l.b16 %v3898
    %v4870 = vunpack.c.h.b16 %v3898
    %v4871 = vunpack.c.l.b16 %v3899
    %v4872 = vunpack.c.h.b16 %v3899
    %v4873 = vunpack.c.l.b16 %v3900
    %v4874 = vunpack.c.h.b16 %v3900
    %v4875 = vunpack.c.l.b16 %v3901
    %v4876 = vunpack.c.h.b16 %v3901
    %v4877 = vunpack.c.l.b16 %v3902
    %v4878 = vunpack.c.h.b16 %v3902
    %v4879 = vunpack.c.l.b16 %v3903
    %v4880 = vunpack.c.h.b16 %v3903
    %v4881 = vunpack.c.l.b16 %v3904
    %v4882 = vunpack.c.h.b16 %v3904
    %v4883 = vunpack.c.l.b16 %v3905
    %v4884 = vunpack.c.h.b16 %v3905
    %v4885 = vunpack.c.l.b16 %v3906
    %v4886 = vunpack.c.h.b16 %v3906
    %v4887 = vunpack.c.l.b16 %v3907
    %v4888 = vunpack.c.h.b16 %v3907
    %v4889 = vunpack.c.l.b16 %v3908
    %v4890 = vunpack.c.h.b16 %v3908
    %v4891 = vunpack.c.l.b16 %v3909
    %v4892 = vunpack.c.h.b16 %v3909
    %v4893 = vunpack.c.l.b16 %v3910
    %v4894 = vunpack.c.h.b16 %v3910
    %v4895 = vunpack.c.l.b16 %v3911
    %v4896 = vunpack.c.h.b16 %v3911
    %v4897 = vunpack.c.l.b16 %v3912
    %v4898 = vunpack.c.h.b16 %v3912
    %v4899 = vunpack.c.l.b16 %v3913
    %v4900 = vunpack.c.h.b16 %v3913
    %v4901 = vunpack.c.l.b16 %v3914
    %v4902 = vunpack.c.h.b16 %v3914
    %v4903 = vunpack.c.l.b16 %v3915
    %v4904 = vunpack.c.h.b16 %v3915
    %v4905 = vunpack.c.l.b16 %v3916
    %v4906 = vunpack.c.h.b16 %v3916
    %v4907 = vunpack.c.l.b16 %v3917
    %v4908 = vunpack.c.h.b16 %v3917
    %v4909 = vunpack.c.l.b16 %v3918
    %v4910 = vunpack.c.h.b16 %v3918
    %v4911 = vunpack.c.l.b16 %v3919
    %v4912 = vunpack.c.h.b16 %v3919
    %v4913 = vunpack.c.l.b16 %v3920
    %v4914 = vunpack.c.h.b16 %v3920
    %v4915 = vunpack.c.l.b16 %v3921
    %v4916 = vunpack.c.h.b16 %v3921
    %v4917 = vunpack.c.l.b16 %v3922
    %v4918 = vunpack.c.h.b16 %v3922
    %v4919 = vunpack.c.l.b16 %v3923
    %v4920 = vunpack.c.h.b16 %v3923
    %v4921 = vunpack.c.l.b16 %v3924
    %v4922 = vunpack.c.h.b16 %v3924
    %v4923 = vunpack.c.l.b16 %v3925
    %v4924 = vunpack.c.h.b16 %v3925
    %v4925 = vunpack.c.l.b16 %v3926
    %v4926 = vunpack.c.h.b16 %v3926
    %v4927 = vunpack.c.l.b16 %v3927
    %v4928 = vunpack.c.h.b16 %v3927
    %v4929 = vunpack.c.l.b16 %v3928
    %v4930 = vunpack.c.h.b16 %v3928
    %v4931 = vunpack.c.l.b16 %v3929
    %v4932 = vunpack.c.h.b16 %v3929
    %v4933 = vunpack.c.l.b16 %v3930
    %v4934 = vunpack.c.h.b16 %v3930
    %v4935 = vunpack.c.l.b16 %v3931
    %v4936 = vunpack.c.h.b16 %v3931
    %v4937 = vunpack.c.l.b16 %v3932
    %v4938 = vunpack.c.h.b16 %v3932
    %v4939 = vunpack.c.l.b16 %v3933
    %v4940 = vunpack.c.h.b16 %v3933
    %v4941 = vunpack.c.l.b16 %v3934
    %v4942 = vunpack.c.h.b16 %v3934
    %v4943 = vunpack.c.l.b16 %v3935
    %v4944 = vunpack.c.h.b16 %v3935
    %v4945 = vunpack.c.l.b16 %v3936
    %v4946 = vunpack.c.h.b16 %v3936
    %v4947 = vunpack.c.l.b16 %v3937
    %v4948 = vunpack.c.h.b16 %v3937
    %v4949 = vunpack.c.l.b16 %v3938
    %v4950 = vunpack.c.h.b16 %v3938
    %v4951 = vunpack.c.l.b16 %v3939
    %v4952 = vunpack.c.h.b16 %v3939
    %v4953 = vunpack.c.l.b16 %v3940
    %v4954 = vunpack.c.h.b16 %v3940
    %v4955 = vunpack.c.l.b16 %v3941
    %v4956 = vunpack.c.h.b16 %v3941
    %v4957 = vunpack.c.l.b16 %v3942
    %v4958 = vunpack.c.h.b16 %v3942
    %v4959 = vunpack.c.l.b16 %v3943
    %v4960 = vunpack.c.h.b16 %v3943
    %v4961 = vunpack.c.l.b16 %v3944
    %v4962 = vunpack.c.h.b16 %v3944
    %v4963 = vunpack.c.l.b16 %v3945
    %v4964 = vunpack.c.h.b16 %v3945
    %v4965 = vunpack.c.l.b16 %v3946
    %v4966 = vunpack.c.h.b16 %v3946
    %v4967 = vunpack.c.l.b16 %v3947
    %v4968 = vunpack.c.h.b16 %v3947
    %v4969 = vunpack.c.l.b16 %v3948
    %v4970 = vunpack.c.h.b16 %v3948
    %v4971 = vunpack.c.l.b16 %v3949
    %v4972 = vunpack.c.h.b16 %v3949
    %v4973 = vunpack.c.l.b16 %v3950
    %v4974 = vunpack.c.h.b16 %v3950
    %v4975 = vunpack.c.l.b16 %v3951
    %v4976 = vunpack.c.h.b16 %v3951
    %v4977 = vunpack.c.l.b16 %v3952
    %v4978 = vunpack.c.h.b16 %v3952
    %v4979 = vunpack.c.l.b16 %v3953
    %v4980 = vunpack.c.h.b16 %v3953
    %v4981 = vunpack.c.l.b16 %v3954
    %v4982 = vunpack.c.h.b16 %v3954
    %v4983 = vunpack.c.l.b16 %v3955
    %v4984 = vunpack.c.h.b16 %v3955
    %v4985 = vunpack.c.l.b16 %v3956
    %v4986 = vunpack.c.h.b16 %v3956
    %v4987 = vunpack.c.l.b16 %v3957
    %v4988 = vunpack.c.h.b16 %v3957
    %v4989 = vunpack.c.l.b16 %v3958
    %v4990 = vunpack.c.h.b16 %v3958
    %v4991 = vunpack.c.l.b16 %v3959
    %v4992 = vunpack.c.h.b16 %v3959
    %v4993 = vunpack.c.l.b16 %v3960
    %v4994 = vunpack.c.h.b16 %v3960
    %v4995 = vunpack.c.l.b16 %v3961
    %v4996 = vunpack.c.h.b16 %v3961
    %v4997 = vunpack.c.l.b16 %v3962
    %v4998 = vunpack.c.h.b16 %v3962
    %v4999 = vunpack.c.l.b16 %v3963
    %v5000 = vunpack.c.h.b16 %v3963
    %v5001 = vunpack.c.l.b16 %v3964
    %v5002 = vunpack.c.h.b16 %v3964
    %v5003 = vunpack.c.l.b16 %v3965
    %v5004 = vunpack.c.h.b16 %v3965
    %v5005 = vunpack.c.l.b16 %v3966
    %v5006 = vunpack.c.h.b16 %v3966
    %v5007 = vpack.c.b16 %v4371, %v4367
    %v5008 = vpack.c.b16 %v4372, %v4368
    %v5009 = vpack.c.b16 %v4373, %v4369
    %v5010 = vpack.c.b16 %v4374, %v4370
    %v5011 = vpack.c.b16 %v4379, %v4375
    %v5012 = vpack.c.b16 %v4380, %v4376
    %v5013 = vpack.c.b16 %v4381, %v4377
    %v5014 = vpack.c.b16 %v4382, %v4378
    %v5015 = vpack.c.b16 %v4387, %v4383
    %v5016 = vpack.c.b16 %v4388, %v4384
    %v5017 = vpack.c.b16 %v4389, %v4385
    %v5018 = vpack.c.b16 %v4390, %v4386
    %v5019 = vpack.c.b16 %v4395, %v4391
    %v5020 = vpack.c.b16 %v4396, %v4392
    %v5021 = vpack.c.b16 %v4397, %v4393
    %v5022 = vpack.c.b16 %v4398, %v4394
    %v5023 = vpack.c.b16 %v4403, %v4399
    %v5024 = vpack.c.b16 %v4404, %v4400
    %v5025 = vpack.c.b16 %v4405, %v4401
    %v5026 = vpack.c.b16 %v4406, %v4402
    %v5027 = vpack.c.b16 %v4411, %v4407
    %v5028 = vpack.c.b16 %v4412, %v4408
    %v5029 = vpack.c.b16 %v4413, %v4409
    %v5030 = vpack.c.b16 %v4414, %v4410
    %v5031 = vpack.c.b16 %v4419, %v4415
    %v5032 = vpack.c.b16 %v4420, %v4416
    %v5033 = vpack.c.b16 %v4421, %v4417
    %v5034 = vpack.c.b16 %v4422, %v4418
    %v5035 = vpack.c.b16 %v4427, %v4423
    %v5036 = vpack.c.b16 %v4428, %v4424
    %v5037 = vpack.c.b16 %v4429, %v4425
    %v5038 = vpack.c.b16 %v4430, %v4426
    %v5039 = vpack.c.b16 %v4435, %v4431
    %v5040 = vpack.c.b16 %v4436, %v4432
    %v5041 = vpack.c.b16 %v4437, %v4433
    %v5042 = vpack.c.b16 %v4438, %v4434
    %v5043 = vpack.c.b16 %v4443, %v4439
    %v5044 = vpack.c.b16 %v4444, %v4440
    %v5045 = vpack.c.b16 %v4445, %v4441
    %v5046 = vpack.c.b16 %v4446, %v4442
    %v5047 = vpack.c.b16 %v4451, %v4447
    %v5048 = vpack.c.b16 %v4452, %v4448
    %v5049 = vpack.c.b16 %v4453, %v4449
    %v5050 = vpack.c.b16 %v4454, %v4450
    %v5051 = vpack.c.b16 %v4459, %v4455
    %v5052 = vpack.c.b16 %v4460, %v4456
    %v5053 = vpack.c.b16 %v4461, %v4457
    %v5054 = vpack.c.b16 %v4462, %v4458
    %v5055 = vpack.c.b16 %v4467, %v4463
    %v5056 = vpack.c.b16 %v4468, %v4464
    %v5057 = vpack.c.b16 %v4469, %v4465
    %v5058 = vpack.c.b16 %v4470, %v4466
    %v5059 = vpack.c.b16 %v4475, %v4471
    %v5060 = vpack.c.b16 %v4476, %v4472
    %v5061 = vpack.c.b16 %v4477, %v4473
    %v5062 = vpack.c.b16 %v4478, %v4474
    %v5063 = vpack.c.b16 %v4483, %v4479
    %v5064 = vpack.c.b16 %v4484, %v4480
    %v5065 = vpack.c.b16 %v4485, %v4481
    %v5066 = vpack.c.b16 %v4486, %v4482
    %v5067 = vpack.c.b16 %v4491, %v4487
    %v5068 = vpack.c.b16 %v4492, %v4488
    %v5069 = vpack.c.b16 %v4493, %v4489
    %v5070 = vpack.c.b16 %v4494, %v4490
    %v5071 = vpack.c.b16 %v4499, %v4495
    %v5072 = vpack.c.b16 %v4500, %v4496
    %v5073 = vpack.c.b16 %v4501, %v4497
    %v5074 = vpack.c.b16 %v4502, %v4498
    %v5075 = vpack.c.b16 %v4507, %v4503
    %v5076 = vpack.c.b16 %v4508, %v4504
    %v5077 = vpack.c.b16 %v4509, %v4505
    %v5078 = vpack.c.b16 %v4510, %v4506
    %v5079 = vpack.c.b16 %v4515, %v4511
    %v5080 = vpack.c.b16 %v4516, %v4512
    %v5081 = vpack.c.b16 %v4517, %v4513
    %v5082 = vpack.c.b16 %v4518, %v4514
    %v5083 = vpack.c.b16 %v4523, %v4519
    %v5084 = vpack.c.b16 %v4524, %v4520
    %v5085 = vpack.c.b16 %v4525, %v4521
    %v5086 = vpack.c.b16 %v4526, %v4522
    %v5087 = vpack.c.b16 %v4531, %v4527
    %v5088 = vpack.c.b16 %v4532, %v4528
    %v5089 = vpack.c.b16 %v4533, %v4529
    %v5090 = vpack.c.b16 %v4534, %v4530
    %v5091 = vpack.c.b16 %v4539, %v4535
    %v5092 = vpack.c.b16 %v4540, %v4536
    %v5093 = vpack.c.b16 %v4541, %v4537
    %v5094 = vpack.c.b16 %v4542, %v4538
    %v5095 = vpack.c.b16 %v4547, %v4543
    %v5096 = vpack.c.b16 %v4548, %v4544
    %v5097 = vpack.c.b16 %v4549, %v4545
    %v5098 = vpack.c.b16 %v4550, %v4546
    %v5099 = vpack.c.b16 %v4555, %v4551
    %v5100 = vpack.c.b16 %v4556, %v4552
    %v5101 = vpack.c.b16 %v4557, %v4553
    %v5102 = vpack.c.b16 %v4558, %v4554
    %v5103 = vpack.c.b16 %v4563, %v4559
    %v5104 = vpack.c.b16 %v4564, %v4560
    %v5105 = vpack.c.b16 %v4565, %v4561
    %v5106 = vpack.c.b16 %v4566, %v4562
    %v5107 = vpack.c.b16 %v4571, %v4567
    %v5108 = vpack.c.b16 %v4572, %v4568
    %v5109 = vpack.c.b16 %v4573, %v4569
    %v5110 = vpack.c.b16 %v4574, %v4570
    %v5111 = vpack.c.b16 %v4579, %v4575
    %v5112 = vpack.c.b16 %v4580, %v4576
    %v5113 = vpack.c.b16 %v4581, %v4577
    %v5114 = vpack.c.b16 %v4582, %v4578
    %v5115 = vpack.c.b16 %v4587, %v4583
    %v5116 = vpack.c.b16 %v4588, %v4584
    %v5117 = vpack.c.b16 %v4589, %v4585
    %v5118 = vpack.c.b16 %v4590, %v4586
    %v5119 = vpack.c.b16 %v4595, %v4591
    %v5120 = vpack.c.b16 %v4596, %v4592
    %v5121 = vpack.c.b16 %v4597, %v4593
    %v5122 = vpack.c.b16 %v4598, %v4594
    %v5123 = vpack.c.b16 %v4603, %v4599
    %v5124 = vpack.c.b16 %v4604, %v4600
    %v5125 = vpack.c.b16 %v4605, %v4601
    %v5126 = vpack.c.b16 %v4606, %v4602
    %v5127 = vpack.c.b16 %v4611, %v4607
    %v5128 = vpack.c.b16 %v4612, %v4608
    %v5129 = vpack.c.b16 %v4613, %v4609
    %v5130 = vpack.c.b16 %v4614, %v4610
    %v5131 = vpack.c.b16 %v4619, %v4615
    %v5132 = vpack.c.b16 %v4620, %v4616
    %v5133 = vpack.c.b16 %v4621, %v4617
    %v5134 = vpack.c.b16 %v4622, %v4618
    %v5135 = vpack.c.b16 %v4627, %v4623
    %v5136 = vpack.c.b16 %v4628, %v4624
    %v5137 = vpack.c.b16 %v4629, %v4625
    %v5138 = vpack.c.b16 %v4630, %v4626
    %v5139 = vpack.c.b16 %v4635, %v4631
    %v5140 = vpack.c.b16 %v4636, %v4632
    %v5141 = vpack.c.b16 %v4637, %v4633
    %v5142 = vpack.c.b16 %v4638, %v4634
    %v5143 = vpack.c.b16 %v4643, %v4639
    %v5144 = vpack.c.b16 %v4644, %v4640
    %v5145 = vpack.c.b16 %v4645, %v4641
    %v5146 = vpack.c.b16 %v4646, %v4642
    %v5147 = vpack.c.b16 %v4651, %v4647
    %v5148 = vpack.c.b16 %v4652, %v4648
    %v5149 = vpack.c.b16 %v4653, %v4649
    %v5150 = vpack.c.b16 %v4654, %v4650
    %v5151 = vpack.c.b16 %v4659, %v4655
    %v5152 = vpack.c.b16 %v4660, %v4656
    %v5153 = vpack.c.b16 %v4661, %v4657
    %v5154 = vpack.c.b16 %v4662, %v4658
    %v5155 = vpack.c.b16 %v4667, %v4663
    %v5156 = vpack.c.b16 %v4668, %v4664
    %v5157 = vpack.c.b16 %v4669, %v4665
    %v5158 = vpack.c.b16 %v4670, %v4666
    %v5159 = vpack.c.b16 %v4675, %v4671
    %v5160 = vpack.c.b16 %v4676, %v4672
    %v5161 = vpack.c.b16 %v4677, %v4673
    %v5162 = vpack.c.b16 %v4678, %v4674
    %v5163 = vpack.c.b16 %v4683, %v4679
    %v5164 = vpack.c.b16 %v4684, %v4680
    %v5165 = vpack.c.b16 %v4685, %v4681
    %v5166 = vpack.c.b16 %v4686, %v4682
    %v5167 = vpack.c.b16 %v4691, %v4687
    %v5168 = vpack.c.b16 %v4692, %v4688
    %v5169 = vpack.c.b16 %v4693, %v4689
    %v5170 = vpack.c.b16 %v4694, %v4690
    %v5171 = vpack.c.b16 %v4699, %v4695
    %v5172 = vpack.c.b16 %v4700, %v4696
    %v5173 = vpack.c.b16 %v4701, %v4697
    %v5174 = vpack.c.b16 %v4702, %v4698
    %v5175 = vpack.c.b16 %v4707, %v4703
    %v5176 = vpack.c.b16 %v4708, %v4704
    %v5177 = vpack.c.b16 %v4709, %v4705
    %v5178 = vpack.c.b16 %v4710, %v4706
    %v5179 = vpack.c.b16 %v4715, %v4711
    %v5180 = vpack.c.b16 %v4716, %v4712
    %v5181 = vpack.c.b16 %v4717, %v4713
    %v5182 = vpack.c.b16 %v4718, %v4714
    %v5183 = vpack.c.b16 %v4723, %v4719
    %v5184 = vpack.c.b16 %v4724, %v4720
    %v5185 = vpack.c.b16 %v4725, %v4721
    %v5186 = vpack.c.b16 %v4726, %v4722
    %v5187 = vpack.c.b16 %v4731, %v4727
    %v5188 = vpack.c.b16 %v4732, %v4728
    %v5189 = vpack.c.b16 %v4733, %v4729
    %v5190 = vpack.c.b16 %v4734, %v4730
    %v5191 = vpack.c.b16 %v4739, %v4735
    %v5192 = vpack.c.b16 %v4740, %v4736
    %v5193 = vpack.c.b16 %v4741, %v4737
    %v5194 = vpack.c.b16 %v4742, %v4738
    %v5195 = vpack.c.b16 %v4747, %v4743
    %v5196 = vpack.c.b16 %v4748, %v4744
    %v5197 = vpack.c.b16 %v4749, %v4745
    %v5198 = vpack.c.b16 %v4750, %v4746
    %v5199 = vpack.c.b16 %v4755, %v4751
    %v5200 = vpack.c.b16 %v4756, %v4752
    %v5201 = vpack.c.b16 %v4757, %v4753
    %v5202 = vpack.c.b16 %v4758, %v4754
    %v5203 = vpack.c.b16 %v4763, %v4759
    %v5204 = vpack.c.b16 %v4764, %v4760
    %v5205 = vpack.c.b16 %v4765, %v4761
    %v5206 = vpack.c.b16 %v4766, %v4762
    %v5207 = vpack.c.b16 %v4771, %v4767
    %v5208 = vpack.c.b16 %v4772, %v4768
    %v5209 = vpack.c.b16 %v4773, %v4769
    %v5210 = vpack.c.b16 %v4774, %v4770
    %v5211 = vpack.c.b16 %v4779, %v4775
    %v5212 = vpack.c.b16 %v4780, %v4776
    %v5213 = vpack.c.b16 %v4781, %v4777
    %v5214 = vpack.c.b16 %v4782, %v4778
    %v5215 = vpack.c.b16 %v4787, %v4783
    %v5216 = vpack.c.b16 %v4788, %v4784
    %v5217 = vpack.c.b16 %v4789, %v4785
    %v5218 = vpack.c.b16 %v4790, %v4786
    %v5219 = vpack.c.b16 %v4795, %v4791
    %v5220 = vpack.c.b16 %v4796, %v4792
    %v5221 = vpack.c.b16 %v4797, %v4793
    %v5222 = vpack.c.b16 %v4798, %v4794
    %v5223 = vpack.c.b16 %v4803, %v4799
    %v5224 = vpack.c.b16 %v4804, %v4800
    %v5225 = vpack.c.b16 %v4805, %v4801
    %v5226 = vpack.c.b16 %v4806, %v4802
    %v5227 = vpack.c.b16 %v4811, %v4807
    %v5228 = vpack.c.b16 %v4812, %v4808
    %v5229 = vpack.c.b16 %v4813, %v4809
    %v5230 = vpack.c.b16 %v4814, %v4810
    %v5231 = vpack.c.b16 %v4819, %v4815
    %v5232 = vpack.c.b16 %v4820, %v4816
    %v5233 = vpack.c.b16 %v4821, %v4817
    %v5234 = vpack.c.b16 %v4822, %v4818
    %v5235 = vpack.c.b16 %v4827, %v4823
    %v5236 = vpack.c.b16 %v4828, %v4824
    %v5237 = vpack.c.b16 %v4829, %v4825
    %v5238 = vpack.c.b16 %v4830, %v4826
    %v5239 = vpack.c.b16 %v4835, %v4831
    %v5240 = vpack.c.b16 %v4836, %v4832
    %v5241 = vpack.c.b16 %v4837, %v4833
    %v5242 = vpack.c.b16 %v4838, %v4834
    %v5243 = vpack.c.b16 %v4843, %v4839
    %v5244 = vpack.c.b16 %v4844, %v4840
    %v5245 = vpack.c.b16 %v4845, %v4841
    %v5246 = vpack.c.b16 %v4846, %v4842
    %v5247 = vpack.c.b16 %v4851, %v4847
    %v5248 = vpack.c.b16 %v4852, %v4848
    %v5249 = vpack.c.b16 %v4853, %v4849
    %v5250 = vpack.c.b16 %v4854, %v4850
    %v5251 = vpack.c.b16 %v4859, %v4855
    %v5252 = vpack.c.b16 %v4860, %v4856
    %v5253 = vpack.c.b16 %v4861, %v4857
    %v5254 = vpack.c.b16 %v4862, %v4858
    %v5255 = vpack.c.b16 %v4867, %v4863
    %v5256 = vpack.c.b16 %v4868, %v4864
    %v5257 = vpack.c.b16 %v4869, %v4865
    %v5258 = vpack.c.b16 %v4870, %v4866
    %v5259 = vpack.c.b16 %v4875, %v4871
    %v5260 = vpack.c.b16 %v4876, %v4872
    %v5261 = vpack.c.b16 %v4877, %v4873
    %v5262 = vpack.c.b16 %v4878, %v4874
    %v5263 = vpack.c.b16 %v4883, %v4879
    %v5264 = vpack.c.b16 %v4884, %v4880
    %v5265 = vpack.c.b16 %v4885, %v4881
    %v5266 = vpack.c.b16 %v4886, %v4882
    %v5267 = vpack.c.b16 %v4891, %v4887
    %v5268 = vpack.c.b16 %v4892, %v4888
    %v5269 = vpack.c.b16 %v4893, %v4889
    %v5270 = vpack.c.b16 %v4894, %v4890
    %v5271 = vpack.c.b16 %v4899, %v4895
    %v5272 = vpack.c.b16 %v4900, %v4896
    %v5273 = vpack.c.b16 %v4901, %v4897
    %v5274 = vpack.c.b16 %v4902, %v4898
    %v5275 = vpack.c.b16 %v4907, %v4903
    %v5276 = vpack.c.b16 %v4908, %v4904
    %v5277 = vpack.c.b16 %v4909, %v4905
    %v5278 = vpack.c.b16 %v4910, %v4906
    %v5279 = vpack.c.b16 %v4915, %v4911
    %v5280 = vpack.c.b16 %v4916, %v4912
    %v5281 = vpack.c.b16 %v4917, %v4913
    %v5282 = vpack.c.b16 %v4918, %v4914
    %v5283 = vpack.c.b16 %v4923, %v4919
    %v5284 = vpack.c.b16 %v4924, %v4920
    %v5285 = vpack.c.b16 %v4925, %v4921
    %v5286 = vpack.c.b16 %v4926, %v4922
    %v5287 = vpack.c.b16 %v4931, %v4927
    %v5288 = vpack.c.b16 %v4932, %v4928
    %v5289 = vpack.c.b16 %v4933, %v4929
    %v5290 = vpack.c.b16 %v4934, %v4930
    %v5291 = vpack.c.b16 %v4939, %v4935
    %v5292 = vpack.c.b16 %v4940, %v4936
    %v5293 = vpack.c.b16 %v4941, %v4937
    %v5294 = vpack.c.b16 %v4942, %v4938
    %v5295 = vpack.c.b16 %v4947, %v4943
    %v5296 = vpack.c.b16 %v4948, %v4944
    %v5297 = vpack.c.b16 %v4949, %v4945
    %v5298 = vpack.c.b16 %v4950, %v4946
    %v5299 = vpack.c.b16 %v4955, %v4951
    %v5300 = vpack.c.b16 %v4956, %v4952
    %v5301 = vpack.c.b16 %v4957, %v4953
    %v5302 = vpack.c.b16 %v4958, %v4954
    %v5303 = vpack.c.b16 %v4963, %v4959
    %v5304 = vpack.c.b16 %v4964, %v4960
    %v5305 = vpack.c.b16 %v4965, %v4961
    %v5306 = vpack.c.b16 %v4966, %v4962
    %v5307 = vpack.c.b16 %v4971, %v4967
    %v5308 = vpack.c.b16 %v4972, %v4968
    %v5309 = vpack.c.b16 %v4973, %v4969
    %v5310 = vpack.c.b16 %v4974, %v4970
    %v5311 = vpack.c.b16 %v4979, %v4975
    %v5312 = vpack.c.b16 %v4980, %v4976
    %v5313 = vpack.c.b16 %v4981, %v4977
    %v5314 = vpack.c.b16 %v4982, %v4978
    %v5315 = vpack.c.b16 %v4987, %v4983
    %v5316 = vpack.c.b16 %v4988, %v4984
    %v5317 = vpack.c.b16 %v4989, %v4985
    %v5318 = vpack.c.b16 %v4990, %v4986
    %v5319 = vpack.c.b16 %v4995, %v4991
    %v5320 = vpack.c.b16 %v4996, %v4992
    %v5321 = vpack.c.b16 %v4997, %v4993
    %v5322 = vpack.c.b16 %v4998, %v4994
    %v5323 = vpack.c.b16 %v5003, %v4999
    %v5324 = vpack.c.b16 %v5004, %v5000
    %v5325 = vpack.c.b16 %v5005, %v5001
    %v5326 = vpack.c.b16 %v5006, %v5002
    %5647 = vmatpush.bf16.msra.mxu0 %v5035
    %5648 = vmatpush.bf16.msra.mxu0 %v5031
    %5649 = vmatpush.bf16.msra.mxu0 %v5027
    %5650 = vmatpush.bf16.msra.mxu0 %v5023
    %5651 = vmatpush.bf16.msra.mxu0 %v5019
    %5652 = vmatpush.bf16.msra.mxu0 %v5015
    %5653 = vmatpush.bf16.msra.mxu0 %v5011
    %5654 = vmatpush.bf16.msra.mxu0 %v5007
    %5655 = vmatmul.bf16.gmra.mxu0 %v4027
    %v5656 = vpop.f32.mrf.mxu0
    %v5657 = vadd.f32 %v3969, %v5656
    %v5658 = vpop.f32.mrf.mxu0
    %5659 = vdwg.mxu0
    %5660 = vmatpush.bf16.msra.mxu0 %v5067
    %5661 = vmatpush.bf16.msra.mxu0 %v5063
    %5662 = vmatpush.bf16.msra.mxu0 %v5059
    %5663 = vmatpush.bf16.msra.mxu0 %v5055
    %5664 = vmatpush.bf16.msra.mxu0 %v5051
    %5665 = vmatpush.bf16.msra.mxu0 %v5047
    %5666 = vmatpush.bf16.msra.mxu0 %v5043
    %5667 = vmatpush.bf16.msra.mxu0 %v5039
    %5668 = vmatmul.bf16.gmra.mxu0 %v4028
    %v5669 = vpop.f32.mrf.mxu0
    %v5670 = vadd.f32 %v5657, %v5669
    %v5671 = vpop.f32.mrf.mxu0
    %5672 = vdwg.mxu0
    %5673 = vmatpush.bf16.msra.mxu0 %v5099
    %5674 = vmatpush.bf16.msra.mxu0 %v5095
    %5675 = vmatpush.bf16.msra.mxu0 %v5091
    %5676 = vmatpush.bf16.msra.mxu0 %v5087
    %5677 = vmatpush.bf16.msra.mxu0 %v5083
    %5678 = vmatpush.bf16.msra.mxu0 %v5079
    %5679 = vmatpush.bf16.msra.mxu0 %v5075
    %5680 = vmatpush.bf16.msra.mxu0 %v5071
    %5681 = vmatmul.bf16.gmra.mxu0 %v4029
    %v5682 = vpop.f32.mrf.mxu0
    %v5683 = vadd.f32 %v5670, %v5682
    %v5684 = vpop.f32.mrf.mxu0
    %5685 = vdwg.mxu0
    %5686 = vmatpush.bf16.msra.mxu0 %v5131
    %5687 = vmatpush.bf16.msra.mxu0 %v5127
    %5688 = vmatpush.bf16.msra.mxu0 %v5123
    %5689 = vmatpush.bf16.msra.mxu0 %v5119
    %5690 = vmatpush.bf16.msra.mxu0 %v5115
    %5691 = vmatpush.bf16.msra.mxu0 %v5111
    %5692 = vmatpush.bf16.msra.mxu0 %v5107
    %5693 = vmatpush.bf16.msra.mxu0 %v5103
    %5694 = vmatmul.bf16.gmra.mxu0 %v4030
    %v5695 = vpop.f32.mrf.mxu0
    %v5696 = vadd.f32 %v5683, %v5695
    %v5697 = vpop.f32.mrf.mxu0
    %5698 = vdwg.mxu0
    %5699 = vmatpush.bf16.msra.mxu0 %v5163
    %5700 = vmatpush.bf16.msra.mxu0 %v5159
    %5701 = vmatpush.bf16.msra.mxu0 %v5155
    %5702 = vmatpush.bf16.msra.mxu0 %v5151
    %5703 = vmatpush.bf16.msra.mxu0 %v5147
    %5704 = vmatpush.bf16.msra.mxu0 %v5143
    %5705 = vmatpush.bf16.msra.mxu0 %v5139
    %5706 = vmatpush.bf16.msra.mxu0 %v5135
    %5707 = vmatmul.bf16.gmra.mxu0 %v4031
    %v5708 = vpop.f32.mrf.mxu0
    %v5709 = vadd.f32 %v5696, %v5708
    %v5710 = vpop.f32.mrf.mxu0
    %5711 = vdwg.mxu0
    %5712 = vmatpush.bf16.msra.mxu0 %v5195
    %5713 = vmatpush.bf16.msra.mxu0 %v5191
    %5714 = vmatpush.bf16.msra.mxu0 %v5187
    %5715 = vmatpush.bf16.msra.mxu0 %v5183
    %5716 = vmatpush.bf16.msra.mxu0 %v5179
    %5717 = vmatpush.bf16.msra.mxu0 %v5175
    %5718 = vmatpush.bf16.msra.mxu0 %v5171
    %5719 = vmatpush.bf16.msra.mxu0 %v5167
    %5720 = vmatmul.bf16.gmra.mxu0 %v4032
    %v5721 = vpop.f32.mrf.mxu0
    %v5722 = vadd.f32 %v5709, %v5721
    %v5723 = vpop.f32.mrf.mxu0
    %5724 = vdwg.mxu0
    %5725 = vmatpush.bf16.msra.mxu0 %v5227
    %5726 = vmatpush.bf16.msra.mxu0 %v5223
    %5727 = vmatpush.bf16.msra.mxu0 %v5219
    %5728 = vmatpush.bf16.msra.mxu0 %v5215
    %5729 = vmatpush.bf16.msra.mxu0 %v5211
    %5730 = vmatpush.bf16.msra.mxu0 %v5207
    %5731 = vmatpush.bf16.msra.mxu0 %v5203
    %5732 = vmatpush.bf16.msra.mxu0 %v5199
    %5733 = vmatmul.bf16.gmra.mxu0 %v4033
    %v5734 = vpop.f32.mrf.mxu0
    %v5735 = vadd.f32 %v5722, %v5734
    %v5736 = vpop.f32.mrf.mxu0
    %5737 = vdwg.mxu0
    %5738 = vmatpush.bf16.msra.mxu0 %v5259
    %5739 = vmatpush.bf16.msra.mxu0 %v5255
    %5740 = vmatpush.bf16.msra.mxu0 %v5251
    %5741 = vmatpush.bf16.msra.mxu0 %v5247
    %5742 = vmatpush.bf16.msra.mxu0 %v5243
    %5743 = vmatpush.bf16.msra.mxu0 %v5239
    %5744 = vmatpush.bf16.msra.mxu0 %v5235
    %5745 = vmatpush.bf16.msra.mxu0 %v5231
    %5746 = vmatmul.bf16.gmra.mxu0 %v4034
    %v5747 = vpop.f32.mrf.mxu0
    %v5748 = vadd.f32 %v5735, %v5747
    %v5749 = vpop.f32.mrf.mxu0
    %5750 = vdwg.mxu0
    %5751 = vmatpush.bf16.msra.mxu0 %v5291
    %5752 = vmatpush.bf16.msra.mxu0 %v5287
    %5753 = vmatpush.bf16.msra.mxu0 %v5283
    %5754 = vmatpush.bf16.msra.mxu0 %v5279
    %5755 = vmatpush.bf16.msra.mxu0 %v5275
    %5756 = vmatpush.bf16.msra.mxu0 %v5271
    %5757 = vmatpush.bf16.msra.mxu0 %v5267
    %5758 = vmatpush.bf16.msra.mxu0 %v5263
    %5759 = vmatmul.bf16.gmra.mxu0 %v4035
    %v5760 = vpop.f32.mrf.mxu0
    %v5761 = vadd.f32 %v5748, %v5760
    %v5762 = vpop.f32.mrf.mxu0
    %5763 = vdwg.mxu0
    %5764 = vmatpush.bf16.msra.mxu0 %v5323
    %5765 = vmatpush.bf16.msra.mxu0 %v5319
    %5766 = vmatpush.bf16.msra.mxu0 %v5315
    %5767 = vmatpush.bf16.msra.mxu0 %v5311
    %5768 = vmatpush.bf16.msra.mxu0 %v5307
    %5769 = vmatpush.bf16.msra.mxu0 %v5303
    %5770 = vmatpush.bf16.msra.mxu0 %v5299
    %5771 = vmatpush.bf16.msra.mxu0 %v5295
    %5772 = vmatmul.bf16.gmra.mxu0 %v4036
    %v5773 = vpop.f32.mrf.mxu0
    %v5774 = vadd.f32 %v5761, %v5773
    %v5775 = vpop.f32.mrf.mxu0
    %5776 = vdwg.mxu0
    %5777 = vmatpush.bf16.msra.mxu0 %v5036
    %5778 = vmatpush.bf16.msra.mxu0 %v5032
    %5779 = vmatpush.bf16.msra.mxu0 %v5028
    %5780 = vmatpush.bf16.msra.mxu0 %v5024
    %5781 = vmatpush.bf16.msra.mxu0 %v5020
    %5782 = vmatpush.bf16.msra.mxu0 %v5016
    %5783 = vmatpush.bf16.msra.mxu0 %v5012
    %5784 = vmatpush.bf16.msra.mxu0 %v5008
    %5785 = vmatmul.bf16.gmra.mxu0 %v4027
    %v5786 = vpop.f32.mrf.mxu0
    %v5787 = vadd.f32 %v3970, %v5786
    %v5788 = vpop.f32.mrf.mxu0
    %5789 = vdwg.mxu0
    %5790 = vmatpush.bf16.msra.mxu0 %v5068
    %5791 = vmatpush.bf16.msra.mxu0 %v5064
    %5792 = vmatpush.bf16.msra.mxu0 %v5060
    %5793 = vmatpush.bf16.msra.mxu0 %v5056
    %5794 = vmatpush.bf16.msra.mxu0 %v5052
    %5795 = vmatpush.bf16.msra.mxu0 %v5048
    %5796 = vmatpush.bf16.msra.mxu0 %v5044
    %5797 = vmatpush.bf16.msra.mxu0 %v5040
    %5798 = vmatmul.bf16.gmra.mxu0 %v4028
    %v5799 = vpop.f32.mrf.mxu0
    %v5800 = vadd.f32 %v5787, %v5799
    %v5801 = vpop.f32.mrf.mxu0
    %5802 = vdwg.mxu0
    %5803 = vmatpush.bf16.msra.mxu0 %v5100
    %5804 = vmatpush.bf16.msra.mxu0 %v5096
    %5805 = vmatpush.bf16.msra.mxu0 %v5092
    %5806 = vmatpush.bf16.msra.mxu0 %v5088
    %5807 = vmatpush.bf16.msra.mxu0 %v5084
    %5808 = vmatpush.bf16.msra.mxu0 %v5080
    %5809 = vmatpush.bf16.msra.mxu0 %v5076
    %5810 = vmatpush.bf16.msra.mxu0 %v5072
    %5811 = vmatmul.bf16.gmra.mxu0 %v4029
    %v5812 = vpop.f32.mrf.mxu0
    %v5813 = vadd.f32 %v5800, %v5812
    %v5814 = vpop.f32.mrf.mxu0
    %5815 = vdwg.mxu0
    %5816 = vmatpush.bf16.msra.mxu0 %v5132
    %5817 = vmatpush.bf16.msra.mxu0 %v5128
    %5818 = vmatpush.bf16.msra.mxu0 %v5124
    %5819 = vmatpush.bf16.msra.mxu0 %v5120
    %5820 = vmatpush.bf16.msra.mxu0 %v5116
    %5821 = vmatpush.bf16.msra.mxu0 %v5112
    %5822 = vmatpush.bf16.msra.mxu0 %v5108
    %5823 = vmatpush.bf16.msra.mxu0 %v5104
    %5824 = vmatmul.bf16.gmra.mxu0 %v4030
    %v5825 = vpop.f32.mrf.mxu0
    %v5826 = vadd.f32 %v5813, %v5825
    %v5827 = vpop.f32.mrf.mxu0
    %5828 = vdwg.mxu0
    %5829 = vmatpush.bf16.msra.mxu0 %v5164
    %5830 = vmatpush.bf16.msra.mxu0 %v5160
    %5831 = vmatpush.bf16.msra.mxu0 %v5156
    %5832 = vmatpush.bf16.msra.mxu0 %v5152
    %5833 = vmatpush.bf16.msra.mxu0 %v5148
    %5834 = vmatpush.bf16.msra.mxu0 %v5144
    %5835 = vmatpush.bf16.msra.mxu0 %v5140
    %5836 = vmatpush.bf16.msra.mxu0 %v5136
    %5837 = vmatmul.bf16.gmra.mxu0 %v4031
    %v5838 = vpop.f32.mrf.mxu0
    %v5839 = vadd.f32 %v5826, %v5838
    %v5840 = vpop.f32.mrf.mxu0
    %5841 = vdwg.mxu0
    %5842 = vmatpush.bf16.msra.mxu0 %v5196
    %5843 = vmatpush.bf16.msra.mxu0 %v5192
    %5844 = vmatpush.bf16.msra.mxu0 %v5188
    %5845 = vmatpush.bf16.msra.mxu0 %v5184
    %5846 = vmatpush.bf16.msra.mxu0 %v5180
    %5847 = vmatpush.bf16.msra.mxu0 %v5176
    %5848 = vmatpush.bf16.msra.mxu0 %v5172
    %5849 = vmatpush.bf16.msra.mxu0 %v5168
    %5850 = vmatmul.bf16.gmra.mxu0 %v4032
    %v5851 = vpop.f32.mrf.mxu0
    %v5852 = vadd.f32 %v5839, %v5851
    %v5853 = vpop.f32.mrf.mxu0
    %5854 = vdwg.mxu0
    %5855 = vmatpush.bf16.msra.mxu0 %v5228
    %5856 = vmatpush.bf16.msra.mxu0 %v5224
    %5857 = vmatpush.bf16.msra.mxu0 %v5220
    %5858 = vmatpush.bf16.msra.mxu0 %v5216
    %5859 = vmatpush.bf16.msra.mxu0 %v5212
    %5860 = vmatpush.bf16.msra.mxu0 %v5208
    %5861 = vmatpush.bf16.msra.mxu0 %v5204
    %5862 = vmatpush.bf16.msra.mxu0 %v5200
    %5863 = vmatmul.bf16.gmra.mxu0 %v4033
    %v5864 = vpop.f32.mrf.mxu0
    %v5865 = vadd.f32 %v5852, %v5864
    %v5866 = vpop.f32.mrf.mxu0
    %5867 = vdwg.mxu0
    %5868 = vmatpush.bf16.msra.mxu0 %v5260
    %5869 = vmatpush.bf16.msra.mxu0 %v5256
    %5870 = vmatpush.bf16.msra.mxu0 %v5252
    %5871 = vmatpush.bf16.msra.mxu0 %v5248
    %5872 = vmatpush.bf16.msra.mxu0 %v5244
    %5873 = vmatpush.bf16.msra.mxu0 %v5240
    %5874 = vmatpush.bf16.msra.mxu0 %v5236
    %5875 = vmatpush.bf16.msra.mxu0 %v5232
    %5876 = vmatmul.bf16.gmra.mxu0 %v4034
    %v5877 = vpop.f32.mrf.mxu0
    %v5878 = vadd.f32 %v5865, %v5877
    %v5879 = vpop.f32.mrf.mxu0
    %5880 = vdwg.mxu0
    %5881 = vmatpush.bf16.msra.mxu0 %v5292
    %5882 = vmatpush.bf16.msra.mxu0 %v5288
    %5883 = vmatpush.bf16.msra.mxu0 %v5284
    %5884 = vmatpush.bf16.msra.mxu0 %v5280
    %5885 = vmatpush.bf16.msra.mxu0 %v5276
    %5886 = vmatpush.bf16.msra.mxu0 %v5272
    %5887 = vmatpush.bf16.msra.mxu0 %v5268
    %5888 = vmatpush.bf16.msra.mxu0 %v5264
    %5889 = vmatmul.bf16.gmra.mxu0 %v4035
    %v5890 = vpop.f32.mrf.mxu0
    %v5891 = vadd.f32 %v5878, %v5890
    %v5892 = vpop.f32.mrf.mxu0
    %5893 = vdwg.mxu0
    %5894 = vmatpush.bf16.msra.mxu0 %v5324
    %5895 = vmatpush.bf16.msra.mxu0 %v5320
    %5896 = vmatpush.bf16.msra.mxu0 %v5316
    %5897 = vmatpush.bf16.msra.mxu0 %v5312
    %5898 = vmatpush.bf16.msra.mxu0 %v5308
    %5899 = vmatpush.bf16.msra.mxu0 %v5304
    %5900 = vmatpush.bf16.msra.mxu0 %v5300
    %5901 = vmatpush.bf16.msra.mxu0 %v5296
    %5902 = vmatmul.bf16.gmra.mxu0 %v4036
    %v5903 = vpop.f32.mrf.mxu0
    %v5904 = vadd.f32 %v5891, %v5903
    %v5905 = vpop.f32.mrf.mxu0
    %5906 = vdwg.mxu0
    %5907 = vmatpush.bf16.msra.mxu0 %v5037
    %5908 = vmatpush.bf16.msra.mxu0 %v5033
    %5909 = vmatpush.bf16.msra.mxu0 %v5029
    %5910 = vmatpush.bf16.msra.mxu0 %v5025
    %5911 = vmatpush.bf16.msra.mxu0 %v5021
    %5912 = vmatpush.bf16.msra.mxu0 %v5017
    %5913 = vmatpush.bf16.msra.mxu0 %v5013
    %5914 = vmatpush.bf16.msra.mxu0 %v5009
    %5915 = vmatmul.bf16.gmra.mxu0 %v4027
    %v5916 = vpop.f32.mrf.mxu0
    %v5917 = vadd.f32 %v3971, %v5916
    %v5918 = vpop.f32.mrf.mxu0
    %5919 = vdwg.mxu0
    %5920 = vmatpush.bf16.msra.mxu0 %v5069
    %5921 = vmatpush.bf16.msra.mxu0 %v5065
    %5922 = vmatpush.bf16.msra.mxu0 %v5061
    %5923 = vmatpush.bf16.msra.mxu0 %v5057
    %5924 = vmatpush.bf16.msra.mxu0 %v5053
    %5925 = vmatpush.bf16.msra.mxu0 %v5049
    %5926 = vmatpush.bf16.msra.mxu0 %v5045
    %5927 = vmatpush.bf16.msra.mxu0 %v5041
    %5928 = vmatmul.bf16.gmra.mxu0 %v4028
    %v5929 = vpop.f32.mrf.mxu0
    %v5930 = vadd.f32 %v5917, %v5929
    %v5931 = vpop.f32.mrf.mxu0
    %5932 = vdwg.mxu0
    %5933 = vmatpush.bf16.msra.mxu0 %v5101
    %5934 = vmatpush.bf16.msra.mxu0 %v5097
    %5935 = vmatpush.bf16.msra.mxu0 %v5093
    %5936 = vmatpush.bf16.msra.mxu0 %v5089
    %5937 = vmatpush.bf16.msra.mxu0 %v5085
    %5938 = vmatpush.bf16.msra.mxu0 %v5081
    %5939 = vmatpush.bf16.msra.mxu0 %v5077
    %5940 = vmatpush.bf16.msra.mxu0 %v5073
    %5941 = vmatmul.bf16.gmra.mxu0 %v4029
    %v5942 = vpop.f32.mrf.mxu0
    %v5943 = vadd.f32 %v5930, %v5942
    %v5944 = vpop.f32.mrf.mxu0
    %5945 = vdwg.mxu0
    %5946 = vmatpush.bf16.msra.mxu0 %v5133
    %5947 = vmatpush.bf16.msra.mxu0 %v5129
    %5948 = vmatpush.bf16.msra.mxu0 %v5125
    %5949 = vmatpush.bf16.msra.mxu0 %v5121
    %5950 = vmatpush.bf16.msra.mxu0 %v5117
    %5951 = vmatpush.bf16.msra.mxu0 %v5113
    %5952 = vmatpush.bf16.msra.mxu0 %v5109
    %5953 = vmatpush.bf16.msra.mxu0 %v5105
    %5954 = vmatmul.bf16.gmra.mxu0 %v4030
    %v5955 = vpop.f32.mrf.mxu0
    %v5956 = vadd.f32 %v5943, %v5955
    %v5957 = vpop.f32.mrf.mxu0
    %5958 = vdwg.mxu0
    %5959 = vmatpush.bf16.msra.mxu0 %v5165
    %5960 = vmatpush.bf16.msra.mxu0 %v5161
    %5961 = vmatpush.bf16.msra.mxu0 %v5157
    %5962 = vmatpush.bf16.msra.mxu0 %v5153
    %5963 = vmatpush.bf16.msra.mxu0 %v5149
    %5964 = vmatpush.bf16.msra.mxu0 %v5145
    %5965 = vmatpush.bf16.msra.mxu0 %v5141
    %5966 = vmatpush.bf16.msra.mxu0 %v5137
    %5967 = vmatmul.bf16.gmra.mxu0 %v4031
    %v5968 = vpop.f32.mrf.mxu0
    %v5969 = vadd.f32 %v5956, %v5968
    %v5970 = vpop.f32.mrf.mxu0
    %5971 = vdwg.mxu0
    %5972 = vmatpush.bf16.msra.mxu0 %v5197
    %5973 = vmatpush.bf16.msra.mxu0 %v5193
    %5974 = vmatpush.bf16.msra.mxu0 %v5189
    %5975 = vmatpush.bf16.msra.mxu0 %v5185
    %5976 = vmatpush.bf16.msra.mxu0 %v5181
    %5977 = vmatpush.bf16.msra.mxu0 %v5177
    %5978 = vmatpush.bf16.msra.mxu0 %v5173
    %5979 = vmatpush.bf16.msra.mxu0 %v5169
    %5980 = vmatmul.bf16.gmra.mxu0 %v4032
    %v5981 = vpop.f32.mrf.mxu0
    %v5982 = vadd.f32 %v5969, %v5981
    %v5983 = vpop.f32.mrf.mxu0
    %5984 = vdwg.mxu0
    %5985 = vmatpush.bf16.msra.mxu0 %v5229
    %5986 = vmatpush.bf16.msra.mxu0 %v5225
    %5987 = vmatpush.bf16.msra.mxu0 %v5221
    %5988 = vmatpush.bf16.msra.mxu0 %v5217
    %5989 = vmatpush.bf16.msra.mxu0 %v5213
    %5990 = vmatpush.bf16.msra.mxu0 %v5209
    %5991 = vmatpush.bf16.msra.mxu0 %v5205
    %5992 = vmatpush.bf16.msra.mxu0 %v5201
    %5993 = vmatmul.bf16.gmra.mxu0 %v4033
    %v5994 = vpop.f32.mrf.mxu0
    %v5995 = vadd.f32 %v5982, %v5994
    %v5996 = vpop.f32.mrf.mxu0
    %5997 = vdwg.mxu0
    %5998 = vmatpush.bf16.msra.mxu0 %v5261
    %5999 = vmatpush.bf16.msra.mxu0 %v5257
    %6000 = vmatpush.bf16.msra.mxu0 %v5253
    %6001 = vmatpush.bf16.msra.mxu0 %v5249
    %6002 = vmatpush.bf16.msra.mxu0 %v5245
    %6003 = vmatpush.bf16.msra.mxu0 %v5241
    %6004 = vmatpush.bf16.msra.mxu0 %v5237
    %6005 = vmatpush.bf16.msra.mxu0 %v5233
    %6006 = vmatmul.bf16.gmra.mxu0 %v4034
    %v6007 = vpop.f32.mrf.mxu0
    %v6008 = vadd.f32 %v5995, %v6007
    %v6009 = vpop.f32.mrf.mxu0
    %6010 = vdwg.mxu0
    %6011 = vmatpush.bf16.msra.mxu0 %v5293
    %6012 = vmatpush.bf16.msra.mxu0 %v5289
    %6013 = vmatpush.bf16.msra.mxu0 %v5285
    %6014 = vmatpush.bf16.msra.mxu0 %v5281
    %6015 = vmatpush.bf16.msra.mxu0 %v5277
    %6016 = vmatpush.bf16.msra.mxu0 %v5273
    %6017 = vmatpush.bf16.msra.mxu0 %v5269
    %6018 = vmatpush.bf16.msra.mxu0 %v5265
    %6019 = vmatmul.bf16.gmra.mxu0 %v4035
    %v6020 = vpop.f32.mrf.mxu0
    %v6021 = vadd.f32 %v6008, %v6020
    %v6022 = vpop.f32.mrf.mxu0
    %6023 = vdwg.mxu0
    %6024 = vmatpush.bf16.msra.mxu0 %v5325
    %6025 = vmatpush.bf16.msra.mxu0 %v5321
    %6026 = vmatpush.bf16.msra.mxu0 %v5317
    %6027 = vmatpush.bf16.msra.mxu0 %v5313
    %6028 = vmatpush.bf16.msra.mxu0 %v5309
    %6029 = vmatpush.bf16.msra.mxu0 %v5305
    %6030 = vmatpush.bf16.msra.mxu0 %v5301
    %6031 = vmatpush.bf16.msra.mxu0 %v5297
    %6032 = vmatmul.bf16.gmra.mxu0 %v4036
    %v6033 = vpop.f32.mrf.mxu0
    %v6034 = vadd.f32 %v6021, %v6033
    %v6035 = vpop.f32.mrf.mxu0
    %6036 = vdwg.mxu0
    %6037 = vmatpush.bf16.msra.mxu0 %v5038
    %6038 = vmatpush.bf16.msra.mxu0 %v5034
    %6039 = vmatpush.bf16.msra.mxu0 %v5030
    %6040 = vmatpush.bf16.msra.mxu0 %v5026
    %6041 = vmatpush.bf16.msra.mxu0 %v5022
    %6042 = vmatpush.bf16.msra.mxu0 %v5018
    %6043 = vmatpush.bf16.msra.mxu0 %v5014
    %6044 = vmatpush.bf16.msra.mxu0 %v5010
    %6045 = vmatmul.bf16.gmra.mxu0 %v4027
    %v6046 = vpop.f32.mrf.mxu0
    %v6047 = vadd.f32 %v3972, %v6046
    %v6048 = vpop.f32.mrf.mxu0
    %6049 = vdwg.mxu0
    %6050 = vmatpush.bf16.msra.mxu0 %v5070
    %6051 = vmatpush.bf16.msra.mxu0 %v5066
    %6052 = vmatpush.bf16.msra.mxu0 %v5062
    %6053 = vmatpush.bf16.msra.mxu0 %v5058
    %6054 = vmatpush.bf16.msra.mxu0 %v5054
    %6055 = vmatpush.bf16.msra.mxu0 %v5050
    %6056 = vmatpush.bf16.msra.mxu0 %v5046
    %6057 = vmatpush.bf16.msra.mxu0 %v5042
    %6058 = vmatmul.bf16.gmra.mxu0 %v4028
    %v6059 = vpop.f32.mrf.mxu0
    %v6060 = vadd.f32 %v6047, %v6059
    %v6061 = vpop.f32.mrf.mxu0
    %6062 = vdwg.mxu0
    %6063 = vmatpush.bf16.msra.mxu0 %v5102
    %6064 = vmatpush.bf16.msra.mxu0 %v5098
    %6065 = vmatpush.bf16.msra.mxu0 %v5094
    %6066 = vmatpush.bf16.msra.mxu0 %v5090
    %6067 = vmatpush.bf16.msra.mxu0 %v5086
    %6068 = vmatpush.bf16.msra.mxu0 %v5082
    %6069 = vmatpush.bf16.msra.mxu0 %v5078
    %6070 = vmatpush.bf16.msra.mxu0 %v5074
    %6071 = vmatmul.bf16.gmra.mxu0 %v4029
    %v6072 = vpop.f32.mrf.mxu0
    %v6073 = vadd.f32 %v6060, %v6072
    %v6074 = vpop.f32.mrf.mxu0
    %6075 = vdwg.mxu0
    %6076 = vmatpush.bf16.msra.mxu0 %v5134
    %6077 = vmatpush.bf16.msra.mxu0 %v5130
    %6078 = vmatpush.bf16.msra.mxu0 %v5126
    %6079 = vmatpush.bf16.msra.mxu0 %v5122
    %6080 = vmatpush.bf16.msra.mxu0 %v5118
    %6081 = vmatpush.bf16.msra.mxu0 %v5114
    %6082 = vmatpush.bf16.msra.mxu0 %v5110
    %6083 = vmatpush.bf16.msra.mxu0 %v5106
    %6084 = vmatmul.bf16.gmra.mxu0 %v4030
    %v6085 = vpop.f32.mrf.mxu0
    %v6086 = vadd.f32 %v6073, %v6085
    %v6087 = vpop.f32.mrf.mxu0
    %6088 = vdwg.mxu0
    %6089 = vmatpush.bf16.msra.mxu0 %v5166
    %6090 = vmatpush.bf16.msra.mxu0 %v5162
    %6091 = vmatpush.bf16.msra.mxu0 %v5158
    %6092 = vmatpush.bf16.msra.mxu0 %v5154
    %6093 = vmatpush.bf16.msra.mxu0 %v5150
    %6094 = vmatpush.bf16.msra.mxu0 %v5146
    %6095 = vmatpush.bf16.msra.mxu0 %v5142
    %6096 = vmatpush.bf16.msra.mxu0 %v5138
    %6097 = vmatmul.bf16.gmra.mxu0 %v4031
    %v6098 = vpop.f32.mrf.mxu0
    %v6099 = vadd.f32 %v6086, %v6098
    %v6100 = vpop.f32.mrf.mxu0
    %6101 = vdwg.mxu0
    %6102 = vmatpush.bf16.msra.mxu0 %v5198
    %6103 = vmatpush.bf16.msra.mxu0 %v5194
    %6104 = vmatpush.bf16.msra.mxu0 %v5190
    %6105 = vmatpush.bf16.msra.mxu0 %v5186
    %6106 = vmatpush.bf16.msra.mxu0 %v5182
    %6107 = vmatpush.bf16.msra.mxu0 %v5178
    %6108 = vmatpush.bf16.msra.mxu0 %v5174
    %6109 = vmatpush.bf16.msra.mxu0 %v5170
    %6110 = vmatmul.bf16.gmra.mxu0 %v4032
    %v6111 = vpop.f32.mrf.mxu0
    %v6112 = vadd.f32 %v6099, %v6111
    %v6113 = vpop.f32.mrf.mxu0
    %6114 = vdwg.mxu0
    %6115 = vmatpush.bf16.msra.mxu0 %v5230
    %6116 = vmatpush.bf16.msra.mxu0 %v5226
    %6117 = vmatpush.bf16.msra.mxu0 %v5222
    %6118 = vmatpush.bf16.msra.mxu0 %v5218
    %6119 = vmatpush.bf16.msra.mxu0 %v5214
    %6120 = vmatpush.bf16.msra.mxu0 %v5210
    %6121 = vmatpush.bf16.msra.mxu0 %v5206
    %6122 = vmatpush.bf16.msra.mxu0 %v5202
    %6123 = vmatmul.bf16.gmra.mxu0 %v4033
    %v6124 = vpop.f32.mrf.mxu0
    %v6125 = vadd.f32 %v6112, %v6124
    %v6126 = vpop.f32.mrf.mxu0
    %6127 = vdwg.mxu0
    %6128 = vmatpush.bf16.msra.mxu0 %v5262
    %6129 = vmatpush.bf16.msra.mxu0 %v5258
    %6130 = vmatpush.bf16.msra.mxu0 %v5254
    %6131 = vmatpush.bf16.msra.mxu0 %v5250
    %6132 = vmatpush.bf16.msra.mxu0 %v5246
    %6133 = vmatpush.bf16.msra.mxu0 %v5242
    %6134 = vmatpush.bf16.msra.mxu0 %v5238
    %6135 = vmatpush.bf16.msra.mxu0 %v5234
    %6136 = vmatmul.bf16.gmra.mxu0 %v4034
    %v6137 = vpop.f32.mrf.mxu0
    %v6138 = vadd.f32 %v6125, %v6137
    %v6139 = vpop.f32.mrf.mxu0
    %6140 = vdwg.mxu0
    %6141 = vmatpush.bf16.msra.mxu0 %v5294
    %6142 = vmatpush.bf16.msra.mxu0 %v5290
    %6143 = vmatpush.bf16.msra.mxu0 %v5286
    %6144 = vmatpush.bf16.msra.mxu0 %v5282
    %6145 = vmatpush.bf16.msra.mxu0 %v5278
    %6146 = vmatpush.bf16.msra.mxu0 %v5274
    %6147 = vmatpush.bf16.msra.mxu0 %v5270
    %6148 = vmatpush.bf16.msra.mxu0 %v5266
    %6149 = vmatmul.bf16.gmra.mxu0 %v4035
    %v6150 = vpop.f32.mrf.mxu0
    %v6151 = vadd.f32 %v6138, %v6150
    %v6152 = vpop.f32.mrf.mxu0
    %6153 = vdwg.mxu0
    %6154 = vmatpush.bf16.msra.mxu0 %v5326
    %6155 = vmatpush.bf16.msra.mxu0 %v5322
    %6156 = vmatpush.bf16.msra.mxu0 %v5318
    %6157 = vmatpush.bf16.msra.mxu0 %v5314
    %6158 = vmatpush.bf16.msra.mxu0 %v5310
    %6159 = vmatpush.bf16.msra.mxu0 %v5306
    %6160 = vmatpush.bf16.msra.mxu0 %v5302
    %6161 = vmatpush.bf16.msra.mxu0 %v5298
    %6162 = vmatmul.bf16.gmra.mxu0 %v4036
    %v6163 = vpop.f32.mrf.mxu0
    %v6164 = vadd.f32 %v6151, %v6163
    %v6165 = vpop.f32.mrf.mxu0
    %6166 = vdwg.mxu0
    %v6167 = vmax.f32 %v5774, 0.0
    %v6168 = vmax.f32 %v5904, 0.0
    %v6169 = vmax.f32 %v6034, 0.0
    %v6170 = vmax.f32 %v6164, 0.0
    %v6171 = vpack.c.bf16 %v6167, %v6167
    %v6172 = vpack.c.bf16 %v6168, %v6168
    %v6173 = vpack.c.bf16 %v6169, %v6169
    %v6174 = vpack.c.bf16 %v6170, %v6170
    %v6175 = vld [vmem:[#allocation16] sm:$0xf]
    %v6176 = vld [vmem:[#allocation16 + $0x4] sm:$0xf]
    %v6177 = vld [vmem:[#allocation16 + $0x8] sm:$0xf]
    %v6178 = vld [vmem:[#allocation16 + $0xc] sm:$0xf]
    %v6179 = vld [vmem:[#allocation16 + $0x10] sm:$0xf]
    %v6180 = vld [vmem:[#allocation16 + $0x14] sm:$0xf]
    %v6181 = vld [vmem:[#allocation16 + $0x18] sm:$0xf]
    %v6182 = vld [vmem:[#allocation16 + $0x1c] sm:$0xf]
    %v6183 = vld [vmem:[#allocation16 + $0x20] sm:$0xf]
    %v6184 = vld [vmem:[#allocation16 + $0x24] sm:$0xf]
    %v6185 = vld [vmem:[#allocation16 + $0x28] sm:$0xf]
    %v6186 = vld [vmem:[#allocation16 + $0x2c] sm:$0xf]
    %v6187 = vld [vmem:[#allocation16 + $0x30] sm:$0xf]
    %v6188 = vld [vmem:[#allocation16 + $0x34] sm:$0xf]
    %v6189 = vld [vmem:[#allocation16 + $0x38] sm:$0xf]
    %v6190 = vld [vmem:[#allocation16 + $0x3c] sm:$0xf]
    %v6191 = vld [vmem:[#allocation16 + $0x40] sm:$0xf]
    %v6192 = vld [vmem:[#allocation16 + $0x44] sm:$0xf]
    %v6193 = vld [vmem:[#allocation16 + $0x48] sm:$0xf]
    %v6194 = vld [vmem:[#allocation16 + $0x4c] sm:$0xf]
    %v6195 = vld [vmem:[#allocation16 + $0x50] sm:$0xf]
    %v6196 = vld [vmem:[#allocation16 + $0x54] sm:$0xf]
    %v6197 = vld [vmem:[#allocation16 + $0x58] sm:$0xf]
    %v6198 = vld [vmem:[#allocation16 + $0x5c] sm:$0xf]
    %v6199 = vld [vmem:[#allocation16 + $0x60] sm:$0xf]
    %v6200 = vld [vmem:[#allocation16 + $0x64] sm:$0xf]
    %v6201 = vld [vmem:[#allocation16 + $0x68] sm:$0xf]
    %v6202 = vld [vmem:[#allocation16 + $0x6c] sm:$0xf]
    %v6203 = vld [vmem:[#allocation16 + $0x70] sm:$0xf]
    %v6204 = vld [vmem:[#allocation16 + $0x74] sm:$0xf]
    %v6205 = vld [vmem:[#allocation16 + $0x78] sm:$0xf]
    %v6206 = vld [vmem:[#allocation16 + $0x7c] sm:$0xf]
    %v6207 = vld [vmem:[#allocation16 + $0x80] sm:$0xf]
    %v6208 = vld [vmem:[#allocation16 + $0x84] sm:$0xf]
    %v6209 = vld [vmem:[#allocation16 + $0x88] sm:$0xf]
    %v6210 = vld [vmem:[#allocation16 + $0x8c] sm:$0xf]
    %v6211 = vld [vmem:[#allocation16 + $0x90] sm:$0xf]
    %v6212 = vld [vmem:[#allocation16 + $0x94] sm:$0xf]
    %v6213 = vld [vmem:[#allocation16 + $0x98] sm:$0xf]
    %v6214 = vld [vmem:[#allocation16 + $0x9c] sm:$0xf]
    %v6215 = vld [vmem:[#allocation16 + $0xa0] sm:$0xf]
    %v6216 = vld [vmem:[#allocation16 + $0xa4] sm:$0xf]
    %v6217 = vld [vmem:[#allocation16 + $0xa8] sm:$0xf]
    %v6218 = vld [vmem:[#allocation16 + $0xac] sm:$0xf]
    %v6219 = vld [vmem:[#allocation16 + $0xb0] sm:$0xf]
    %v6220 = vld [vmem:[#allocation16 + $0xb4] sm:$0xf]
    %v6221 = vld [vmem:[#allocation16 + $0xb8] sm:$0xf]
    %v6222 = vld [vmem:[#allocation16 + $0xbc] sm:$0xf]
    %v6223 = vld [vmem:[#allocation16 + $0xc0] sm:$0xf]
    %v6224 = vld [vmem:[#allocation16 + $0xc4] sm:$0xf]
    %v6225 = vld [vmem:[#allocation16 + $0xc8] sm:$0xf]
    %v6226 = vld [vmem:[#allocation16 + $0xcc] sm:$0xf]
    %v6227 = vld [vmem:[#allocation16 + $0xd0] sm:$0xf]
    %v6228 = vld [vmem:[#allocation16 + $0xd4] sm:$0xf]
    %v6229 = vld [vmem:[#allocation16 + $0xd8] sm:$0xf]
    %v6230 = vld [vmem:[#allocation16 + $0xdc] sm:$0xf]
    %v6231 = vld [vmem:[#allocation16 + $0xe0] sm:$0xf]
    %v6232 = vld [vmem:[#allocation16 + $0xe4] sm:$0xf]
    %v6233 = vld [vmem:[#allocation16 + $0xe8] sm:$0xf]
    %v6234 = vld [vmem:[#allocation16 + $0xec] sm:$0xf]
    %v6235 = vld [vmem:[#allocation16 + $0xf0] sm:$0xf]
    %v6236 = vld [vmem:[#allocation16 + $0xf4] sm:$0xf]
    %v6237 = vld [vmem:[#allocation16 + $0xf8] sm:$0xf]
    %v6238 = vld [vmem:[#allocation16 + $0xfc] sm:$0xf]
    %v6239 = vld [vmem:[#allocation17] sm:$0x1]
    %v6241 = vperm.slane %v6239, 0
    %v6307 = vunpack.c.l.b16 %v6175
    %v6308 = vunpack.c.l.b16 %v6176
    %v6309 = vunpack.c.l.b16 %v6177
    %v6310 = vunpack.c.l.b16 %v6178
    %v6311 = vunpack.c.l.b16 %v6179
    %v6312 = vunpack.c.l.b16 %v6180
    %v6313 = vunpack.c.l.b16 %v6181
    %v6314 = vunpack.c.l.b16 %v6182
    %v6315 = vunpack.c.l.b16 %v6183
    %v6316 = vunpack.c.l.b16 %v6184
    %v6317 = vunpack.c.l.b16 %v6185
    %v6318 = vunpack.c.l.b16 %v6186
    %v6319 = vunpack.c.l.b16 %v6187
    %v6320 = vunpack.c.l.b16 %v6188
    %v6321 = vunpack.c.l.b16 %v6189
    %v6322 = vunpack.c.l.b16 %v6190
    %v6323 = vunpack.c.l.b16 %v6191
    %v6324 = vunpack.c.l.b16 %v6192
    %v6325 = vunpack.c.l.b16 %v6193
    %v6326 = vunpack.c.l.b16 %v6194
    %v6327 = vunpack.c.l.b16 %v6195
    %v6328 = vunpack.c.l.b16 %v6196
    %v6329 = vunpack.c.l.b16 %v6197
    %v6330 = vunpack.c.l.b16 %v6198
    %v6331 = vunpack.c.l.b16 %v6199
    %v6332 = vunpack.c.l.b16 %v6200
    %v6333 = vunpack.c.l.b16 %v6201
    %v6334 = vunpack.c.l.b16 %v6202
    %v6335 = vunpack.c.l.b16 %v6203
    %v6336 = vunpack.c.l.b16 %v6204
    %v6337 = vunpack.c.l.b16 %v6205
    %v6338 = vunpack.c.l.b16 %v6206
    %v6339 = vunpack.c.l.b16 %v6207
    %v6340 = vunpack.c.l.b16 %v6208
    %v6341 = vunpack.c.l.b16 %v6209
    %v6342 = vunpack.c.l.b16 %v6210
    %v6343 = vunpack.c.l.b16 %v6211
    %v6344 = vunpack.c.l.b16 %v6212
    %v6345 = vunpack.c.l.b16 %v6213
    %v6346 = vunpack.c.l.b16 %v6214
    %v6347 = vunpack.c.l.b16 %v6215
    %v6348 = vunpack.c.l.b16 %v6216
    %v6349 = vunpack.c.l.b16 %v6217
    %v6350 = vunpack.c.l.b16 %v6218
    %v6351 = vunpack.c.l.b16 %v6219
    %v6352 = vunpack.c.l.b16 %v6220
    %v6353 = vunpack.c.l.b16 %v6221
    %v6354 = vunpack.c.l.b16 %v6222
    %v6355 = vunpack.c.l.b16 %v6223
    %v6356 = vunpack.c.l.b16 %v6224
    %v6357 = vunpack.c.l.b16 %v6225
    %v6358 = vunpack.c.l.b16 %v6226
    %v6359 = vunpack.c.l.b16 %v6227
    %v6360 = vunpack.c.l.b16 %v6228
    %v6361 = vunpack.c.l.b16 %v6229
    %v6362 = vunpack.c.l.b16 %v6230
    %v6363 = vunpack.c.l.b16 %v6231
    %v6364 = vunpack.c.l.b16 %v6232
    %v6365 = vunpack.c.l.b16 %v6233
    %v6366 = vunpack.c.l.b16 %v6234
    %v6367 = vunpack.c.l.b16 %v6235
    %v6368 = vunpack.c.l.b16 %v6236
    %v6369 = vunpack.c.l.b16 %v6237
    %v6370 = vunpack.c.l.b16 %v6238
    %v6371 = vpack.c.b16 %v6308, %v6307
    %v6372 = vpack.c.b16 %v6310, %v6309
    %v6373 = vpack.c.b16 %v6312, %v6311
    %v6374 = vpack.c.b16 %v6314, %v6313
    %v6375 = vpack.c.b16 %v6316, %v6315
    %v6376 = vpack.c.b16 %v6318, %v6317
    %v6377 = vpack.c.b16 %v6320, %v6319
    %v6378 = vpack.c.b16 %v6322, %v6321
    %v6379 = vpack.c.b16 %v6324, %v6323
    %v6380 = vpack.c.b16 %v6326, %v6325
    %v6381 = vpack.c.b16 %v6328, %v6327
    %v6382 = vpack.c.b16 %v6330, %v6329
    %v6383 = vpack.c.b16 %v6332, %v6331
    %v6384 = vpack.c.b16 %v6334, %v6333
    %v6385 = vpack.c.b16 %v6336, %v6335
    %v6386 = vpack.c.b16 %v6338, %v6337
    %v6387 = vpack.c.b16 %v6340, %v6339
    %v6388 = vpack.c.b16 %v6342, %v6341
    %v6389 = vpack.c.b16 %v6344, %v6343
    %v6390 = vpack.c.b16 %v6346, %v6345
    %v6391 = vpack.c.b16 %v6348, %v6347
    %v6392 = vpack.c.b16 %v6350, %v6349
    %v6393 = vpack.c.b16 %v6352, %v6351
    %v6394 = vpack.c.b16 %v6354, %v6353
    %v6395 = vpack.c.b16 %v6356, %v6355
    %v6396 = vpack.c.b16 %v6358, %v6357
    %v6397 = vpack.c.b16 %v6360, %v6359
    %v6398 = vpack.c.b16 %v6362, %v6361
    %v6399 = vpack.c.b16 %v6364, %v6363
    %v6400 = vpack.c.b16 %v6366, %v6365
    %v6401 = vpack.c.b16 %v6368, %v6367
    %v6402 = vpack.c.b16 %v6370, %v6369
    %6435 = vmatpush.bf16.msra.mxu0 %v6378
    %6436 = vmatpush.bf16.msra.mxu0 %v6377
    %6437 = vmatpush.bf16.msra.mxu0 %v6376
    %6438 = vmatpush.bf16.msra.mxu0 %v6375
    %6439 = vmatpush.bf16.msra.mxu0 %v6374
    %6440 = vmatpush.bf16.msra.mxu0 %v6373
    %6441 = vmatpush.bf16.msra.mxu0 %v6372
    %6442 = vmatpush.bf16.msra.mxu0 %v6371
    %6443 = vmatmul.bf16.gmra.mxu0 %v6171
    %v6444 = vpop.f32.mrf.mxu0
    %v6445 = vadd.f32 %v6241, %v6444
    %v6446 = vpop.f32.mrf.mxu0
    %6447 = vdwg.mxu0
    %6448 = vmatpush.bf16.msra.mxu0 %v6386
    %6449 = vmatpush.bf16.msra.mxu0 %v6385
    %6450 = vmatpush.bf16.msra.mxu0 %v6384
    %6451 = vmatpush.bf16.msra.mxu0 %v6383
    %6452 = vmatpush.bf16.msra.mxu0 %v6382
    %6453 = vmatpush.bf16.msra.mxu0 %v6381
    %6454 = vmatpush.bf16.msra.mxu0 %v6380
    %6455 = vmatpush.bf16.msra.mxu0 %v6379
    %6456 = vmatmul.bf16.gmra.mxu0 %v6172
    %v6457 = vpop.f32.mrf.mxu0
    %v6458 = vadd.f32 %v6445, %v6457
    %v6459 = vpop.f32.mrf.mxu0
    %6460 = vdwg.mxu0
    %6461 = vmatpush.bf16.msra.mxu0 %v6394
    %6462 = vmatpush.bf16.msra.mxu0 %v6393
    %6463 = vmatpush.bf16.msra.mxu0 %v6392
    %6464 = vmatpush.bf16.msra.mxu0 %v6391
    %6465 = vmatpush.bf16.msra.mxu0 %v6390
    %6466 = vmatpush.bf16.msra.mxu0 %v6389
    %6467 = vmatpush.bf16.msra.mxu0 %v6388
    %6468 = vmatpush.bf16.msra.mxu0 %v6387
    %6469 = vmatmul.bf16.gmra.mxu0 %v6173
    %v6470 = vpop.f32.mrf.mxu0
    %v6471 = vadd.f32 %v6458, %v6470
    %v6472 = vpop.f32.mrf.mxu0
    %6473 = vdwg.mxu0
    %6474 = vmatpush.bf16.msra.mxu0 %v6402
    %6475 = vmatpush.bf16.msra.mxu0 %v6401
    %6476 = vmatpush.bf16.msra.mxu0 %v6400
    %6477 = vmatpush.bf16.msra.mxu0 %v6399
    %6478 = vmatpush.bf16.msra.mxu0 %v6398
    %6479 = vmatpush.bf16.msra.mxu0 %v6397
    %6480 = vmatpush.bf16.msra.mxu0 %v6396
    %6481 = vmatpush.bf16.msra.mxu0 %v6395
    %6482 = vmatmul.bf16.gmra.mxu0 %v6174
    %v6483 = vpop.f32.mrf.mxu0
    %v6484 = vadd.f32 %v6471, %v6483
    %v6485 = vpop.f32.mrf.mxu0
    %6486 = vdwg.mxu0
    %6487 = vst [vmem:[#allocation19] sm:$0x3] %v6484
    // Predicated region
    $region86: #{tpu_custom_call.1} parent=1 // pred_check
      _
    $region87: #{tpu_custom_call.1} parent=1 // pred_check_branch
      %6489 = sbr.rel (0) target = $region89
    $region88: #{tpu_custom_call.1} parent=1 // pred_region
      %6491 = vsyncadd [#allocation4], 0
      %s6493 = sshll.u32 [#allocation19], 4
      %s6494 = int_to_ptr.vmem [resolvable:$true] %s6493
      %s6495 = sshll.u32 %s11, 4
      %s6496 = int_to_ptr.hbm [resolvable:$true] %s6495
      %6498 = dma.vmem_to_hbm [thread:$0]  %s6494, 32, %s6496, [#allocation4]
    $region89: #{tpu_custom_call.1} parent=1 // pred_fallthru
      _
    // Predicated region
    $region90: #{tpu_custom_call.1} parent=1 // pred_check
      _
    $region91: #{tpu_custom_call.1} parent=1 // pred_check_branch
      %6500 = sbr.rel (0) target = $region93
    $region92: #{tpu_custom_call.1} parent=1 // pred_region
      %6502 = dma.done [#allocation4], 32
    $region93: #{tpu_custom_call.1} parent=1 // pred_fallthru
      _
    %6503 = vsyncpa [#allocation3], 1
    %6504 = vsyncpa [#allocation6], 1
    %6505 = vsyncpa [#allocation9], 1
    %6506 = vsyncpa [#allocation12], 1
    %6507 = vsyncpa [#allocation15], 1
    %6508 = vsyncpa [#allocation18], 1
    %6509 = vsyncpa [#allocation4], 1

</llo_original>
